<compile_context>
chip_gen: v6e
topology: v6e:2x2x1
jax: 0.10.0
libtpu: 0.0.40
codegen_flags: <defaults>
</compile_context>

<pallas_src>
import functools

import jax
import jax.numpy as jnp
from jax import lax
from jax.experimental import pallas as pl
from jax.experimental.pallas import tpu as pltpu


# ----------------------------------------------------------------------------
# Fused DecoderBlock kernel: unpool + n_layers x (conv + BN(eval) + ReLU)
# ----------------------------------------------------------------------------
def _decoder_block_kernel(x_ref, idx_ref, wmask_ref, *rest,
                          n_layers, ksize, conv_pad, w_up, p_up, pad):
    # rest = [w_0, shift_0, ..., w_{L-1}, shift_{L-1}, o_ref, scr_ref, wbuf_ref]
    o_ref = rest[2 * n_layers]
    scr_ref = rest[2 * n_layers + 1]
    wbuf_ref = rest[2 * n_layers + 2]

    # Zero only the halo columns (they provide the conv's vertical zero padding and are
    # never overwritten).  Interior lanes are fully rewritten below, so this is all the
    # zeroing needed.  Done every grid step (2 x rows x 128 lanes, cheap) so correctness
    # does not depend on which TensorCore executes which slice of the "parallel" axis.
    zeros_halo = jnp.zeros((scr_ref.shape[0], pad), scr_ref.dtype)
    scr_ref[:, 0:pad] = zeros_halo
    scr_ref[:, pad + p_up:2 * pad + p_up] = zeros_halo

    # ------------------------- MaxUnpool2d (kernel == stride) ------------------------
    # x_ref / idx_ref hold the pooled values / argmax indices broadcast (nearest-
    # neighbour) over each pooling window; the unpool is then one integer compare
    # against the flat lane index -- pure VPU work, no placement matmul, no scatter.
    xb = x_ref[0]                                        # (C_in, P_up)  f32
    ib = idx_ref[0]                                      # (C_in, P_up)  int32
    lane = lax.broadcasted_iota(jnp.int32, ib.shape, 1)
    u = jnp.where(ib == lane, xb, jnp.zeros_like(xb))
    scr_ref[0:xb.shape[0], pad:pad + p_up] = u           # lane-aligned (pad % 128 == 0)

    # ------ n_layers x (Conv -> Dropout(eval)=identity -> BatchNorm(eval) -> ReLU) ---
    for l in range(n_layers):
        w_ref = rest[2 * l]            # (C_out, K*K*C_in)  BN scale folded into weights
        sh_ref = rest[2 * l + 1]       # (C_out, 1)         conv bias + BN shift folded
        c_out = w_ref.shape[0]
        c_in = w_ref.shape[1] // (ksize * ksize)

        # Stack the K*K shifted windows of the padded flat activation into one
        # (K*K*C_in, P_up) VMEM buffer so the whole layer is a single MXU matmul.
        for kh in range(ksize):
            for kw in range(ksize):
                t = kh * ksize + kw
                off = (kh - conv_pad) * w_up + (kw - conv_pad)
                win = scr_ref[0:c_in, pad + off:pad + off + p_up]
                if kw != conv_pad:
                    win = win * wmask_ref[kw]   # kill flat-layout horizontal wrap-around
                wbuf_ref[t * c_in:(t + 1) * c_in, :] = win

        acc = jnp.dot(w_ref[...], wbuf_ref[0:ksize * ksize * c_in, :],
                      preferred_element_type=jnp.float32)
        act = jnp.maximum(acc + sh_ref[...], 0.0)        # folded bias/BN + ReLU
        if l == n_layers - 1:
            o_ref[0] = act.astype(o_ref.dtype)           # lane-dense (C_out, H_up*W_up)
        else:
            scr_ref[0:c_out, pad:pad + p_up] = act       # stays in VMEM for next layer


# ----------------------------------------------------------------------------
# Wrapper: parameter folding + one fused pallas_call (no transposes, pure views)
# ----------------------------------------------------------------------------
def decoder_block_forward(params, x_nchw, indices_nchw, upsample_size, *,
                          kernel_size, padding, stride, unpool_dim, eps=1e-5):
    s = unpool_dim[0]
    # TODO(synk): only stride-1 'same' convolutions are supported by the fused kernel.
    assert stride == 1 and 2 * padding == kernel_size - 1

    N, C_in, Hp, Wp = x_nchw.shape
    assert params[0]["weight"].shape[1] == C_in
    H_up, W_up = s * Hp, s * Wp
    assert tuple(upsample_size[-2:]) == (H_up, W_up)
    P_up = H_up * W_up

    # flat halo must cover the conv reach; round to lane tiles so interior stays aligned
    reach = padding * W_up + padding
    PAD = ((reach + 127) // 128) * 128

    # Nearest-neighbour broadcast of pooled values / argmax indices to the upsampled
    # grid (pure broadcast + reshape in XLA -- no scatter, no gather).  The kernel turns
    # this into MaxUnpool2d with a single integer compare against a lane iota.
    def nn_up(a, dtype):
        a6 = a.astype(dtype).reshape(N, C_in, Hp, 1, Wp, 1)
        return jnp.broadcast_to(a6, (N, C_in, Hp, s, Wp, s)).reshape(N, C_in, P_up)

    xb = nn_up(x_nchw, jnp.float32)
    ib = nn_up(indices_nchw, jnp.int32)

    # horizontal-tap lane masks (remove flat-layout row wrap-around)
    wpos = jnp.arange(P_up) % W_up
    wmask = jnp.stack(
        [((wpos + (kw - padding) >= 0) & (wpos + (kw - padding) < W_up)).astype(jnp.float32)
         for kw in range(kernel_size)], axis=0).reshape(kernel_size, 1, P_up)

    # fold eval-mode BatchNorm scale into the weights; conv bias + BN shift -> one shift
    layer_ops, layer_specs = [], []
    max_cin, inter_rows = 0, C_in
    for li, p in enumerate(params):
        w = p["weight"]                                  # (C_out, C_in_l, KH, KW)
        c_out, c_in_l, KH, KW = w.shape
        max_cin = max(max_cin, c_in_l)
        scale = p["gamma"] / jnp.sqrt(p["var"] + eps)
        # contraction index = (kh*KW + kw)*C_in + c_in  (matches window-buffer stacking)
        w_fold = (jnp.transpose(w, (0, 2, 3, 1)).reshape(c_out, KH * KW * c_in_l)
                  * scale[:, None]).astype(jnp.float32)
        shift = ((p["bias"] - p["mean"]) * scale + p["beta"]).reshape(c_out, 1)
        layer_ops += [w_fold, shift]
        layer_specs += [pl.BlockSpec((c_out, KH * KW * c_in_l), lambda n: (0, 0)),
                        pl.BlockSpec((c_out, 1), lambda n: (0, 0))]
        if li < len(params) - 1:
            inter_rows = max(inter_rows, c_out)

    scr_rows = ((max(inter_rows, max_cin) + 7) // 8) * 8
    wbuf_rows = ((kernel_size * kernel_size * max_cin + 7) // 8) * 8
    C_out_last = params[-1]["weight"].shape[0]

    kern = functools.partial(
        _decoder_block_kernel, n_layers=len(params), ksize=kernel_size,
        conv_pad=padding, w_up=W_up, p_up=P_up, pad=PAD)

    out = pl.pallas_call(
        kern,
        out_shape=jax.ShapeDtypeStruct((N, C_out_last, P_up), x_nchw.dtype),
        grid=(N,),
        in_specs=[
            pl.BlockSpec((1, C_in, P_up), lambda n: (n, 0, 0)),          # x (broadcast)
            pl.BlockSpec((1, C_in, P_up), lambda n: (n, 0, 0)),          # idx (broadcast)
            pl.BlockSpec((kernel_size, 1, P_up), lambda n: (0, 0, 0)),   # W-boundary masks
        ] + layer_specs,
        out_specs=pl.BlockSpec((1, C_out_last, P_up), lambda n: (n, 0, 0)),
        scratch_shapes=[pltpu.VMEM((scr_rows, P_up + 2 * PAD), jnp.float32),  # activations
                        pltpu.VMEM((wbuf_rows, P_up), jnp.float32)],          # window stack
        compiler_params=pltpu.CompilerParams(dimension_semantics=("parallel",)),
    )(xb, ib, wmask, *layer_ops)

    return out.reshape(N, C_out_last, H_up, W_up)        # pure view, no transpose


# ----------------------------------------------------------------------------
# Parameter init (matches the PyTorch module's parameter set, eval-mode BN stats)
# ----------------------------------------------------------------------------
def init_decoder_block_params(key, in_size, out_size, n_layers, kernel_size):
    sizes = [(in_size, in_size)] * (n_layers - 1) + [(in_size, out_size)]
    params = []
    for (cin, cout) in sizes:
        key, k_w, k_b, k_g, k_bt, k_m, k_v = jax.random.split(key, 7)
        params.append(dict(
            weight=0.1 * jax.random.normal(k_w, (cout, cin, kernel_size, kernel_size), jnp.float32),
            bias=0.1 * jax.random.normal(k_b, (cout,), jnp.float32),
            gamma=1.0 + 0.1 * jax.random.normal(k_g, (cout,), jnp.float32),
            beta=0.1 * jax.random.normal(k_bt, (cout,), jnp.float32),
            mean=0.1 * jax.random.normal(k_m, (cout,), jnp.float32),
            var=0.5 + jnp.abs(jax.random.normal(k_v, (cout,), jnp.float32)),
        ))
    return params


# ----------------------------------------------------------------------------
# Pure-JAX reference (for verification)
# ----------------------------------------------------------------------------
def _ref_forward(params, x, idx, s, kernel_size, padding, stride, eps=1e-5):
    N, C, H, W = x.shape
    out = jnp.zeros((N, C, (s * H) * (s * W)), x.dtype)
    n_i = jnp.arange(N)[:, None, None, None]
    c_i = jnp.arange(C)[None, :, None, None]
    y = out.at[n_i, c_i, idx].set(x).reshape(N, C, s * H, s * W)
    for p in params:
        y = lax.conv_general_dilated(y, p["weight"], (stride, stride),
                                     [(padding, padding), (padding, padding)],
                                     dimension_numbers=("NCHW", "OIHW", "NCHW"),
                                     precision=lax.Precision.HIGHEST)
        y = y + p["bias"][None, :, None, None]
        scale = p["gamma"] / jnp.sqrt(p["var"] + eps)
        shift = p["beta"] - p["mean"] * scale
        y = y * scale[None, :, None, None] + shift[None, :, None, None]
        y = jnp.maximum(y, 0.0)
    return y


# ----------------------------------------------------------------------------
if __name__ == "__main__":
    # module config
    in_size, out_size = 4, 8
    n_layers = 2
    kernel_size, padding, stride = 3, 1, 1
    unpool_dim = (2, 2)
    dropout = 0.5  # eval-mode => identity

    # inputs (NCHW, like PyTorch)
    N, H, W = 2, 16, 16
    s = unpool_dim[0]
    key = jax.random.PRNGKey(0)
    k_x, k_dy, k_dx, k_p = jax.random.split(key, 4)
    x = jax.random.normal(k_x, (N, in_size, H, W), jnp.float32)

    # valid MaxPool2d(kernel=2, stride=2) indices: flat index within each H_up*W_up plane
    dy = jax.random.randint(k_dy, (N, in_size, H, W), 0, s)
    dx = jax.random.randint(k_dx, (N, in_size, H, W), 0, s)
    h_grid = jnp.arange(H)[None, None, :, None]
    w_grid = jnp.arange(W)[None, None, None, :]
    indices = ((s * h_grid + dy) * (s * W) + (s * w_grid + dx)).astype(jnp.int32)

    upsample_size = (N, in_size, s * H, s * W)
    params = init_decoder_block_params(k_p, in_size, out_size, n_layers, kernel_size)

    fwd = jax.jit(
        functools.partial(decoder_block_forward, kernel_size=kernel_size,
                          padding=padding, stride=stride, unpool_dim=unpool_dim),
        static_argnums=(3,))
    out = fwd(params, x, indices, upsample_size)
    out = jax.block_until_ready(out)

    assert out.shape == (N, out_size, s * H, s * W), out.shape

    ref = _ref_forward(params, x, indices, s, kernel_size, padding, stride)
    max_err = float(jnp.max(jnp.abs(out - ref)))
    assert jnp.allclose(out, ref, atol=2e-3, rtol=2e-3), max_err

    print("KERNEL_OK")
</pallas_src>

<mosaic_0001>
module attributes {stable_mosaic.version = 11 : i64} {
  func.func @_decoder_block_kernel(%arg0: i32, %arg1: memref<1x4x1024xf32, #tpu.memory_space<vmem>>, %arg2: memref<1x4x1024xi32, #tpu.memory_space<vmem>>, %arg3: memref<3x1x1024xf32, #tpu.memory_space<vmem>>, %arg4: memref<4x36xf32, #tpu.memory_space<vmem>>, %arg5: memref<4x1xf32, #tpu.memory_space<vmem>>, %arg6: memref<8x36xf32, #tpu.memory_space<vmem>>, %arg7: memref<8x1xf32, #tpu.memory_space<vmem>>, %arg8: memref<1x8x1024xf32, #tpu.memory_space<vmem>>, %arg9: memref<8x1280xf32, #tpu.memory_space<vmem>>, %arg10: memref<40x1024xf32, #tpu.memory_space<vmem>>) attributes {dimension_semantics = [#tpu.dimension_semantics<parallel>], iteration_bounds = array<i64: 2>, scalar_prefetch = 0 : i64, scratch_operands = 2 : i64, tpu.core_type = #tpu.core_type<tc>, window_params = [{transform_indices = @transform_0, window_bounds = array<i64: 1, 4, 1024>}, {transform_indices = @transform_1, window_bounds = array<i64: 1, 4, 1024>}, {pipeline_mode = #tpu.pipeline_mode<synchronous>, transform_indices = @transform_2, window_bounds = array<i64: 3, 1, 1024>}, {pipeline_mode = #tpu.pipeline_mode<synchronous>, transform_indices = @transform_3, window_bounds = array<i64: 4, 36>}, {pipeline_mode = #tpu.pipeline_mode<synchronous>, transform_indices = @transform_4, window_bounds = array<i64: 4, 1>}, {pipeline_mode = #tpu.pipeline_mode<synchronous>, transform_indices = @transform_5, window_bounds = array<i64: 8, 36>}, {pipeline_mode = #tpu.pipeline_mode<synchronous>, transform_indices = @transform_6, window_bounds = array<i64: 8, 1>}, {transform_indices = @transform_7, window_bounds = array<i64: 1, 8, 1024>}]} {
    %cst = arith.constant 0.000000e+00 : f32
    %0 = vector.broadcast %cst : f32 to vector<8x128xf32>
    %c0 = arith.constant 0 : index
    %c0_0 = arith.constant 0 : index
    %1 = vector.load %arg9[%c0, %c0_0] : memref<8x1280xf32, #tpu.memory_space<vmem>>, vector<8x128xf32>
    tpu.vector_store %arg9[%c0, %c0_0], %0 {strides = array<i32>} : memref<8x1280xf32, #tpu.memory_space<vmem>>, vector<8x128xf32>,
    %c0_1 = arith.constant 0 : index
    %c1152 = arith.constant 1152 : index
    %2 = vector.load %arg9[%c0_1, %c1152] : memref<8x1280xf32, #tpu.memory_space<vmem>>, vector<8x128xf32>
    tpu.vector_store %arg9[%c0_1, %c1152], %0 {strides = array<i32>} : memref<8x1280xf32, #tpu.memory_space<vmem>>, vector<8x128xf32>,
    %c0_2 = arith.constant 0 : index
    %c0_3 = arith.constant 0 : index
    %c0_4 = arith.constant 0 : index
    %3 = vector.load %arg1[%c0_2, %c0_3, %c0_4] : memref<1x4x1024xf32, #tpu.memory_space<vmem>>, vector<1x4x1024xf32>
    %4 = vector.shape_cast %3 : vector<1x4x1024xf32> to vector<4x1024xf32>
    %c0_5 = arith.constant 0 : index
    %c0_6 = arith.constant 0 : index
    %c0_7 = arith.constant 0 : index
    %5 = vector.load %arg2[%c0_5, %c0_6, %c0_7] : memref<1x4x1024xi32, #tpu.memory_space<vmem>>, vector<1x4x1024xi32>
    %6 = vector.shape_cast %5 : vector<1x4x1024xi32> to vector<4x1024xi32>
    %7 = tpu.iota {dimensions = array<i32: 1>} : vector<4x1024xi32>
    %8 = arith.cmpi eq, %6, %7 : vector<4x1024xi32>
    %cst_8 = arith.constant 0.000000e+00 : f32
    %9 = vector.broadcast %cst_8 : f32 to vector<4x1024xf32>
    %10 = arith.select %8, %4, %9 : vector<4x1024xi1>, vector<4x1024xf32>
    %c0_9 = arith.constant 0 : index
    %c128 = arith.constant 128 : index
    %11 = vector.load %arg9[%c0_9, %c128] : memref<8x1280xf32, #tpu.memory_space<vmem>>, vector<4x1024xf32>
    tpu.vector_store %arg9[%c0_9, %c128], %10 {strides = array<i32>} : memref<8x1280xf32, #tpu.memory_space<vmem>>, vector<4x1024xf32>,
    %c0_10 = arith.constant 0 : index
    %c95 = arith.constant 95 : index
    %12 = vector.load %arg9[%c0_10, %c95] : memref<8x1280xf32, #tpu.memory_space<vmem>>, vector<4x1024xf32>
    %c0_11 = arith.constant 0 : index
    %c0_12 = arith.constant 0 : index
    %c0_13 = arith.constant 0 : index
    %13 = vector.load %arg3[%c0_11, %c0_12, %c0_13] : memref<3x1x1024xf32, #tpu.memory_space<vmem>>, vector<1x1x1024xf32>
    %14 = vector.shape_cast %13 : vector<1x1x1024xf32> to vector<1x1024xf32>
    %15 = vector.broadcast %14 : vector<1x1024xf32> to vector<4x1024xf32>
    %16 = arith.mulf %12, %15 : vector<4x1024xf32>
    %c0_14 = arith.constant 0 : index
    %c0_15 = arith.constant 0 : index
    %17 = vector.load %arg10[%c0_14, %c0_15] : memref<40x1024xf32, #tpu.memory_space<vmem>>, vector<4x1024xf32>
    tpu.vector_store %arg10[%c0_14, %c0_15], %16 {strides = array<i32>} : memref<40x1024xf32, #tpu.memory_space<vmem>>, vector<4x1024xf32>,
    %c0_16 = arith.constant 0 : index
    %c96 = arith.constant 96 : index
    %18 = vector.load %arg9[%c0_16, %c96] : memref<8x1280xf32, #tpu.memory_space<vmem>>, vector<4x1024xf32>
    %c4 = arith.constant 4 : index
    %c0_17 = arith.constant 0 : index
    %19 = vector.load %arg10[%c4, %c0_17] : memref<40x1024xf32, #tpu.memory_space<vmem>>, vector<4x1024xf32>
    tpu.vector_store %arg10[%c4, %c0_17], %18 {strides = array<i32>} : memref<40x1024xf32, #tpu.memory_space<vmem>>, vector<4x1024xf32>,
    %c0_18 = arith.constant 0 : index
    %c97 = arith.constant 97 : index
    %20 = vector.load %arg9[%c0_18, %c97] : memref<8x1280xf32, #tpu.memory_space<vmem>>, vector<4x1024xf32>
    %c2 = arith.constant 2 : index
    %c0_19 = arith.constant 0 : index
    %c0_20 = arith.constant 0 : index
    %21 = vector.load %arg3[%c2, %c0_19, %c0_20] : memref<3x1x1024xf32, #tpu.memory_space<vmem>>, vector<1x1x1024xf32>
    %22 = vector.shape_cast %21 : vector<1x1x1024xf32> to vector<1x1024xf32>
    %23 = vector.broadcast %22 : vector<1x1024xf32> to vector<4x1024xf32>
    %24 = arith.mulf %20, %23 : vector<4x1024xf32>
    %c8 = arith.constant 8 : index
    %c0_21 = arith.constant 0 : index
    %25 = vector.load %arg10[%c8, %c0_21] : memref<40x1024xf32, #tpu.memory_space<vmem>>, vector<4x1024xf32>
    tpu.vector_store %arg10[%c8, %c0_21], %24 {strides = array<i32>} : memref<40x1024xf32, #tpu.memory_space<vmem>>, vector<4x1024xf32>,
    %c0_22 = arith.constant 0 : index
    %c127 = arith.constant 127 : index
    %26 = vector.load %arg9[%c0_22, %c127] : memref<8x1280xf32, #tpu.memory_space<vmem>>, vector<4x1024xf32>
    %c0_23 = arith.constant 0 : index
    %c0_24 = arith.constant 0 : index
    %c0_25 = arith.constant 0 : index
    %27 = vector.load %arg3[%c0_23, %c0_24, %c0_25] : memref<3x1x1024xf32, #tpu.memory_space<vmem>>, vector<1x1x1024xf32>
    %28 = vector.shape_cast %27 : vector<1x1x1024xf32> to vector<1x1024xf32>
    %29 = vector.broadcast %28 : vector<1x1024xf32> to vector<4x1024xf32>
    %30 = arith.mulf %26, %29 : vector<4x1024xf32>
    %c12 = arith.constant 12 : index
    %c0_26 = arith.constant 0 : index
    %31 = vector.load %arg10[%c12, %c0_26] : memref<40x1024xf32, #tpu.memory_space<vmem>>, vector<4x1024xf32>
    tpu.vector_store %arg10[%c12, %c0_26], %30 {strides = array<i32>} : memref<40x1024xf32, #tpu.memory_space<vmem>>, vector<4x1024xf32>,
    %c0_27 = arith.constant 0 : index
    %c128_28 = arith.constant 128 : index
    %32 = vector.load %arg9[%c0_27, %c128_28] : memref<8x1280xf32, #tpu.memory_space<vmem>>, vector<4x1024xf32>
    %c16 = arith.constant 16 : index
    %c0_29 = arith.constant 0 : index
    %33 = vector.load %arg10[%c16, %c0_29] : memref<40x1024xf32, #tpu.memory_space<vmem>>, vector<4x1024xf32>
    tpu.vector_store %arg10[%c16, %c0_29], %32 {strides = array<i32>} : memref<40x1024xf32, #tpu.memory_space<vmem>>, vector<4x1024xf32>,
    %c0_30 = arith.constant 0 : index
    %c129 = arith.constant 129 : index
    %34 = vector.load %arg9[%c0_30, %c129] : memref<8x1280xf32, #tpu.memory_space<vmem>>, vector<4x1024xf32>
    %c2_31 = arith.constant 2 : index
    %c0_32 = arith.constant 0 : index
    %c0_33 = arith.constant 0 : index
    %35 = vector.load %arg3[%c2_31, %c0_32, %c0_33] : memref<3x1x1024xf32, #tpu.memory_space<vmem>>, vector<1x1x1024xf32>
    %36 = vector.shape_cast %35 : vector<1x1x1024xf32> to vector<1x1024xf32>
    %37 = vector.broadcast %36 : vector<1x1024xf32> to vector<4x1024xf32>
    %38 = arith.mulf %34, %37 : vector<4x1024xf32>
    %c20 = arith.constant 20 : index
    %c0_34 = arith.constant 0 : index
    %39 = vector.load %arg10[%c20, %c0_34] : memref<40x1024xf32, #tpu.memory_space<vmem>>, vector<4x1024xf32>
    tpu.vector_store %arg10[%c20, %c0_34], %38 {strides = array<i32>} : memref<40x1024xf32, #tpu.memory_space<vmem>>, vector<4x1024xf32>,
    %c0_35 = arith.constant 0 : index
    %c159 = arith.constant 159 : index
    %40 = vector.load %arg9[%c0_35, %c159] : memref<8x1280xf32, #tpu.memory_space<vmem>>, vector<4x1024xf32>
    %c0_36 = arith.constant 0 : index
    %c0_37 = arith.constant 0 : index
    %c0_38 = arith.constant 0 : index
    %41 = vector.load %arg3[%c0_36, %c0_37, %c0_38] : memref<3x1x1024xf32, #tpu.memory_space<vmem>>, vector<1x1x1024xf32>
    %42 = vector.shape_cast %41 : vector<1x1x1024xf32> to vector<1x1024xf32>
    %43 = vector.broadcast %42 : vector<1x1024xf32> to vector<4x1024xf32>
    %44 = arith.mulf %40, %43 : vector<4x1024xf32>
    %c24 = arith.constant 24 : index
    %c0_39 = arith.constant 0 : index
    %45 = vector.load %arg10[%c24, %c0_39] : memref<40x1024xf32, #tpu.memory_space<vmem>>, vector<4x1024xf32>
    tpu.vector_store %arg10[%c24, %c0_39], %44 {strides = array<i32>} : memref<40x1024xf32, #tpu.memory_space<vmem>>, vector<4x1024xf32>,
    %c0_40 = arith.constant 0 : index
    %c160 = arith.constant 160 : index
    %46 = vector.load %arg9[%c0_40, %c160] : memref<8x1280xf32, #tpu.memory_space<vmem>>, vector<4x1024xf32>
    %c28 = arith.constant 28 : index
    %c0_41 = arith.constant 0 : index
    %47 = vector.load %arg10[%c28, %c0_41] : memref<40x1024xf32, #tpu.memory_space<vmem>>, vector<4x1024xf32>
    tpu.vector_store %arg10[%c28, %c0_41], %46 {strides = array<i32>} : memref<40x1024xf32, #tpu.memory_space<vmem>>, vector<4x1024xf32>,
    %c0_42 = arith.constant 0 : index
    %c161 = arith.constant 161 : index
    %48 = vector.load %arg9[%c0_42, %c161] : memref<8x1280xf32, #tpu.memory_space<vmem>>, vector<4x1024xf32>
    %c2_43 = arith.constant 2 : index
    %c0_44 = arith.constant 0 : index
    %c0_45 = arith.constant 0 : index
    %49 = vector.load %arg3[%c2_43, %c0_44, %c0_45] : memref<3x1x1024xf32, #tpu.memory_space<vmem>>, vector<1x1x1024xf32>
    %50 = vector.shape_cast %49 : vector<1x1x1024xf32> to vector<1x1024xf32>
    %51 = vector.broadcast %50 : vector<1x1024xf32> to vector<4x1024xf32>
    %52 = arith.mulf %48, %51 : vector<4x1024xf32>
    %c32 = arith.constant 32 : index
    %c0_46 = arith.constant 0 : index
    %53 = vector.load %arg10[%c32, %c0_46] : memref<40x1024xf32, #tpu.memory_space<vmem>>, vector<4x1024xf32>
    tpu.vector_store %arg10[%c32, %c0_46], %52 {strides = array<i32>} : memref<40x1024xf32, #tpu.memory_space<vmem>>, vector<4x1024xf32>,
    %c0_47 = arith.constant 0 : index
    %c0_48 = arith.constant 0 : index
    %54 = vector.load %arg4[%c0_47, %c0_48] : memref<4x36xf32, #tpu.memory_space<vmem>>, vector<4x36xf32>
    %c0_49 = arith.constant 0 : index
    %c0_50 = arith.constant 0 : index
    %55 = vector.load %arg10[%c0_49, %c0_50] : memref<40x1024xf32, #tpu.memory_space<vmem>>, vector<36x1024xf32>
    %cst_51 = arith.constant dense<0.000000e+00> : vector<4x1024xf32>
    %56 = tpu.matmul %54, %55, %cst_51 {dimension_numbers = #tpu.dot_dimension_numbers<[1], [0], [0], [1], [0, 0, 1, 1], [], []>} : vector<4x36xf32>, vector<36x1024xf32>, vector<4x1024xf32> -> vector<4x1024xf32>
    %c0_52 = arith.constant 0 : index
    %c0_53 = arith.constant 0 : index
    %57 = vector.load %arg5[%c0_52, %c0_53] : memref<4x1xf32, #tpu.memory_space<vmem>>, vector<4x1xf32>
    %58 = vector.broadcast %57 : vector<4x1xf32> to vector<4x1024xf32>
    %59 = arith.addf %56, %58 : vector<4x1024xf32>
    %cst_54 = arith.constant 0.000000e+00 : f32
    %60 = vector.broadcast %cst_54 : f32 to vector<4x1024xf32>
    %61 = arith.maximumf %59, %60 : vector<4x1024xf32>
    %c0_55 = arith.constant 0 : index
    %c128_56 = arith.constant 128 : index
    %62 = vector.load %arg9[%c0_55, %c128_56] : memref<8x1280xf32, #tpu.memory_space<vmem>>, vector<4x1024xf32>
    tpu.vector_store %arg9[%c0_55, %c128_56], %61 {strides = array<i32>} : memref<8x1280xf32, #tpu.memory_space<vmem>>, vector<4x1024xf32>,
    %c0_57 = arith.constant 0 : index
    %c95_58 = arith.constant 95 : index
    %63 = vector.load %arg9[%c0_57, %c95_58] : memref<8x1280xf32, #tpu.memory_space<vmem>>, vector<4x1024xf32>
    %c0_59 = arith.constant 0 : index
    %c0_60 = arith.constant 0 : index
    %c0_61 = arith.constant 0 : index
    %64 = vector.load %arg3[%c0_59, %c0_60, %c0_61] : memref<3x1x1024xf32, #tpu.memory_space<vmem>>, vector<1x1x1024xf32>
    %65 = vector.shape_cast %64 : vector<1x1x1024xf32> to vector<1x1024xf32>
    %66 = vector.broadcast %65 : vector<1x1024xf32> to vector<4x1024xf32>
    %67 = arith.mulf %63, %66 : vector<4x1024xf32>
    %c0_62 = arith.constant 0 : index
    %c0_63 = arith.constant 0 : index
    %68 = vector.load %arg10[%c0_62, %c0_63] : memref<40x1024xf32, #tpu.memory_space<vmem>>, vector<4x1024xf32>
    tpu.vector_store %arg10[%c0_62, %c0_63], %67 {strides = array<i32>} : memref<40x1024xf32, #tpu.memory_space<vmem>>, vector<4x1024xf32>,
    %c0_64 = arith.constant 0 : index
    %c96_65 = arith.constant 96 : index
    %69 = vector.load %arg9[%c0_64, %c96_65] : memref<8x1280xf32, #tpu.memory_space<vmem>>, vector<4x1024xf32>
    %c4_66 = arith.constant 4 : index
    %c0_67 = arith.constant 0 : index
    %70 = vector.load %arg10[%c4_66, %c0_67] : memref<40x1024xf32, #tpu.memory_space<vmem>>, vector<4x1024xf32>
    tpu.vector_store %arg10[%c4_66, %c0_67], %69 {strides = array<i32>} : memref<40x1024xf32, #tpu.memory_space<vmem>>, vector<4x1024xf32>,
    %c0_68 = arith.constant 0 : index
    %c97_69 = arith.constant 97 : index
    %71 = vector.load %arg9[%c0_68, %c97_69] : memref<8x1280xf32, #tpu.memory_space<vmem>>, vector<4x1024xf32>
    %c2_70 = arith.constant 2 : index
    %c0_71 = arith.constant 0 : index
    %c0_72 = arith.constant 0 : index
    %72 = vector.load %arg3[%c2_70, %c0_71, %c0_72] : memref<3x1x1024xf32, #tpu.memory_space<vmem>>, vector<1x1x1024xf32>
    %73 = vector.shape_cast %72 : vector<1x1x1024xf32> to vector<1x1024xf32>
    %74 = vector.broadcast %73 : vector<1x1024xf32> to vector<4x1024xf32>
    %75 = arith.mulf %71, %74 : vector<4x1024xf32>
    %c8_73 = arith.constant 8 : index
    %c0_74 = arith.constant 0 : index
    %76 = vector.load %arg10[%c8_73, %c0_74] : memref<40x1024xf32, #tpu.memory_space<vmem>>, vector<4x1024xf32>
    tpu.vector_store %arg10[%c8_73, %c0_74], %75 {strides = array<i32>} : memref<40x1024xf32, #tpu.memory_space<vmem>>, vector<4x1024xf32>,
    %c0_75 = arith.constant 0 : index
    %c127_76 = arith.constant 127 : index
    %77 = vector.load %arg9[%c0_75, %c127_76] : memref<8x1280xf32, #tpu.memory_space<vmem>>, vector<4x1024xf32>
    %c0_77 = arith.constant 0 : index
    %c0_78 = arith.constant 0 : index
    %c0_79 = arith.constant 0 : index
    %78 = vector.load %arg3[%c0_77, %c0_78, %c0_79] : memref<3x1x1024xf32, #tpu.memory_space<vmem>>, vector<1x1x1024xf32>
    %79 = vector.shape_cast %78 : vector<1x1x1024xf32> to vector<1x1024xf32>
    %80 = vector.broadcast %79 : vector<1x1024xf32> to vector<4x1024xf32>
    %81 = arith.mulf %77, %80 : vector<4x1024xf32>
    %c12_80 = arith.constant 12 : index
    %c0_81 = arith.constant 0 : index
    %82 = vector.load %arg10[%c12_80, %c0_81] : memref<40x1024xf32, #tpu.memory_space<vmem>>, vector<4x1024xf32>
    tpu.vector_store %arg10[%c12_80, %c0_81], %81 {strides = array<i32>} : memref<40x1024xf32, #tpu.memory_space<vmem>>, vector<4x1024xf32>,
    %c0_82 = arith.constant 0 : index
    %c128_83 = arith.constant 128 : index
    %83 = vector.load %arg9[%c0_82, %c128_83] : memref<8x1280xf32, #tpu.memory_space<vmem>>, vector<4x1024xf32>
    %c16_84 = arith.constant 16 : index
    %c0_85 = arith.constant 0 : index
    %84 = vector.load %arg10[%c16_84, %c0_85] : memref<40x1024xf32, #tpu.memory_space<vmem>>, vector<4x1024xf32>
    tpu.vector_store %arg10[%c16_84, %c0_85], %83 {strides = array<i32>} : memref<40x1024xf32, #tpu.memory_space<vmem>>, vector<4x1024xf32>,
    %c0_86 = arith.constant 0 : index
    %c129_87 = arith.constant 129 : index
    %85 = vector.load %arg9[%c0_86, %c129_87] : memref<8x1280xf32, #tpu.memory_space<vmem>>, vector<4x1024xf32>
    %c2_88 = arith.constant 2 : index
    %c0_89 = arith.constant 0 : index
    %c0_90 = arith.constant 0 : index
    %86 = vector.load %arg3[%c2_88, %c0_89, %c0_90] : memref<3x1x1024xf32, #tpu.memory_space<vmem>>, vector<1x1x1024xf32>
    %87 = vector.shape_cast %86 : vector<1x1x1024xf32> to vector<1x1024xf32>
    %88 = vector.broadcast %87 : vector<1x1024xf32> to vector<4x1024xf32>
    %89 = arith.mulf %85, %88 : vector<4x1024xf32>
    %c20_91 = arith.constant 20 : index
    %c0_92 = arith.constant 0 : index
    %90 = vector.load %arg10[%c20_91, %c0_92] : memref<40x1024xf32, #tpu.memory_space<vmem>>, vector<4x1024xf32>
    tpu.vector_store %arg10[%c20_91, %c0_92], %89 {strides = array<i32>} : memref<40x1024xf32, #tpu.memory_space<vmem>>, vector<4x1024xf32>,
    %c0_93 = arith.constant 0 : index
    %c159_94 = arith.constant 159 : index
    %91 = vector.load %arg9[%c0_93, %c159_94] : memref<8x1280xf32, #tpu.memory_space<vmem>>, vector<4x1024xf32>
    %c0_95 = arith.constant 0 : index
    %c0_96 = arith.constant 0 : index
    %c0_97 = arith.constant 0 : index
    %92 = vector.load %arg3[%c0_95, %c0_96, %c0_97] : memref<3x1x1024xf32, #tpu.memory_space<vmem>>, vector<1x1x1024xf32>
    %93 = vector.shape_cast %92 : vector<1x1x1024xf32> to vector<1x1024xf32>
    %94 = vector.broadcast %93 : vector<1x1024xf32> to vector<4x1024xf32>
    %95 = arith.mulf %91, %94 : vector<4x1024xf32>
    %c24_98 = arith.constant 24 : index
    %c0_99 = arith.constant 0 : index
    %96 = vector.load %arg10[%c24_98, %c0_99] : memref<40x1024xf32, #tpu.memory_space<vmem>>, vector<4x1024xf32>
    tpu.vector_store %arg10[%c24_98, %c0_99], %95 {strides = array<i32>} : memref<40x1024xf32, #tpu.memory_space<vmem>>, vector<4x1024xf32>,
    %c0_100 = arith.constant 0 : index
    %c160_101 = arith.constant 160 : index
    %97 = vector.load %arg9[%c0_100, %c160_101] : memref<8x1280xf32, #tpu.memory_space<vmem>>, vector<4x1024xf32>
    %c28_102 = arith.constant 28 : index
    %c0_103 = arith.constant 0 : index
    %98 = vector.load %arg10[%c28_102, %c0_103] : memref<40x1024xf32, #tpu.memory_space<vmem>>, vector<4x1024xf32>
    tpu.vector_store %arg10[%c28_102, %c0_103], %97 {strides = array<i32>} : memref<40x1024xf32, #tpu.memory_space<vmem>>, vector<4x1024xf32>,
    %c0_104 = arith.constant 0 : index
    %c161_105 = arith.constant 161 : index
    %99 = vector.load %arg9[%c0_104, %c161_105] : memref<8x1280xf32, #tpu.memory_space<vmem>>, vector<4x1024xf32>
    %c2_106 = arith.constant 2 : index
    %c0_107 = arith.constant 0 : index
    %c0_108 = arith.constant 0 : index
    %100 = vector.load %arg3[%c2_106, %c0_107, %c0_108] : memref<3x1x1024xf32, #tpu.memory_space<vmem>>, vector<1x1x1024xf32>
    %101 = vector.shape_cast %100 : vector<1x1x1024xf32> to vector<1x1024xf32>
    %102 = vector.broadcast %101 : vector<1x1024xf32> to vector<4x1024xf32>
    %103 = arith.mulf %99, %102 : vector<4x1024xf32>
    %c32_109 = arith.constant 32 : index
    %c0_110 = arith.constant 0 : index
    %104 = vector.load %arg10[%c32_109, %c0_110] : memref<40x1024xf32, #tpu.memory_space<vmem>>, vector<4x1024xf32>
    tpu.vector_store %arg10[%c32_109, %c0_110], %103 {strides = array<i32>} : memref<40x1024xf32, #tpu.memory_space<vmem>>, vector<4x1024xf32>,
    %c0_111 = arith.constant 0 : index
    %c0_112 = arith.constant 0 : index
    %105 = vector.load %arg6[%c0_111, %c0_112] : memref<8x36xf32, #tpu.memory_space<vmem>>, vector<8x36xf32>
    %c0_113 = arith.constant 0 : index
    %c0_114 = arith.constant 0 : index
    %106 = vector.load %arg10[%c0_113, %c0_114] : memref<40x1024xf32, #tpu.memory_space<vmem>>, vector<36x1024xf32>
    %cst_115 = arith.constant dense<0.000000e+00> : vector<8x1024xf32>
    %107 = tpu.matmul %105, %106, %cst_115 {dimension_numbers = #tpu.dot_dimension_numbers<[1], [0], [0], [1], [0, 0, 1, 1], [], []>} : vector<8x36xf32>, vector<36x1024xf32>, vector<8x1024xf32> -> vector<8x1024xf32>
    %c0_116 = arith.constant 0 : index
    %c0_117 = arith.constant 0 : index
    %108 = vector.load %arg7[%c0_116, %c0_117] : memref<8x1xf32, #tpu.memory_space<vmem>>, vector<8x1xf32>
    %109 = vector.broadcast %108 : vector<8x1xf32> to vector<8x1024xf32>
    %110 = arith.addf %107, %109 : vector<8x1024xf32>
    %cst_118 = arith.constant 0.000000e+00 : f32
    %111 = vector.broadcast %cst_118 : f32 to vector<8x1024xf32>
    %112 = arith.maximumf %110, %111 : vector<8x1024xf32>
    %c0_119 = arith.constant 0 : index
    %c0_120 = arith.constant 0 : index
    %c0_121 = arith.constant 0 : index
    %113 = vector.load %arg8[%c0_119, %c0_120, %c0_121] : memref<1x8x1024xf32, #tpu.memory_space<vmem>>, vector<1x8x1024xf32>
    %114 = vector.shape_cast %113 : vector<1x8x1024xf32> to vector<8x1024xf32>
    %115 = vector.shape_cast %112 : vector<8x1024xf32> to vector<1x8x1024xf32>
    tpu.vector_store %arg8[%c0_119, %c0_120, %c0_121], %115 {strides = array<i32>} : memref<1x8x1024xf32, #tpu.memory_space<vmem>>, vector<1x8x1024xf32>,
    return
  }
  func.func @transform_0(%arg0: i32) -> (i32, i32, i32) {
    %c0_i32 = arith.constant 0 : i32
    %c0_i32_0 = arith.constant 0 : i32
    %c0_i32_1 = arith.constant 0 : i32
    return %arg0, %c0_i32, %c0_i32_0 : i32, i32, i32
  }
  func.func @transform_1(%arg0: i32) -> (i32, i32, i32) {
    %c0_i32 = arith.constant 0 : i32
    %c0_i32_0 = arith.constant 0 : i32
    %c0_i32_1 = arith.constant 0 : i32
    return %arg0, %c0_i32, %c0_i32_0 : i32, i32, i32
  }
  func.func @transform_2(%arg0: i32) -> (i32, i32, i32) {
    %c0_i32 = arith.constant 0 : i32
    %c0_i32_0 = arith.constant 0 : i32
    %c0_i32_1 = arith.constant 0 : i32
    %c0_i32_2 = arith.constant 0 : i32
    return %c0_i32, %c0_i32_0, %c0_i32_1 : i32, i32, i32
  }
  func.func @transform_3(%arg0: i32) -> (i32, i32) {
    %c0_i32 = arith.constant 0 : i32
    %c0_i32_0 = arith.constant 0 : i32
    %c0_i32_1 = arith.constant 0 : i32
    return %c0_i32, %c0_i32_0 : i32, i32
  }
  func.func @transform_4(%arg0: i32) -> (i32, i32) {
    %c0_i32 = arith.constant 0 : i32
    %c0_i32_0 = arith.constant 0 : i32
    %c0_i32_1 = arith.constant 0 : i32
    return %c0_i32, %c0_i32_0 : i32, i32
  }
  func.func @transform_5(%arg0: i32) -> (i32, i32) {
    %c0_i32 = arith.constant 0 : i32
    %c0_i32_0 = arith.constant 0 : i32
    %c0_i32_1 = arith.constant 0 : i32
    return %c0_i32, %c0_i32_0 : i32, i32
  }
  func.func @transform_6(%arg0: i32) -> (i32, i32) {
    %c0_i32 = arith.constant 0 : i32
    %c0_i32_0 = arith.constant 0 : i32
    %c0_i32_1 = arith.constant 0 : i32
    return %c0_i32, %c0_i32_0 : i32, i32
  }
  func.func @transform_7(%arg0: i32) -> (i32, i32, i32) {
    %c0_i32 = arith.constant 0 : i32
    %c0_i32_0 = arith.constant 0 : i32
    %c0_i32_1 = arith.constant 0 : i32
    return %arg0, %c0_i32, %c0_i32_0 : i32, i32, i32
  }
}

</mosaic_0001>

<llo_original>
// kernel: decoder_block_forward.1
$region0: #{decoder_block_forward.1}
  #allocation0 [shape = 'u32[]', space=smem, size = 0x4, offset = 0x4, fixed_abs, tag = 'smem constant byte address 0x4 - core index']
  #allocation1 [shape = 'u32[144,128]{1,0:T(1,128)}', space=vmem, size = 0x12000, scoped, tag = 'internal scratch']
  #allocation2 [shape = 'f32[8,1280]{1,0:T(8,128)}', space=vmem, size = 0xa000, scoped, tag = 'scratch operand']
  #allocation3 [shape = 'f32[40,1024]{1,0:T(8,128)}', space=vmem, size = 0x28000, scoped, tag = 'scratch operand']
  %s0 = inlined_call_operand.vmem [shape: f32[2,4,1024], index: 0, kind: input, shape index: {}]
  %s1 = inlined_call_operand.vmem [shape: s32[2,4,1024], index: 1, kind: input, shape index: {}]
  %s2 = inlined_call_operand.vmem [shape: f32[3,1,1024], index: 2, kind: input, shape index: {}]
  %s3 = inlined_call_operand.vmem [shape: f32[4,36], index: 3, kind: input, shape index: {}]
  %s4 = inlined_call_operand.vmem [shape: f32[4,1], index: 4, kind: input, shape index: {}]
  %s5 = inlined_call_operand.vmem [shape: f32[8,36], index: 5, kind: input, shape index: {}]
  %s6 = inlined_call_operand.vmem [shape: f32[8,1], index: 6, kind: input, shape index: {}]
  %s7 = inlined_call_operand.vmem [shape: f32[2,8,1024], index: 7, kind: output, shape index: {}]
  %s8 = sld [smem:[#allocation0]]
  $region61: #{decoder_block_forward.1} parent=0
    _
  %s10 = ssub.s32 1, %s8
  %s11 = scalar_select 0, %s10, %s8
  loop: start=0, step=1, limit=4
  $region2: #{decoder_block_forward.1} parent=0 // loop_pre_header
    _
  $region3: #{decoder_block_forward.1} parent=0 // loop_header
    %s13 = sphi 0, %s17
    %p14 = scmp.ge.s32.totalorder %s13, 4
    %s23 = sphi 0, %s25
    %s26 = sphi 0, %s23
    %s27 = sphi 0, %s26
    %s43 = sphi 0, %s27
    %s49 = sphi 0, %s51
    %s52 = sphi 0, %s49
    %s53 = sphi 0, %s52
    %s69 = sphi 0, %s53
    %s73 = sphi 0, %s73
    %s75 = sphi 0, %s73
    %s76 = sphi 0, %s75
    %s90 = sphi 0, %s76
    %s94 = sphi 0, %s94
    %s96 = sphi 0, %s94
    %s97 = sphi 0, %s96
    %s111 = sphi 0, %s97
    %s115 = sphi 0, %s115
    %s117 = sphi 0, %s115
    %s118 = sphi 0, %s117
    %s132 = sphi 0, %s118
    %s136 = sphi 0, %s136
    %s138 = sphi 0, %s136
    %s139 = sphi 0, %s138
    %s153 = sphi 0, %s139
    %s157 = sphi 0, %s157
    %s159 = sphi 0, %s157
    %s160 = sphi 0, %s159
    %s174 = sphi 0, %s160
    %s180 = sphi 0, %s182
    %s183 = sphi 0, %s180
    %s184 = sphi 0, %s183
    %s200 = sphi 0, %s184
  $region4: #{decoder_block_forward.1} parent=0 // loop_header_branch
    %16 = sbr.rel (%p14) target = $region8
  $region5: #{decoder_block_forward.1} parent=0 // loop_body
    %s18 = ssub.s32 %s13, 1
    %s19 = ssub.s32 %s13, 2
    %s20 = sadd.s32 %s13, 1
    %s21 = ssub.s32 %s13, %s20
    %p22 = scmp.eq.s32.totalorder %s21, 0
    %s24 = sadd.s32 %s23, 1
    %s25 = scalar_select %p22, %s23, %s24
    %p28 = pneg %p22
    %p29 = scmp.eq.s32.totalorder %s13, 1
    %p30 = por %p28, %p29
    %p31 = scmp.ne.s32.totalorder %s23, %s26
    %p32 = scmp.eq.s32.totalorder %s13, 0
    %p33 = por %p31, %p32
    %p34 = scmp.ne.s32.totalorder %s23, %s26
    %p35 = scmp.eq.s32.totalorder %s18, 1
    %p36 = por %p34, %p35
    %p37 = scmp.ne.s32.totalorder %s26, %s27
    %p38 = scmp.eq.s32.totalorder %s18, 0
    %p39 = por %p37, %p38
    %p40 = scmp.ne.s32.totalorder %s26, %s27
    %p41 = scmp.eq.s32.totalorder %s19, 1
    %p42 = por %p40, %p41
    %p44 = scmp.ne.s32.totalorder %s27, %s43
    %p45 = scmp.eq.s32.totalorder %s19, 0
    %p46 = por %p44, %p45
    %s47 = ssub.s32 %s13, %s20
    %p48 = scmp.eq.s32.totalorder %s47, 0
    %s50 = sadd.s32 %s49, 1
    %s51 = scalar_select %p48, %s49, %s50
    %p54 = pneg %p48
    %p55 = scmp.eq.s32.totalorder %s13, 1
    %p56 = por %p54, %p55
    %p57 = scmp.ne.s32.totalorder %s49, %s52
    %p58 = scmp.eq.s32.totalorder %s13, 0
    %p59 = por %p57, %p58
    %p60 = scmp.ne.s32.totalorder %s49, %s52
    %p61 = scmp.eq.s32.totalorder %s18, 1
    %p62 = por %p60, %p61
    %p63 = scmp.ne.s32.totalorder %s52, %s53
    %p64 = scmp.eq.s32.totalorder %s18, 0
    %p65 = por %p63, %p64
    %p66 = scmp.ne.s32.totalorder %s52, %s53
    %p67 = scmp.eq.s32.totalorder %s19, 1
    %p68 = por %p66, %p67
    %p70 = scmp.ne.s32.totalorder %s53, %s69
    %p71 = scmp.eq.s32.totalorder %s19, 0
    %p72 = por %p70, %p71
    %s74 = sadd.s32 %s73, 1
    %p77 = scmp.eq.s32.totalorder %s13, 1
    %p78 = scmp.ne.s32.totalorder %s73, %s75
    %p79 = scmp.eq.s32.totalorder %s13, 0
    %p80 = por %p78, %p79
    %p81 = scmp.ne.s32.totalorder %s73, %s75
    %p82 = scmp.eq.s32.totalorder %s18, 1
    %p83 = por %p81, %p82
    %p84 = scmp.ne.s32.totalorder %s75, %s76
    %p85 = scmp.eq.s32.totalorder %s18, 0
    %p86 = por %p84, %p85
    %p87 = scmp.ne.s32.totalorder %s75, %s76
    %p88 = scmp.eq.s32.totalorder %s19, 1
    %p89 = por %p87, %p88
    %p91 = scmp.ne.s32.totalorder %s76, %s90
    %p92 = scmp.eq.s32.totalorder %s19, 0
    %p93 = por %p91, %p92
    %s95 = sadd.s32 %s94, 1
    %p98 = scmp.eq.s32.totalorder %s13, 1
    %p99 = scmp.ne.s32.totalorder %s94, %s96
    %p100 = scmp.eq.s32.totalorder %s13, 0
    %p101 = por %p99, %p100
    %p102 = scmp.ne.s32.totalorder %s94, %s96
    %p103 = scmp.eq.s32.totalorder %s18, 1
    %p104 = por %p102, %p103
    %p105 = scmp.ne.s32.totalorder %s96, %s97
    %p106 = scmp.eq.s32.totalorder %s18, 0
    %p107 = por %p105, %p106
    %p108 = scmp.ne.s32.totalorder %s96, %s97
    %p109 = scmp.eq.s32.totalorder %s19, 1
    %p110 = por %p108, %p109
    %p112 = scmp.ne.s32.totalorder %s97, %s111
    %p113 = scmp.eq.s32.totalorder %s19, 0
    %p114 = por %p112, %p113
    %s116 = sadd.s32 %s115, 1
    %p119 = scmp.eq.s32.totalorder %s13, 1
    %p120 = scmp.ne.s32.totalorder %s115, %s117
    %p121 = scmp.eq.s32.totalorder %s13, 0
    %p122 = por %p120, %p121
    %p123 = scmp.ne.s32.totalorder %s115, %s117
    %p124 = scmp.eq.s32.totalorder %s18, 1
    %p125 = por %p123, %p124
    %p126 = scmp.ne.s32.totalorder %s117, %s118
    %p127 = scmp.eq.s32.totalorder %s18, 0
    %p128 = por %p126, %p127
    %p129 = scmp.ne.s32.totalorder %s117, %s118
    %p130 = scmp.eq.s32.totalorder %s19, 1
    %p131 = por %p129, %p130
    %p133 = scmp.ne.s32.totalorder %s118, %s132
    %p134 = scmp.eq.s32.totalorder %s19, 0
    %p135 = por %p133, %p134
    %s137 = sadd.s32 %s136, 1
    %p140 = scmp.eq.s32.totalorder %s13, 1
    %p141 = scmp.ne.s32.totalorder %s136, %s138
    %p142 = scmp.eq.s32.totalorder %s13, 0
    %p143 = por %p141, %p142
    %p144 = scmp.ne.s32.totalorder %s136, %s138
    %p145 = scmp.eq.s32.totalorder %s18, 1
    %p146 = por %p144, %p145
    %p147 = scmp.ne.s32.totalorder %s138, %s139
    %p148 = scmp.eq.s32.totalorder %s18, 0
    %p149 = por %p147, %p148
    %p150 = scmp.ne.s32.totalorder %s138, %s139
    %p151 = scmp.eq.s32.totalorder %s19, 1
    %p152 = por %p150, %p151
    %p154 = scmp.ne.s32.totalorder %s139, %s153
    %p155 = scmp.eq.s32.totalorder %s19, 0
    %p156 = por %p154, %p155
    %s158 = sadd.s32 %s157, 1
    %p161 = scmp.eq.s32.totalorder %s13, 1
    %p162 = scmp.ne.s32.totalorder %s157, %s159
    %p163 = scmp.eq.s32.totalorder %s13, 0
    %p164 = por %p162, %p163
    %p165 = scmp.ne.s32.totalorder %s157, %s159
    %p166 = scmp.eq.s32.totalorder %s18, 1
    %p167 = por %p165, %p166
    %p168 = scmp.ne.s32.totalorder %s159, %s160
    %p169 = scmp.eq.s32.totalorder %s18, 0
    %p170 = por %p168, %p169
    %p171 = scmp.ne.s32.totalorder %s159, %s160
    %p172 = scmp.eq.s32.totalorder %s19, 1
    %p173 = por %p171, %p172
    %p175 = scmp.ne.s32.totalorder %s160, %s174
    %p176 = scmp.eq.s32.totalorder %s19, 0
    %p177 = por %p175, %p176
    %s178 = ssub.s32 %s13, %s20
    %p179 = scmp.eq.s32.totalorder %s178, 0
    %s181 = sadd.s32 %s180, 1
    %s182 = scalar_select %p179, %s180, %s181
    %p185 = pneg %p179
    %p186 = scmp.eq.s32.totalorder %s13, 1
    %p187 = por %p185, %p186
    %p188 = scmp.ne.s32.totalorder %s180, %s183
    %p189 = scmp.eq.s32.totalorder %s13, 0
    %p190 = por %p188, %p189
    %p191 = scmp.ne.s32.totalorder %s180, %s183
    %p192 = scmp.eq.s32.totalorder %s18, 1
    %p193 = por %p191, %p192
    %p194 = scmp.ne.s32.totalorder %s183, %s184
    %p195 = scmp.eq.s32.totalorder %s18, 0
    %p196 = por %p194, %p195
    %p197 = scmp.ne.s32.totalorder %s183, %s184
    %p198 = scmp.eq.s32.totalorder %s19, 1
    %p199 = por %p197, %p198
    %p201 = scmp.ne.s32.totalorder %s184, %s200
    %p202 = scmp.eq.s32.totalorder %s19, 0
    %p203 = por %p201, %p202
    %p204 = scmp.le.s32.totalorder 1, %s13
    %p205 = scmp.lt.s32.totalorder %s13, 3
    %p206 = pnand %p204, %p205
    %p207 = pneg %p206
    // Predicated region
    $region9: #{decoder_block_forward.1} parent=5 // pred_check
      _
    $region10: #{decoder_block_forward.1} parent=5 // pred_check_branch
      %209 = sbr.rel (%p206) target = $region12
    $region11: #{decoder_block_forward.1} parent=5 // pred_region
      %s210 = ssub.s32 %s13, 1
      // Predicated region
      $region13: #{decoder_block_forward.1} parent=11 // pred_check
        %p211 = pneg %p86
      $region14: #{decoder_block_forward.1} parent=11 // pred_check_branch
        %213 = sbr.rel (%p211) target = $region16
      $region15: #{decoder_block_forward.1} parent=11 // pred_region
        _
      $region16: #{decoder_block_forward.1} parent=11 // pred_fallthru
        _
      // Predicated region
      $region17: #{decoder_block_forward.1} parent=11 // pred_check
        %p214 = pneg %p107
      $region18: #{decoder_block_forward.1} parent=11 // pred_check_branch
        %216 = sbr.rel (%p214) target = $region20
      $region19: #{decoder_block_forward.1} parent=11 // pred_region
        _
      $region20: #{decoder_block_forward.1} parent=11 // pred_fallthru
        _
      // Predicated region
      $region21: #{decoder_block_forward.1} parent=11 // pred_check
        %p217 = pneg %p128
      $region22: #{decoder_block_forward.1} parent=11 // pred_check_branch
        %219 = sbr.rel (%p217) target = $region24
      $region23: #{decoder_block_forward.1} parent=11 // pred_region
        _
      $region24: #{decoder_block_forward.1} parent=11 // pred_fallthru
        _
      // Predicated region
      $region25: #{decoder_block_forward.1} parent=11 // pred_check
        %p220 = pneg %p149
      $region26: #{decoder_block_forward.1} parent=11 // pred_check_branch
        %222 = sbr.rel (%p220) target = $region28
      $region27: #{decoder_block_forward.1} parent=11 // pred_region
        _
      $region28: #{decoder_block_forward.1} parent=11 // pred_fallthru
        _
      // Predicated region
      $region29: #{decoder_block_forward.1} parent=11 // pred_check
        %p223 = pneg %p170
      $region30: #{decoder_block_forward.1} parent=11 // pred_check_branch
        %225 = sbr.rel (%p223) target = $region32
      $region31: #{decoder_block_forward.1} parent=11 // pred_region
        _
      $region32: #{decoder_block_forward.1} parent=11 // pred_fallthru
        _
    $region12: #{decoder_block_forward.1} parent=5 // pred_fallthru
      _
    %p226 = scmp.lt.s32.totalorder %s13, 2
    // Predicated region
    $region33: #{decoder_block_forward.1} parent=5 // pred_check
      %p227 = pneg %p226
    $region34: #{decoder_block_forward.1} parent=5 // pred_check_branch
      %229 = sbr.rel (%p227) target = $region36
    $region35: #{decoder_block_forward.1} parent=5 // pred_region
      // Predicated region
      $region37: #{decoder_block_forward.1} parent=35 // pred_check
        %p230 = pneg %p33
      $region38: #{decoder_block_forward.1} parent=35 // pred_check_branch
        %232 = sbr.rel (%p230) target = $region40
      $region39: #{decoder_block_forward.1} parent=35 // pred_region
        %p233 = scmp.lt.s32.totalorder %s13, 1
        %s234 = scalar_select %p233, %s13, 1
        %s235 = smul.addr %s234, 8
        %s236 = smul.addr %s235, 4
        %s237 = scalar_lea.vmem %s0, %s236
      $region40: #{decoder_block_forward.1} parent=35 // pred_fallthru
        _
      // Predicated region
      $region41: #{decoder_block_forward.1} parent=35 // pred_check
        %p238 = pneg %p59
      $region42: #{decoder_block_forward.1} parent=35 // pred_check_branch
        %240 = sbr.rel (%p238) target = $region44
      $region43: #{decoder_block_forward.1} parent=35 // pred_region
        %p241 = scmp.lt.s32.totalorder %s13, 1
        %s242 = scalar_select %p241, %s13, 1
        %s243 = smul.addr %s242, 8
        %s244 = smul.addr %s243, 4
        %s245 = scalar_lea.vmem %s1, %s244
      $region44: #{decoder_block_forward.1} parent=35 // pred_fallthru
        _
    $region36: #{decoder_block_forward.1} parent=5 // pred_fallthru
      _
    %p246 = scmp.le.s32.totalorder 1, %s13
    %p247 = scmp.lt.s32.totalorder %s13, 3
    %p248 = pnand %p246, %p247
    %p249 = pneg %p248
    // Predicated region
    $region45: #{decoder_block_forward.1} parent=5 // pred_check
      _
    $region46: #{decoder_block_forward.1} parent=5 // pred_check_branch
      %251 = sbr.rel (%p248) target = $region48
    $region47: #{decoder_block_forward.1} parent=5 // pred_region
      %s252 = ssub.s32 %s13, 1
      %p253 = scmp.lt.s32.totalorder %s18, 1
      %s254 = scalar_select %p253, %s18, 1
      %s255 = smul.addr %s254, 8
      %s256 = smul.addr %s255, 4
      %s257 = scalar_lea.vmem %s0, %s256
      %p258 = pneg %p39
      %p259 = pneg %p36
      %p260 = scmp.lt.s32.totalorder %s18, 1
      %s261 = scalar_select %p260, %s18, 1
      %s262 = smul.addr %s261, 8
      %s263 = smul.addr %s262, 4
      %s264 = scalar_lea.vmem %s1, %s263
      %p265 = pneg %p65
      %p266 = pneg %p62
      %p267 = pneg %p86
      %p268 = pneg %p83
      %p269 = pneg %p107
      %p270 = pneg %p104
      %p271 = pneg %p128
      %p272 = pneg %p125
      %p273 = pneg %p149
      %p274 = pneg %p146
      %p275 = pneg %p170
      %p276 = pneg %p167
      %p277 = pneg %p196
      %p278 = pneg %p193
      %p279 = scmp.lt.s32.totalorder %s18, 1
      %s280 = scalar_select %p279, %s18, 1
      %s281 = smul.addr %s280, 8
      %s282 = smul.addr %s281, 8
      %s283 = scalar_lea.vmem %s7, %s282
      %p284 = scmp.lt.s32.totalorder %s18, 1
      %s285 = scalar_select %p284, %s18, 1
      %s286 = smul.addr %s285, 8
      %s287 = smul.addr %s286, 4
      %s288 = scalar_lea.vmem %s0, %s287
      %p289 = scmp.lt.s32.totalorder %s18, 1
      %s290 = scalar_select %p289, %s18, 1
      %s291 = smul.addr %s290, 8
      %s292 = smul.addr %s291, 4
      %s293 = scalar_lea.vmem %s1, %s292
      %p294 = scmp.lt.s32.totalorder %s18, 1
      %s295 = scalar_select %p294, %s18, 1
      %s296 = smul.addr %s295, 8
      %s297 = smul.addr %s296, 8
      %s298 = scalar_lea.vmem %s7, %s297
      %299 = vst [vmem:[#allocation2] sm:$0xff] 0.0
      %300 = vst [vmem:[#allocation2 + $0x48] sm:$0xff] 0.0
      %v301 = vld [vmem:[%s288] sm:$0xff]
      %v302 = vld [vmem:[%s288 + $0x8] sm:$0xff]
      %v303 = vld [vmem:[%s288 + $0x10] sm:$0xff]
      %v304 = vld [vmem:[%s288 + $0x18] sm:$0xff]
      %v305 = vld [vmem:[%s293] sm:$0xff]
      %v306 = vld [vmem:[%s293 + $0x8] sm:$0xff]
      %v307 = vld [vmem:[%s293 + $0x10] sm:$0xff]
      %v308 = vld [vmem:[%s293 + $0x18] sm:$0xff]
      %v309 = vlaneseq
      %v310 = vand.u32 %v309, 127
      %v311 = vadd.s32 %v310, 128
      %v312 = vadd.s32 %v310, 256
      %v313 = vadd.s32 %v310, 384
      %v314 = vadd.s32 %v310, 512
      %v315 = vadd.s32 %v310, 640
      %v316 = vadd.s32 %v310, 768
      %v317 = vadd.s32 %v310, 896
      %v318 = vcombine.low %v310, %v311
      %v319 = vcombine.low %v312, %v313
      %v320 = vcombine.low %v314, %v315
      %v321 = vcombine.low %v316, %v317
      %vm322 = vcmp.eq.s32.totalorder %v305, %v318
      %vm323 = vcmp.eq.s32.totalorder %v306, %v319
      %vm324 = vcmp.eq.s32.totalorder %v307, %v320
      %vm325 = vcmp.eq.s32.totalorder %v308, %v321
      %v326 = vsel %vm322, %v301, 0.0
      %v327 = vsel %vm323, %v302, 0.0
      %v328 = vsel %vm324, %v303, 0.0
      %v329 = vsel %vm325, %v304, 0.0
      %v334 = vcombine.high %v326, %v326
      %v335 = vcombine.high %v327, %v327
      %v336 = vcombine.high %v328, %v328
      %v337 = vcombine.high %v329, %v329
      %342 = vst [vmem:[#allocation2 + $0x8] sm:$0xf] %v326
      %343 = vst [vmem:[#allocation2 + $0x10] sm:$0xf] %v334
      %344 = vst [vmem:[#allocation2 + $0x18] sm:$0xf] %v327
      %345 = vst [vmem:[#allocation2 + $0x20] sm:$0xf] %v335
      %346 = vst [vmem:[#allocation2 + $0x28] sm:$0xf] %v328
      %347 = vst [vmem:[#allocation2 + $0x30] sm:$0xf] %v336
      %348 = vst [vmem:[#allocation2 + $0x38] sm:$0xf] %v329
      %349 = vst [vmem:[#allocation2 + $0x40] sm:$0xf] %v337
      %v350 = vld [vmem:[#allocation2] sm:$0xf]
      %v351 = vld [vmem:[#allocation2 + $0x8] sm:$0xf]
      %v352 = vld [vmem:[#allocation2 + $0x10] sm:$0xf]
      %v353 = vld [vmem:[#allocation2 + $0x18] sm:$0xf]
      %v354 = vld [vmem:[#allocation2 + $0x20] sm:$0xf]
      %v355 = vld [vmem:[#allocation2 + $0x28] sm:$0xf]
      %v356 = vld [vmem:[#allocation2 + $0x30] sm:$0xf]
      %v357 = vld [vmem:[#allocation2 + $0x38] sm:$0xf]
      %v358 = vld [vmem:[#allocation2 + $0x40] sm:$0xf]
      %v359 = vld [vmem:[%s2] sm:$0xff]
      %v361 = vlaneseq
      %v362 = vshrl.u32 %v361, 7
      %v363 = vsub.s32 0, %v362
      %v364 = vrot.slane %v359, %v363
      %v365 = vlaneseq
      %v366 = vshrl.u32 %v365, 7
      %v367 = vsub.s32 1, %v366
      %v368 = vrot.slane %v359, %v367
      %v369 = vlaneseq
      %v370 = vshrl.u32 %v369, 7
      %v371 = vsub.s32 2, %v370
      %v372 = vrot.slane %v359, %v371
      %v373 = vlaneseq
      %v374 = vshrl.u32 %v373, 7
      %v375 = vsub.s32 3, %v374
      %v376 = vrot.slane %v359, %v375
      %v377 = vlaneseq
      %v378 = vshrl.u32 %v377, 7
      %v379 = vsub.s32 4, %v378
      %v380 = vrot.slane %v359, %v379
      %v381 = vlaneseq
      %v382 = vshrl.u32 %v381, 7
      %v383 = vsub.s32 5, %v382
      %v384 = vrot.slane %v359, %v383
      %v385 = vlaneseq
      %v386 = vshrl.u32 %v385, 7
      %v387 = vsub.s32 6, %v386
      %v388 = vrot.slane %v359, %v387
      %v389 = vlaneseq
      %v390 = vshrl.u32 %v389, 7
      %v391 = vsub.s32 7, %v390
      %v392 = vrot.slane %v359, %v391
      %393 = vrot.lane.b32.xlu0 %v364, 95
      %v394 = vpop.permute.xlu0 %393
      %395 = vrot.lane.b32.xlu0 %v368, 95
      %v396 = vpop.permute.xlu0 %395
      %397 = vrot.lane.b32.xlu0 %v372, 95
      %v398 = vpop.permute.xlu0 %397
      %399 = vrot.lane.b32.xlu0 %v376, 95
      %v400 = vpop.permute.xlu0 %399
      %401 = vrot.lane.b32.xlu0 %v380, 95
      %v402 = vpop.permute.xlu0 %401
      %403 = vrot.lane.b32.xlu0 %v384, 95
      %v404 = vpop.permute.xlu0 %403
      %405 = vrot.lane.b32.xlu0 %v388, 95
      %v406 = vpop.permute.xlu0 %405
      %407 = vrot.lane.b32.xlu0 %v392, 95
      %v408 = vpop.permute.xlu0 %407
      %vm409 = vcmask 777216
      %v410 = vsel %vm409, %v394, %v396
      %v411 = vsel %vm409, %v396, %v398
      %v412 = vsel %vm409, %v398, %v400
      %v413 = vsel %vm409, %v400, %v402
      %v414 = vsel %vm409, %v402, %v404
      %v415 = vsel %vm409, %v404, %v406
      %v416 = vsel %vm409, %v406, %v408
      %v426 = vmul.f32 %v350, %v394
      %v427 = vmul.f32 %v351, %v410
      %v428 = vmul.f32 %v352, %v411
      %v429 = vmul.f32 %v353, %v412
      %v430 = vmul.f32 %v354, %v413
      %v431 = vmul.f32 %v355, %v414
      %v432 = vmul.f32 %v356, %v415
      %v433 = vmul.f32 %v357, %v416
      %v434 = vmul.f32 %v358, %v408
      %444 = vrot.lane.b32.xlu0 %v426, 33
      %v445 = vpop.permute.xlu0 %444
      %446 = vrot.lane.b32.xlu0 %v427, 33
      %v447 = vpop.permute.xlu0 %446
      %448 = vrot.lane.b32.xlu0 %v428, 33
      %v449 = vpop.permute.xlu0 %448
      %450 = vrot.lane.b32.xlu0 %v429, 33
      %v451 = vpop.permute.xlu0 %450
      %452 = vrot.lane.b32.xlu0 %v430, 33
      %v453 = vpop.permute.xlu0 %452
      %454 = vrot.lane.b32.xlu0 %v431, 33
      %v455 = vpop.permute.xlu0 %454
      %456 = vrot.lane.b32.xlu0 %v432, 33
      %v457 = vpop.permute.xlu0 %456
      %458 = vrot.lane.b32.xlu0 %v433, 33
      %v459 = vpop.permute.xlu0 %458
      %460 = vrot.lane.b32.xlu0 %v434, 33
      %v461 = vpop.permute.xlu0 %460
      %vm462 = vcmask 269312
      %v463 = vsel %vm462, %v445, %v447
      %v464 = vsel %vm462, %v447, %v449
      %v465 = vsel %vm462, %v449, %v451
      %v466 = vsel %vm462, %v451, %v453
      %v467 = vsel %vm462, %v453, %v455
      %v468 = vsel %vm462, %v455, %v457
      %v469 = vsel %vm462, %v457, %v459
      %v470 = vsel %vm462, %v459, %v461
      %479 = vst [vmem:[#allocation3] sm:$0xf] %v463
      %480 = vst [vmem:[#allocation3 + $0x8] sm:$0xf] %v464
      %481 = vst [vmem:[#allocation3 + $0x10] sm:$0xf] %v465
      %482 = vst [vmem:[#allocation3 + $0x18] sm:$0xf] %v466
      %483 = vst [vmem:[#allocation3 + $0x20] sm:$0xf] %v467
      %484 = vst [vmem:[#allocation3 + $0x28] sm:$0xf] %v468
      %485 = vst [vmem:[#allocation3 + $0x30] sm:$0xf] %v469
      %486 = vst [vmem:[#allocation3 + $0x38] sm:$0xf] %v470
      %v487 = vld [vmem:[#allocation2] sm:$0xf]
      %v488 = vld [vmem:[#allocation2 + $0x8] sm:$0xf]
      %v489 = vld [vmem:[#allocation2 + $0x10] sm:$0xf]
      %v490 = vld [vmem:[#allocation2 + $0x18] sm:$0xf]
      %v491 = vld [vmem:[#allocation2 + $0x20] sm:$0xf]
      %v492 = vld [vmem:[#allocation2 + $0x28] sm:$0xf]
      %v493 = vld [vmem:[#allocation2 + $0x30] sm:$0xf]
      %v494 = vld [vmem:[#allocation2 + $0x38] sm:$0xf]
      %v495 = vld [vmem:[#allocation2 + $0x40] sm:$0xf]
      %v505 = vrot.slane %v487, 4
      %v506 = vrot.slane %v488, 4
      %v507 = vrot.slane %v489, 4
      %v508 = vrot.slane %v490, 4
      %v509 = vrot.slane %v491, 4
      %v510 = vrot.slane %v492, 4
      %v511 = vrot.slane %v493, 4
      %v512 = vrot.slane %v494, 4
      %v513 = vrot.slane %v495, 4
      %514 = vrot.lane.b32.xlu0 %v505, 32
      %v515 = vpop.permute.xlu0 %514
      %516 = vrot.lane.b32.xlu0 %v506, 32
      %v517 = vpop.permute.xlu0 %516
      %518 = vrot.lane.b32.xlu0 %v507, 32
      %v519 = vpop.permute.xlu0 %518
      %520 = vrot.lane.b32.xlu0 %v508, 32
      %v521 = vpop.permute.xlu0 %520
      %522 = vrot.lane.b32.xlu0 %v509, 32
      %v523 = vpop.permute.xlu0 %522
      %524 = vrot.lane.b32.xlu0 %v510, 32
      %v525 = vpop.permute.xlu0 %524
      %526 = vrot.lane.b32.xlu0 %v511, 32
      %v527 = vpop.permute.xlu0 %526
      %528 = vrot.lane.b32.xlu0 %v512, 32
      %v529 = vpop.permute.xlu0 %528
      %530 = vrot.lane.b32.xlu0 %v513, 32
      %v531 = vpop.permute.xlu0 %530
      %vm532 = vcmask 261120
      %v533 = vsel %vm532, %v515, %v517
      %v534 = vsel %vm532, %v517, %v519
      %v535 = vsel %vm532, %v519, %v521
      %v536 = vsel %vm532, %v521, %v523
      %v537 = vsel %vm532, %v523, %v525
      %v538 = vsel %vm532, %v525, %v527
      %v539 = vsel %vm532, %v527, %v529
      %v540 = vsel %vm532, %v529, %v531
      %549 = vst [vmem:[#allocation3] sm:$0xf0] %v533
      %550 = vst [vmem:[#allocation3 + $0x8] sm:$0xf0] %v534
      %551 = vst [vmem:[#allocation3 + $0x10] sm:$0xf0] %v535
      %552 = vst [vmem:[#allocation3 + $0x18] sm:$0xf0] %v536
      %553 = vst [vmem:[#allocation3 + $0x20] sm:$0xf0] %v537
      %554 = vst [vmem:[#allocation3 + $0x28] sm:$0xf0] %v538
      %555 = vst [vmem:[#allocation3 + $0x30] sm:$0xf0] %v539
      %556 = vst [vmem:[#allocation3 + $0x38] sm:$0xf0] %v540
      %v557 = vld [vmem:[#allocation2] sm:$0xf]
      %v558 = vld [vmem:[#allocation2 + $0x8] sm:$0xf]
      %v559 = vld [vmem:[#allocation2 + $0x10] sm:$0xf]
      %v560 = vld [vmem:[#allocation2 + $0x18] sm:$0xf]
      %v561 = vld [vmem:[#allocation2 + $0x20] sm:$0xf]
      %v562 = vld [vmem:[#allocation2 + $0x28] sm:$0xf]
      %v563 = vld [vmem:[#allocation2 + $0x30] sm:$0xf]
      %v564 = vld [vmem:[#allocation2 + $0x38] sm:$0xf]
      %v565 = vld [vmem:[#allocation2 + $0x40] sm:$0xf]
      %s566 = scalar_lea.vmem %s2, 16
      %v567 = vld [vmem:[%s566] sm:$0xff]
      %v569 = vlaneseq
      %v570 = vshrl.u32 %v569, 7
      %v571 = vsub.s32 0, %v570
      %v572 = vrot.slane %v567, %v571
      %v573 = vlaneseq
      %v574 = vshrl.u32 %v573, 7
      %v575 = vsub.s32 1, %v574
      %v576 = vrot.slane %v567, %v575
      %v577 = vlaneseq
      %v578 = vshrl.u32 %v577, 7
      %v579 = vsub.s32 2, %v578
      %v580 = vrot.slane %v567, %v579
      %v581 = vlaneseq
      %v582 = vshrl.u32 %v581, 7
      %v583 = vsub.s32 3, %v582
      %v584 = vrot.slane %v567, %v583
      %v585 = vlaneseq
      %v586 = vshrl.u32 %v585, 7
      %v587 = vsub.s32 4, %v586
      %v588 = vrot.slane %v567, %v587
      %v589 = vlaneseq
      %v590 = vshrl.u32 %v589, 7
      %v591 = vsub.s32 5, %v590
      %v592 = vrot.slane %v567, %v591
      %v593 = vlaneseq
      %v594 = vshrl.u32 %v593, 7
      %v595 = vsub.s32 6, %v594
      %v596 = vrot.slane %v567, %v595
      %v597 = vlaneseq
      %v598 = vshrl.u32 %v597, 7
      %v599 = vsub.s32 7, %v598
      %v600 = vrot.slane %v567, %v599
      %601 = vrot.lane.b32.xlu0 %v572, 97
      %v602 = vpop.permute.xlu0 %601
      %603 = vrot.lane.b32.xlu0 %v576, 97
      %v604 = vpop.permute.xlu0 %603
      %605 = vrot.lane.b32.xlu0 %v580, 97
      %v606 = vpop.permute.xlu0 %605
      %607 = vrot.lane.b32.xlu0 %v584, 97
      %v608 = vpop.permute.xlu0 %607
      %609 = vrot.lane.b32.xlu0 %v588, 97
      %v610 = vpop.permute.xlu0 %609
      %611 = vrot.lane.b32.xlu0 %v592, 97
      %v612 = vpop.permute.xlu0 %611
      %613 = vrot.lane.b32.xlu0 %v596, 97
      %v614 = vpop.permute.xlu0 %613
      %615 = vrot.lane.b32.xlu0 %v600, 97
      %v616 = vpop.permute.xlu0 %615
      %vm617 = vcmask 793600
      %v618 = vsel %vm617, %v602, %v604
      %v619 = vsel %vm617, %v604, %v606
      %v620 = vsel %vm617, %v606, %v608
      %v621 = vsel %vm617, %v608, %v610
      %v622 = vsel %vm617, %v610, %v612
      %v623 = vsel %vm617, %v612, %v614
      %v624 = vsel %vm617, %v614, %v616
      %v634 = vmul.f32 %v557, %v602
      %v635 = vmul.f32 %v558, %v618
      %v636 = vmul.f32 %v559, %v619
      %v637 = vmul.f32 %v560, %v620
      %v638 = vmul.f32 %v561, %v621
      %v639 = vmul.f32 %v562, %v622
      %v640 = vmul.f32 %v563, %v623
      %v641 = vmul.f32 %v564, %v624
      %v642 = vmul.f32 %v565, %v616
      %652 = vrot.lane.b32.xlu0 %v634, 31
      %v653 = vpop.permute.xlu0 %652
      %654 = vrot.lane.b32.xlu0 %v635, 31
      %v655 = vpop.permute.xlu0 %654
      %656 = vrot.lane.b32.xlu0 %v636, 31
      %v657 = vpop.permute.xlu0 %656
      %658 = vrot.lane.b32.xlu0 %v637, 31
      %v659 = vpop.permute.xlu0 %658
      %660 = vrot.lane.b32.xlu0 %v638, 31
      %v661 = vpop.permute.xlu0 %660
      %662 = vrot.lane.b32.xlu0 %v639, 31
      %v663 = vpop.permute.xlu0 %662
      %664 = vrot.lane.b32.xlu0 %v640, 31
      %v665 = vpop.permute.xlu0 %664
      %666 = vrot.lane.b32.xlu0 %v641, 31
      %v667 = vpop.permute.xlu0 %666
      %668 = vrot.lane.b32.xlu0 %v642, 31
      %v669 = vpop.permute.xlu0 %668
      %vm670 = vcmask 252928
      %v671 = vsel %vm670, %v653, %v655
      %v672 = vsel %vm670, %v655, %v657
      %v673 = vsel %vm670, %v657, %v659
      %v674 = vsel %vm670, %v659, %v661
      %v675 = vsel %vm670, %v661, %v663
      %v676 = vsel %vm670, %v663, %v665
      %v677 = vsel %vm670, %v665, %v667
      %v678 = vsel %vm670, %v667, %v669
      %687 = vst [vmem:[#allocation3 + $0x40] sm:$0xf] %v671
      %688 = vst [vmem:[#allocation3 + $0x48] sm:$0xf] %v672
      %689 = vst [vmem:[#allocation3 + $0x50] sm:$0xf] %v673
      %690 = vst [vmem:[#allocation3 + $0x58] sm:$0xf] %v674
      %691 = vst [vmem:[#allocation3 + $0x60] sm:$0xf] %v675
      %692 = vst [vmem:[#allocation3 + $0x68] sm:$0xf] %v676
      %693 = vst [vmem:[#allocation3 + $0x70] sm:$0xf] %v677
      %694 = vst [vmem:[#allocation3 + $0x78] sm:$0xf] %v678
      %v695 = vld [vmem:[#allocation2] sm:$0xf]
      %v696 = vld [vmem:[#allocation2 + $0x8] sm:$0xf]
      %v697 = vld [vmem:[#allocation2 + $0x10] sm:$0xf]
      %v698 = vld [vmem:[#allocation2 + $0x18] sm:$0xf]
      %v699 = vld [vmem:[#allocation2 + $0x20] sm:$0xf]
      %v700 = vld [vmem:[#allocation2 + $0x28] sm:$0xf]
      %v701 = vld [vmem:[#allocation2 + $0x30] sm:$0xf]
      %v702 = vld [vmem:[#allocation2 + $0x38] sm:$0xf]
      %v703 = vld [vmem:[#allocation2 + $0x40] sm:$0xf]
      %v704 = vld [vmem:[%s2] sm:$0xff]
      %v706 = vlaneseq
      %v707 = vshrl.u32 %v706, 7
      %v708 = vsub.s32 0, %v707
      %v709 = vrot.slane %v704, %v708
      %v710 = vlaneseq
      %v711 = vshrl.u32 %v710, 7
      %v712 = vsub.s32 1, %v711
      %v713 = vrot.slane %v704, %v712
      %v714 = vlaneseq
      %v715 = vshrl.u32 %v714, 7
      %v716 = vsub.s32 2, %v715
      %v717 = vrot.slane %v704, %v716
      %v718 = vlaneseq
      %v719 = vshrl.u32 %v718, 7
      %v720 = vsub.s32 3, %v719
      %v721 = vrot.slane %v704, %v720
      %v722 = vlaneseq
      %v723 = vshrl.u32 %v722, 7
      %v724 = vsub.s32 4, %v723
      %v725 = vrot.slane %v704, %v724
      %v726 = vlaneseq
      %v727 = vshrl.u32 %v726, 7
      %v728 = vsub.s32 5, %v727
      %v729 = vrot.slane %v704, %v728
      %v730 = vlaneseq
      %v731 = vshrl.u32 %v730, 7
      %v732 = vsub.s32 6, %v731
      %v733 = vrot.slane %v704, %v732
      %v734 = vlaneseq
      %v735 = vshrl.u32 %v734, 7
      %v736 = vsub.s32 7, %v735
      %v737 = vrot.slane %v704, %v736
      %738 = vrot.lane.b32.xlu0 %v709, 127
      %v739 = vpop.permute.xlu0 %738
      %740 = vrot.lane.b32.xlu0 %v713, 127
      %v741 = vpop.permute.xlu0 %740
      %742 = vrot.lane.b32.xlu0 %v717, 127
      %v743 = vpop.permute.xlu0 %742
      %744 = vrot.lane.b32.xlu0 %v721, 127
      %v745 = vpop.permute.xlu0 %744
      %746 = vrot.lane.b32.xlu0 %v725, 127
      %v747 = vpop.permute.xlu0 %746
      %748 = vrot.lane.b32.xlu0 %v729, 127
      %v749 = vpop.permute.xlu0 %748
      %750 = vrot.lane.b32.xlu0 %v733, 127
      %v751 = vpop.permute.xlu0 %750
      %752 = vrot.lane.b32.xlu0 %v737, 127
      %v753 = vpop.permute.xlu0 %752
      %vm754 = vcmask 1039360
      %v755 = vsel %vm754, %v739, %v741
      %v756 = vsel %vm754, %v741, %v743
      %v757 = vsel %vm754, %v743, %v745
      %v758 = vsel %vm754, %v745, %v747
      %v759 = vsel %vm754, %v747, %v749
      %v760 = vsel %vm754, %v749, %v751
      %v761 = vsel %vm754, %v751, %v753
      %v771 = vmul.f32 %v695, %v739
      %v772 = vmul.f32 %v696, %v755
      %v773 = vmul.f32 %v697, %v756
      %v774 = vmul.f32 %v698, %v757
      %v775 = vmul.f32 %v699, %v758
      %v776 = vmul.f32 %v700, %v759
      %v777 = vmul.f32 %v701, %v760
      %v778 = vmul.f32 %v702, %v761
      %v779 = vmul.f32 %v703, %v753
      %v789 = vrot.slane %v771, 4
      %v790 = vrot.slane %v772, 4
      %v791 = vrot.slane %v773, 4
      %v792 = vrot.slane %v774, 4
      %v793 = vrot.slane %v775, 4
      %v794 = vrot.slane %v776, 4
      %v795 = vrot.slane %v777, 4
      %v796 = vrot.slane %v778, 4
      %v797 = vrot.slane %v779, 4
      %798 = vrot.lane.b32.xlu0 %v789, 1
      %v799 = vpop.permute.xlu0 %798
      %800 = vrot.lane.b32.xlu0 %v790, 1
      %v801 = vpop.permute.xlu0 %800
      %802 = vrot.lane.b32.xlu0 %v791, 1
      %v803 = vpop.permute.xlu0 %802
      %804 = vrot.lane.b32.xlu0 %v792, 1
      %v805 = vpop.permute.xlu0 %804
      %806 = vrot.lane.b32.xlu0 %v793, 1
      %v807 = vpop.permute.xlu0 %806
      %808 = vrot.lane.b32.xlu0 %v794, 1
      %v809 = vpop.permute.xlu0 %808
      %810 = vrot.lane.b32.xlu0 %v795, 1
      %v811 = vpop.permute.xlu0 %810
      %812 = vrot.lane.b32.xlu0 %v796, 1
      %v813 = vpop.permute.xlu0 %812
      %814 = vrot.lane.b32.xlu0 %v797, 1
      %v815 = vpop.permute.xlu0 %814
      %vm816 = vcmask 7168
      %v817 = vsel %vm816, %v799, %v801
      %v818 = vsel %vm816, %v801, %v803
      %v819 = vsel %vm816, %v803, %v805
      %v820 = vsel %vm816, %v805, %v807
      %v821 = vsel %vm816, %v807, %v809
      %v822 = vsel %vm816, %v809, %v811
      %v823 = vsel %vm816, %v811, %v813
      %v824 = vsel %vm816, %v813, %v815
      %833 = vst [vmem:[#allocation3 + $0x40] sm:$0xf0] %v817
      %834 = vst [vmem:[#allocation3 + $0x48] sm:$0xf0] %v818
      %835 = vst [vmem:[#allocation3 + $0x50] sm:$0xf0] %v819
      %836 = vst [vmem:[#allocation3 + $0x58] sm:$0xf0] %v820
      %837 = vst [vmem:[#allocation3 + $0x60] sm:$0xf0] %v821
      %838 = vst [vmem:[#allocation3 + $0x68] sm:$0xf0] %v822
      %839 = vst [vmem:[#allocation3 + $0x70] sm:$0xf0] %v823
      %840 = vst [vmem:[#allocation3 + $0x78] sm:$0xf0] %v824
      %v841 = vld [vmem:[#allocation2 + $0x8] sm:$0xf]
      %v842 = vld [vmem:[#allocation2 + $0x10] sm:$0xf]
      %v843 = vld [vmem:[#allocation2 + $0x18] sm:$0xf]
      %v844 = vld [vmem:[#allocation2 + $0x20] sm:$0xf]
      %v845 = vld [vmem:[#allocation2 + $0x28] sm:$0xf]
      %v846 = vld [vmem:[#allocation2 + $0x30] sm:$0xf]
      %v847 = vld [vmem:[#allocation2 + $0x38] sm:$0xf]
      %v848 = vld [vmem:[#allocation2 + $0x40] sm:$0xf]
      %849 = vst [vmem:[#allocation3 + $0x80] sm:$0xf] %v841
      %850 = vst [vmem:[#allocation3 + $0x88] sm:$0xf] %v842
      %851 = vst [vmem:[#allocation3 + $0x90] sm:$0xf] %v843
      %852 = vst [vmem:[#allocation3 + $0x98] sm:$0xf] %v844
      %853 = vst [vmem:[#allocation3 + $0xa0] sm:$0xf] %v845
      %854 = vst [vmem:[#allocation3 + $0xa8] sm:$0xf] %v846
      %855 = vst [vmem:[#allocation3 + $0xb0] sm:$0xf] %v847
      %856 = vst [vmem:[#allocation3 + $0xb8] sm:$0xf] %v848
      %v857 = vld [vmem:[#allocation2 + $0x8] sm:$0xf]
      %v858 = vld [vmem:[#allocation2 + $0x10] sm:$0xf]
      %v859 = vld [vmem:[#allocation2 + $0x18] sm:$0xf]
      %v860 = vld [vmem:[#allocation2 + $0x20] sm:$0xf]
      %v861 = vld [vmem:[#allocation2 + $0x28] sm:$0xf]
      %v862 = vld [vmem:[#allocation2 + $0x30] sm:$0xf]
      %v863 = vld [vmem:[#allocation2 + $0x38] sm:$0xf]
      %v864 = vld [vmem:[#allocation2 + $0x40] sm:$0xf]
      %v865 = vld [vmem:[#allocation2 + $0x48] sm:$0xf]
      %v866 = vld [vmem:[%s566] sm:$0xff]
      %v868 = vlaneseq
      %v869 = vshrl.u32 %v868, 7
      %v870 = vsub.s32 0, %v869
      %v871 = vrot.slane %v866, %v870
      %v872 = vlaneseq
      %v873 = vshrl.u32 %v872, 7
      %v874 = vsub.s32 1, %v873
      %v875 = vrot.slane %v866, %v874
      %v876 = vlaneseq
      %v877 = vshrl.u32 %v876, 7
      %v878 = vsub.s32 2, %v877
      %v879 = vrot.slane %v866, %v878
      %v880 = vlaneseq
      %v881 = vshrl.u32 %v880, 7
      %v882 = vsub.s32 3, %v881
      %v883 = vrot.slane %v866, %v882
      %v884 = vlaneseq
      %v885 = vshrl.u32 %v884, 7
      %v886 = vsub.s32 4, %v885
      %v887 = vrot.slane %v866, %v886
      %v888 = vlaneseq
      %v889 = vshrl.u32 %v888, 7
      %v890 = vsub.s32 5, %v889
      %v891 = vrot.slane %v866, %v890
      %v892 = vlaneseq
      %v893 = vshrl.u32 %v892, 7
      %v894 = vsub.s32 6, %v893
      %v895 = vrot.slane %v866, %v894
      %v896 = vlaneseq
      %v897 = vshrl.u32 %v896, 7
      %v898 = vsub.s32 7, %v897
      %v899 = vrot.slane %v866, %v898
      %900 = vrot.lane.b32.xlu0 %v871, 1
      %v901 = vpop.permute.xlu0 %900
      %902 = vrot.lane.b32.xlu0 %v875, 1
      %v903 = vpop.permute.xlu0 %902
      %904 = vrot.lane.b32.xlu0 %v879, 1
      %v905 = vpop.permute.xlu0 %904
      %906 = vrot.lane.b32.xlu0 %v883, 1
      %v907 = vpop.permute.xlu0 %906
      %908 = vrot.lane.b32.xlu0 %v887, 1
      %v909 = vpop.permute.xlu0 %908
      %910 = vrot.lane.b32.xlu0 %v891, 1
      %v911 = vpop.permute.xlu0 %910
      %912 = vrot.lane.b32.xlu0 %v895, 1
      %v913 = vpop.permute.xlu0 %912
      %914 = vrot.lane.b32.xlu0 %v899, 1
      %v915 = vpop.permute.xlu0 %914
      %v916 = vsel %vm816, %v901, %v903
      %v917 = vsel %vm816, %v903, %v905
      %v918 = vsel %vm816, %v905, %v907
      %v919 = vsel %vm816, %v907, %v909
      %v920 = vsel %vm816, %v909, %v911
      %v921 = vsel %vm816, %v911, %v913
      %v922 = vsel %vm816, %v913, %v915
      %v932 = vmul.f32 %v857, %v901
      %v933 = vmul.f32 %v858, %v916
      %v934 = vmul.f32 %v859, %v917
      %v935 = vmul.f32 %v860, %v918
      %v936 = vmul.f32 %v861, %v919
      %v937 = vmul.f32 %v862, %v920
      %v938 = vmul.f32 %v863, %v921
      %v939 = vmul.f32 %v864, %v922
      %v940 = vmul.f32 %v865, %v915
      %v950 = vrot.slane %v932, 4
      %v951 = vrot.slane %v933, 4
      %v952 = vrot.slane %v934, 4
      %v953 = vrot.slane %v935, 4
      %v954 = vrot.slane %v936, 4
      %v955 = vrot.slane %v937, 4
      %v956 = vrot.slane %v938, 4
      %v957 = vrot.slane %v939, 4
      %v958 = vrot.slane %v940, 4
      %959 = vrot.lane.b32.xlu0 %v950, 127
      %v960 = vpop.permute.xlu0 %959
      %961 = vrot.lane.b32.xlu0 %v951, 127
      %v962 = vpop.permute.xlu0 %961
      %963 = vrot.lane.b32.xlu0 %v952, 127
      %v964 = vpop.permute.xlu0 %963
      %965 = vrot.lane.b32.xlu0 %v953, 127
      %v966 = vpop.permute.xlu0 %965
      %967 = vrot.lane.b32.xlu0 %v954, 127
      %v968 = vpop.permute.xlu0 %967
      %969 = vrot.lane.b32.xlu0 %v955, 127
      %v970 = vpop.permute.xlu0 %969
      %971 = vrot.lane.b32.xlu0 %v956, 127
      %v972 = vpop.permute.xlu0 %971
      %973 = vrot.lane.b32.xlu0 %v957, 127
      %v974 = vpop.permute.xlu0 %973
      %975 = vrot.lane.b32.xlu0 %v958, 127
      %v976 = vpop.permute.xlu0 %975
      %v977 = vsel %vm754, %v960, %v962
      %v978 = vsel %vm754, %v962, %v964
      %v979 = vsel %vm754, %v964, %v966
      %v980 = vsel %vm754, %v966, %v968
      %v981 = vsel %vm754, %v968, %v970
      %v982 = vsel %vm754, %v970, %v972
      %v983 = vsel %vm754, %v972, %v974
      %v984 = vsel %vm754, %v974, %v976
      %993 = vst [vmem:[#allocation3 + $0x80] sm:$0xf0] %v977
      %994 = vst [vmem:[#allocation3 + $0x88] sm:$0xf0] %v978
      %995 = vst [vmem:[#allocation3 + $0x90] sm:$0xf0] %v979
      %996 = vst [vmem:[#allocation3 + $0x98] sm:$0xf0] %v980
      %997 = vst [vmem:[#allocation3 + $0xa0] sm:$0xf0] %v981
      %998 = vst [vmem:[#allocation3 + $0xa8] sm:$0xf0] %v982
      %999 = vst [vmem:[#allocation3 + $0xb0] sm:$0xf0] %v983
      %1000 = vst [vmem:[#allocation3 + $0xb8] sm:$0xf0] %v984
      %v1001 = vld [vmem:[#allocation2 + $0x8] sm:$0xf]
      %v1002 = vld [vmem:[#allocation2 + $0x10] sm:$0xf]
      %v1003 = vld [vmem:[#allocation2 + $0x18] sm:$0xf]
      %v1004 = vld [vmem:[#allocation2 + $0x20] sm:$0xf]
      %v1005 = vld [vmem:[#allocation2 + $0x28] sm:$0xf]
      %v1006 = vld [vmem:[#allocation2 + $0x30] sm:$0xf]
      %v1007 = vld [vmem:[#allocation2 + $0x38] sm:$0xf]
      %v1008 = vld [vmem:[#allocation2 + $0x40] sm:$0xf]
      %v1009 = vld [vmem:[#allocation2 + $0x48] sm:$0xf]
      %v1010 = vld [vmem:[%s2] sm:$0xff]
      %v1012 = vlaneseq
      %v1013 = vshrl.u32 %v1012, 7
      %v1014 = vsub.s32 0, %v1013
      %v1015 = vrot.slane %v1010, %v1014
      %v1016 = vlaneseq
      %v1017 = vshrl.u32 %v1016, 7
      %v1018 = vsub.s32 1, %v1017
      %v1019 = vrot.slane %v1010, %v1018
      %v1020 = vlaneseq
      %v1021 = vshrl.u32 %v1020, 7
      %v1022 = vsub.s32 2, %v1021
      %v1023 = vrot.slane %v1010, %v1022
      %v1024 = vlaneseq
      %v1025 = vshrl.u32 %v1024, 7
      %v1026 = vsub.s32 3, %v1025
      %v1027 = vrot.slane %v1010, %v1026
      %v1028 = vlaneseq
      %v1029 = vshrl.u32 %v1028, 7
      %v1030 = vsub.s32 4, %v1029
      %v1031 = vrot.slane %v1010, %v1030
      %v1032 = vlaneseq
      %v1033 = vshrl.u32 %v1032, 7
      %v1034 = vsub.s32 5, %v1033
      %v1035 = vrot.slane %v1010, %v1034
      %v1036 = vlaneseq
      %v1037 = vshrl.u32 %v1036, 7
      %v1038 = vsub.s32 6, %v1037
      %v1039 = vrot.slane %v1010, %v1038
      %v1040 = vlaneseq
      %v1041 = vshrl.u32 %v1040, 7
      %v1042 = vsub.s32 7, %v1041
      %v1043 = vrot.slane %v1010, %v1042
      %1044 = vrot.lane.b32.xlu0 %v1015, 31
      %v1045 = vpop.permute.xlu0 %1044
      %1046 = vrot.lane.b32.xlu0 %v1019, 31
      %v1047 = vpop.permute.xlu0 %1046
      %1048 = vrot.lane.b32.xlu0 %v1023, 31
      %v1049 = vpop.permute.xlu0 %1048
      %1050 = vrot.lane.b32.xlu0 %v1027, 31
      %v1051 = vpop.permute.xlu0 %1050
      %1052 = vrot.lane.b32.xlu0 %v1031, 31
      %v1053 = vpop.permute.xlu0 %1052
      %1054 = vrot.lane.b32.xlu0 %v1035, 31
      %v1055 = vpop.permute.xlu0 %1054
      %1056 = vrot.lane.b32.xlu0 %v1039, 31
      %v1057 = vpop.permute.xlu0 %1056
      %1058 = vrot.lane.b32.xlu0 %v1043, 31
      %v1059 = vpop.permute.xlu0 %1058
      %v1060 = vsel %vm670, %v1045, %v1047
      %v1061 = vsel %vm670, %v1047, %v1049
      %v1062 = vsel %vm670, %v1049, %v1051
      %v1063 = vsel %vm670, %v1051, %v1053
      %v1064 = vsel %vm670, %v1053, %v1055
      %v1065 = vsel %vm670, %v1055, %v1057
      %v1066 = vsel %vm670, %v1057, %v1059
      %v1076 = vmul.f32 %v1001, %v1045
      %v1077 = vmul.f32 %v1002, %v1060
      %v1078 = vmul.f32 %v1003, %v1061
      %v1079 = vmul.f32 %v1004, %v1062
      %v1080 = vmul.f32 %v1005, %v1063
      %v1081 = vmul.f32 %v1006, %v1064
      %v1082 = vmul.f32 %v1007, %v1065
      %v1083 = vmul.f32 %v1008, %v1066
      %v1084 = vmul.f32 %v1009, %v1059
      %1094 = vrot.lane.b32.xlu0 %v1076, 97
      %v1095 = vpop.permute.xlu0 %1094
      %1096 = vrot.lane.b32.xlu0 %v1077, 97
      %v1097 = vpop.permute.xlu0 %1096
      %1098 = vrot.lane.b32.xlu0 %v1078, 97
      %v1099 = vpop.permute.xlu0 %1098
      %1100 = vrot.lane.b32.xlu0 %v1079, 97
      %v1101 = vpop.permute.xlu0 %1100
      %1102 = vrot.lane.b32.xlu0 %v1080, 97
      %v1103 = vpop.permute.xlu0 %1102
      %1104 = vrot.lane.b32.xlu0 %v1081, 97
      %v1105 = vpop.permute.xlu0 %1104
      %1106 = vrot.lane.b32.xlu0 %v1082, 97
      %v1107 = vpop.permute.xlu0 %1106
      %1108 = vrot.lane.b32.xlu0 %v1083, 97
      %v1109 = vpop.permute.xlu0 %1108
      %1110 = vrot.lane.b32.xlu0 %v1084, 97
      %v1111 = vpop.permute.xlu0 %1110
      %v1112 = vsel %vm617, %v1095, %v1097
      %v1113 = vsel %vm617, %v1097, %v1099
      %v1114 = vsel %vm617, %v1099, %v1101
      %v1115 = vsel %vm617, %v1101, %v1103
      %v1116 = vsel %vm617, %v1103, %v1105
      %v1117 = vsel %vm617, %v1105, %v1107
      %v1118 = vsel %vm617, %v1107, %v1109
      %v1119 = vsel %vm617, %v1109, %v1111
      %1128 = vst [vmem:[#allocation3 + $0xc0] sm:$0xf] %v1112
      %1129 = vst [vmem:[#allocation3 + $0xc8] sm:$0xf] %v1113
      %1130 = vst [vmem:[#allocation3 + $0xd0] sm:$0xf] %v1114
      %1131 = vst [vmem:[#allocation3 + $0xd8] sm:$0xf] %v1115
      %1132 = vst [vmem:[#allocation3 + $0xe0] sm:$0xf] %v1116
      %1133 = vst [vmem:[#allocation3 + $0xe8] sm:$0xf] %v1117
      %1134 = vst [vmem:[#allocation3 + $0xf0] sm:$0xf] %v1118
      %1135 = vst [vmem:[#allocation3 + $0xf8] sm:$0xf] %v1119
      %v1136 = vld [vmem:[#allocation2 + $0x8] sm:$0xf]
      %v1137 = vld [vmem:[#allocation2 + $0x10] sm:$0xf]
      %v1138 = vld [vmem:[#allocation2 + $0x18] sm:$0xf]
      %v1139 = vld [vmem:[#allocation2 + $0x20] sm:$0xf]
      %v1140 = vld [vmem:[#allocation2 + $0x28] sm:$0xf]
      %v1141 = vld [vmem:[#allocation2 + $0x30] sm:$0xf]
      %v1142 = vld [vmem:[#allocation2 + $0x38] sm:$0xf]
      %v1143 = vld [vmem:[#allocation2 + $0x40] sm:$0xf]
      %v1144 = vld [vmem:[#allocation2 + $0x48] sm:$0xf]
      %v1154 = vrot.slane %v1136, 4
      %v1155 = vrot.slane %v1137, 4
      %v1156 = vrot.slane %v1138, 4
      %v1157 = vrot.slane %v1139, 4
      %v1158 = vrot.slane %v1140, 4
      %v1159 = vrot.slane %v1141, 4
      %v1160 = vrot.slane %v1142, 4
      %v1161 = vrot.slane %v1143, 4
      %v1162 = vrot.slane %v1144, 4
      %1163 = vrot.lane.b32.xlu0 %v1154, 96
      %v1164 = vpop.permute.xlu0 %1163
      %1165 = vrot.lane.b32.xlu0 %v1155, 96
      %v1166 = vpop.permute.xlu0 %1165
      %1167 = vrot.lane.b32.xlu0 %v1156, 96
      %v1168 = vpop.permute.xlu0 %1167
      %1169 = vrot.lane.b32.xlu0 %v1157, 96
      %v1170 = vpop.permute.xlu0 %1169
      %1171 = vrot.lane.b32.xlu0 %v1158, 96
      %v1172 = vpop.permute.xlu0 %1171
      %1173 = vrot.lane.b32.xlu0 %v1159, 96
      %v1174 = vpop.permute.xlu0 %1173
      %1175 = vrot.lane.b32.xlu0 %v1160, 96
      %v1176 = vpop.permute.xlu0 %1175
      %1177 = vrot.lane.b32.xlu0 %v1161, 96
      %v1178 = vpop.permute.xlu0 %1177
      %1179 = vrot.lane.b32.xlu0 %v1162, 96
      %v1180 = vpop.permute.xlu0 %1179
      %vm1181 = vcmask 785408
      %v1182 = vsel %vm1181, %v1164, %v1166
      %v1183 = vsel %vm1181, %v1166, %v1168
      %v1184 = vsel %vm1181, %v1168, %v1170
      %v1185 = vsel %vm1181, %v1170, %v1172
      %v1186 = vsel %vm1181, %v1172, %v1174
      %v1187 = vsel %vm1181, %v1174, %v1176
      %v1188 = vsel %vm1181, %v1176, %v1178
      %v1189 = vsel %vm1181, %v1178, %v1180
      %1198 = vst [vmem:[#allocation3 + $0xc0] sm:$0xf0] %v1182
      %1199 = vst [vmem:[#allocation3 + $0xc8] sm:$0xf0] %v1183
      %1200 = vst [vmem:[#allocation3 + $0xd0] sm:$0xf0] %v1184
      %1201 = vst [vmem:[#allocation3 + $0xd8] sm:$0xf0] %v1185
      %1202 = vst [vmem:[#allocation3 + $0xe0] sm:$0xf0] %v1186
      %1203 = vst [vmem:[#allocation3 + $0xe8] sm:$0xf0] %v1187
      %1204 = vst [vmem:[#allocation3 + $0xf0] sm:$0xf0] %v1188
      %1205 = vst [vmem:[#allocation3 + $0xf8] sm:$0xf0] %v1189
      %v1206 = vld [vmem:[#allocation2 + $0x8] sm:$0xf]
      %v1207 = vld [vmem:[#allocation2 + $0x10] sm:$0xf]
      %v1208 = vld [vmem:[#allocation2 + $0x18] sm:$0xf]
      %v1209 = vld [vmem:[#allocation2 + $0x20] sm:$0xf]
      %v1210 = vld [vmem:[#allocation2 + $0x28] sm:$0xf]
      %v1211 = vld [vmem:[#allocation2 + $0x30] sm:$0xf]
      %v1212 = vld [vmem:[#allocation2 + $0x38] sm:$0xf]
      %v1213 = vld [vmem:[#allocation2 + $0x40] sm:$0xf]
      %v1214 = vld [vmem:[#allocation2 + $0x48] sm:$0xf]
      %v1215 = vld [vmem:[%s566] sm:$0xff]
      %v1217 = vlaneseq
      %v1218 = vshrl.u32 %v1217, 7
      %v1219 = vsub.s32 0, %v1218
      %v1220 = vrot.slane %v1215, %v1219
      %v1221 = vlaneseq
      %v1222 = vshrl.u32 %v1221, 7
      %v1223 = vsub.s32 1, %v1222
      %v1224 = vrot.slane %v1215, %v1223
      %v1225 = vlaneseq
      %v1226 = vshrl.u32 %v1225, 7
      %v1227 = vsub.s32 2, %v1226
      %v1228 = vrot.slane %v1215, %v1227
      %v1229 = vlaneseq
      %v1230 = vshrl.u32 %v1229, 7
      %v1231 = vsub.s32 3, %v1230
      %v1232 = vrot.slane %v1215, %v1231
      %v1233 = vlaneseq
      %v1234 = vshrl.u32 %v1233, 7
      %v1235 = vsub.s32 4, %v1234
      %v1236 = vrot.slane %v1215, %v1235
      %v1237 = vlaneseq
      %v1238 = vshrl.u32 %v1237, 7
      %v1239 = vsub.s32 5, %v1238
      %v1240 = vrot.slane %v1215, %v1239
      %v1241 = vlaneseq
      %v1242 = vshrl.u32 %v1241, 7
      %v1243 = vsub.s32 6, %v1242
      %v1244 = vrot.slane %v1215, %v1243
      %v1245 = vlaneseq
      %v1246 = vshrl.u32 %v1245, 7
      %v1247 = vsub.s32 7, %v1246
      %v1248 = vrot.slane %v1215, %v1247
      %1249 = vrot.lane.b32.xlu0 %v1220, 33
      %v1250 = vpop.permute.xlu0 %1249
      %1251 = vrot.lane.b32.xlu0 %v1224, 33
      %v1252 = vpop.permute.xlu0 %1251
      %1253 = vrot.lane.b32.xlu0 %v1228, 33
      %v1254 = vpop.permute.xlu0 %1253
      %1255 = vrot.lane.b32.xlu0 %v1232, 33
      %v1256 = vpop.permute.xlu0 %1255
      %1257 = vrot.lane.b32.xlu0 %v1236, 33
      %v1258 = vpop.permute.xlu0 %1257
      %1259 = vrot.lane.b32.xlu0 %v1240, 33
      %v1260 = vpop.permute.xlu0 %1259
      %1261 = vrot.lane.b32.xlu0 %v1244, 33
      %v1262 = vpop.permute.xlu0 %1261
      %1263 = vrot.lane.b32.xlu0 %v1248, 33
      %v1264 = vpop.permute.xlu0 %1263
      %v1265 = vsel %vm462, %v1250, %v1252
      %v1266 = vsel %vm462, %v1252, %v1254
      %v1267 = vsel %vm462, %v1254, %v1256
      %v1268 = vsel %vm462, %v1256, %v1258
      %v1269 = vsel %vm462, %v1258, %v1260
      %v1270 = vsel %vm462, %v1260, %v1262
      %v1271 = vsel %vm462, %v1262, %v1264
      %v1281 = vmul.f32 %v1206, %v1250
      %v1282 = vmul.f32 %v1207, %v1265
      %v1283 = vmul.f32 %v1208, %v1266
      %v1284 = vmul.f32 %v1209, %v1267
      %v1285 = vmul.f32 %v1210, %v1268
      %v1286 = vmul.f32 %v1211, %v1269
      %v1287 = vmul.f32 %v1212, %v1270
      %v1288 = vmul.f32 %v1213, %v1271
      %v1289 = vmul.f32 %v1214, %v1264
      %1299 = vrot.lane.b32.xlu0 %v1281, 95
      %v1300 = vpop.permute.xlu0 %1299
      %1301 = vrot.lane.b32.xlu0 %v1282, 95
      %v1302 = vpop.permute.xlu0 %1301
      %1303 = vrot.lane.b32.xlu0 %v1283, 95
      %v1304 = vpop.permute.xlu0 %1303
      %1305 = vrot.lane.b32.xlu0 %v1284, 95
      %v1306 = vpop.permute.xlu0 %1305
      %1307 = vrot.lane.b32.xlu0 %v1285, 95
      %v1308 = vpop.permute.xlu0 %1307
      %1309 = vrot.lane.b32.xlu0 %v1286, 95
      %v1310 = vpop.permute.xlu0 %1309
      %1311 = vrot.lane.b32.xlu0 %v1287, 95
      %v1312 = vpop.permute.xlu0 %1311
      %1313 = vrot.lane.b32.xlu0 %v1288, 95
      %v1314 = vpop.permute.xlu0 %1313
      %1315 = vrot.lane.b32.xlu0 %v1289, 95
      %v1316 = vpop.permute.xlu0 %1315
      %v1317 = vsel %vm409, %v1300, %v1302
      %v1318 = vsel %vm409, %v1302, %v1304
      %v1319 = vsel %vm409, %v1304, %v1306
      %v1320 = vsel %vm409, %v1306, %v1308
      %v1321 = vsel %vm409, %v1308, %v1310
      %v1322 = vsel %vm409, %v1310, %v1312
      %v1323 = vsel %vm409, %v1312, %v1314
      %v1324 = vsel %vm409, %v1314, %v1316
      %1333 = vst [vmem:[#allocation3 + $0x100] sm:$0xf] %v1317
      %1334 = vst [vmem:[#allocation3 + $0x108] sm:$0xf] %v1318
      %1335 = vst [vmem:[#allocation3 + $0x110] sm:$0xf] %v1319
      %1336 = vst [vmem:[#allocation3 + $0x118] sm:$0xf] %v1320
      %1337 = vst [vmem:[#allocation3 + $0x120] sm:$0xf] %v1321
      %1338 = vst [vmem:[#allocation3 + $0x128] sm:$0xf] %v1322
      %1339 = vst [vmem:[#allocation3 + $0x130] sm:$0xf] %v1323
      %1340 = vst [vmem:[#allocation3 + $0x138] sm:$0xf] %v1324
      %v1341 = vld [vmem:[%s3] sm:$0xf]
      %v1342 = vld [vmem:[#allocation3] sm:$0xff]
      %v1343 = vld [vmem:[#allocation3 + $0x8] sm:$0xff]
      %v1344 = vld [vmem:[#allocation3 + $0x10] sm:$0xff]
      %v1345 = vld [vmem:[#allocation3 + $0x18] sm:$0xff]
      %v1346 = vld [vmem:[#allocation3 + $0x20] sm:$0xff]
      %v1347 = vld [vmem:[#allocation3 + $0x28] sm:$0xff]
      %v1348 = vld [vmem:[#allocation3 + $0x30] sm:$0xff]
      %v1349 = vld [vmem:[#allocation3 + $0x38] sm:$0xff]
      %v1350 = vld [vmem:[#allocation3 + $0x40] sm:$0xff]
      %v1351 = vld [vmem:[#allocation3 + $0x48] sm:$0xff]
      %v1352 = vld [vmem:[#allocation3 + $0x50] sm:$0xff]
      %v1353 = vld [vmem:[#allocation3 + $0x58] sm:$0xff]
      %v1354 = vld [vmem:[#allocation3 + $0x60] sm:$0xff]
      %v1355 = vld [vmem:[#allocation3 + $0x68] sm:$0xff]
      %v1356 = vld [vmem:[#allocation3 + $0x70] sm:$0xff]
      %v1357 = vld [vmem:[#allocation3 + $0x78] sm:$0xff]
      %v1358 = vld [vmem:[#allocation3 + $0x80] sm:$0xff]
      %v1359 = vld [vmem:[#allocation3 + $0x88] sm:$0xff]
      %v1360 = vld [vmem:[#allocation3 + $0x90] sm:$0xff]
      %v1361 = vld [vmem:[#allocation3 + $0x98] sm:$0xff]
      %v1362 = vld [vmem:[#allocation3 + $0xa0] sm:$0xff]
      %v1363 = vld [vmem:[#allocation3 + $0xa8] sm:$0xff]
      %v1364 = vld [vmem:[#allocation3 + $0xb0] sm:$0xff]
      %v1365 = vld [vmem:[#allocation3 + $0xb8] sm:$0xff]
      %v1366 = vld [vmem:[#allocation3 + $0xc0] sm:$0xff]
      %v1367 = vld [vmem:[#allocation3 + $0xc8] sm:$0xff]
      %v1368 = vld [vmem:[#allocation3 + $0xd0] sm:$0xff]
      %v1369 = vld [vmem:[#allocation3 + $0xd8] sm:$0xff]
      %v1370 = vld [vmem:[#allocation3 + $0xe0] sm:$0xff]
      %v1371 = vld [vmem:[#allocation3 + $0xe8] sm:$0xff]
      %v1372 = vld [vmem:[#allocation3 + $0xf0] sm:$0xff]
      %v1373 = vld [vmem:[#allocation3 + $0xf8] sm:$0xff]
      %v1374 = vld [vmem:[#allocation3 + $0x100] sm:$0xf]
      %v1375 = vld [vmem:[#allocation3 + $0x108] sm:$0xf]
      %v1376 = vld [vmem:[#allocation3 + $0x110] sm:$0xf]
      %v1377 = vld [vmem:[#allocation3 + $0x118] sm:$0xf]
      %v1378 = vld [vmem:[#allocation3 + $0x120] sm:$0xf]
      %v1379 = vld [vmem:[#allocation3 + $0x128] sm:$0xf]
      %v1380 = vld [vmem:[#allocation3 + $0x130] sm:$0xf]
      %v1381 = vld [vmem:[#allocation3 + $0x138] sm:$0xf]
      %v1382 = vld [vmem:[%s4] sm:$0xf]
      %1384 = vset.pattern.permute.xlu0 0
      %1385 = vperm.xlu0 %1384, %v1382
      %v1386 = vpop.permute.xlu0 %1385
      %vm1388 = vcmask 293888
      %v1390 = vsel %vm1388, %v1341, 0
      %vm1392 = vcmask 1043456
      %v1394 = vsel %vm1392, %v1374, 0
      %v1397 = vsel %vm1392, %v1375, 0
      %v1400 = vsel %vm1392, %v1376, 0
      %v1403 = vsel %vm1392, %v1377, 0
      %v1406 = vsel %vm1392, %v1378, 0
      %v1409 = vsel %vm1392, %v1379, 0
      %v1412 = vsel %vm1392, %v1380, 0
      %v1415 = vsel %vm1392, %v1381, 0
      %1417 = vmatprep.subr.mxu0 0.0
      %1418 = vmatpush1.msra.mxu0 0.0
      %1419 = vmatprep.subr.mxu0 0.0
      %1420 = vmatpush1.msra.mxu0 0.0
      %1421 = vmatprep.subr.mxu0 0.0
      %1422 = vmatpush1.msra.mxu0 0.0
      %1423 = vmatprep.subr.mxu0 0.0
      %1424 = vmatpush1.msra.mxu0 0.0
      %1425 = vmatprep.subr.mxu0 0.0
      %1426 = vmatpush1.msra.mxu0 0.0
      %1427 = vmatprep.subr.mxu0 0.0
      %1428 = vmatpush1.msra.mxu0 0.0
      %1429 = vmatprep.subr.mxu0 0.0
      %1430 = vmatpush1.msra.mxu0 0.0
      %1431 = vmatprep.subr.mxu0 0.0
      %1432 = vmatpush1.msra.mxu0 0.0
      %1433 = vmatprep.subr.mxu0 0.0
      %1434 = vmatpush1.msra.mxu0 0.0
      %1435 = vmatprep.subr.mxu0 0.0
      %1436 = vmatpush1.msra.mxu0 0.0
      %1437 = vmatprep.subr.mxu0 0.0
      %1438 = vmatpush1.msra.mxu0 0.0
      %1439 = vmatprep.subr.mxu0 %v1397
      %1440 = vmatpush1.msra.mxu0 %v1394
      %1441 = vmatprep.subr.mxu0 %v1367
      %1442 = vmatpush1.msra.mxu0 %v1366
      %1443 = vmatprep.subr.mxu0 %v1359
      %1444 = vmatpush1.msra.mxu0 %v1358
      %1445 = vmatprep.subr.mxu0 %v1351
      %1446 = vmatpush1.msra.mxu0 %v1350
      %1447 = vmatprep.subr.mxu0 %v1343
      %1448 = vmatpush1.msra.mxu0 %v1342
      %1449 = vmatprep.subr.mxu0 0.0
      %1450 = vmatpush2.msra.mxu0 0.0
      %1451 = vmatprep.subr.mxu0 0.0
      %1452 = vmatpush2.msra.mxu0 0.0
      %1453 = vmatprep.subr.mxu0 0.0
      %1454 = vmatpush2.msra.mxu0 0.0
      %1455 = vmatprep.subr.mxu0 0.0
      %1456 = vmatpush2.msra.mxu0 0.0
      %1457 = vmatprep.subr.mxu0 0.0
      %1458 = vmatpush2.msra.mxu0 0.0
      %1459 = vmatprep.subr.mxu0 0.0
      %1460 = vmatpush2.msra.mxu0 0.0
      %1461 = vmatprep.subr.mxu0 0.0
      %1462 = vmatpush2.msra.mxu0 0.0
      %1463 = vmatprep.subr.mxu0 0.0
      %1464 = vmatpush2.msra.mxu0 0.0
      %1465 = vmatprep.subr.mxu0 0.0
      %1466 = vmatpush2.msra.mxu0 0.0
      %1467 = vmatprep.subr.mxu0 0.0
      %1468 = vmatpush2.msra.mxu0 0.0
      %1469 = vmatprep.subr.mxu0 0.0
      %1470 = vmatpush2.msra.mxu0 0.0
      %1471 = vmatprep.subr.mxu0 0.0
      %1472 = vmatpush2.msra.mxu0 0.0
      %1473 = vmatprep.subr.mxu0 0.0
      %1474 = vmatpush2.msra.mxu0 0.0
      %1475 = vmatprep.subr.mxu0 0.0
      %1476 = vmatpush2.msra.mxu0 0.0
      %1477 = vmatprep.subr.mxu0 0.0
      %1478 = vmatpush2.msra.mxu0 0.0
      %1479 = vmatprep.subr.mxu0 0.0
      %1480 = vmatpush2.msra.mxu0 0.0
      %1481 = vmatprep.mubr.f32.mxu0 0.0
      %1482 = vmatmul.mubr.f32.gmra.mxu0 %v1390
      %v1483 = vpop.f32.mrf.mxu0
      %v1484 = vadd.f32 %v1386, %v1483
      %v1485 = vpop.f32.mrf.mxu0
      %v1486 = vadd.f32 %v1386, %v1485
      %1487 = vdwg.mxu0
      %1488 = vmatprep.subr.mxu0 0.0
      %1489 = vmatpush1.msra.mxu0 0.0
      %1490 = vmatprep.subr.mxu0 0.0
      %1491 = vmatpush1.msra.mxu0 0.0
      %1492 = vmatprep.subr.mxu0 0.0
      %1493 = vmatpush1.msra.mxu0 0.0
      %1494 = vmatprep.subr.mxu0 0.0
      %1495 = vmatpush1.msra.mxu0 0.0
      %1496 = vmatprep.subr.mxu0 0.0
      %1497 = vmatpush1.msra.mxu0 0.0
      %1498 = vmatprep.subr.mxu0 0.0
      %1499 = vmatpush1.msra.mxu0 0.0
      %1500 = vmatprep.subr.mxu0 0.0
      %1501 = vmatpush1.msra.mxu0 0.0
      %1502 = vmatprep.subr.mxu0 0.0
      %1503 = vmatpush1.msra.mxu0 0.0
      %1504 = vmatprep.subr.mxu0 0.0
      %1505 = vmatpush1.msra.mxu0 0.0
      %1506 = vmatprep.subr.mxu0 0.0
      %1507 = vmatpush1.msra.mxu0 0.0
      %1508 = vmatprep.subr.mxu0 0.0
      %1509 = vmatpush1.msra.mxu0 0.0
      %1510 = vmatprep.subr.mxu0 %v1403
      %1511 = vmatpush1.msra.mxu0 %v1400
      %1512 = vmatprep.subr.mxu0 %v1369
      %1513 = vmatpush1.msra.mxu0 %v1368
      %1514 = vmatprep.subr.mxu0 %v1361
      %1515 = vmatpush1.msra.mxu0 %v1360
      %1516 = vmatprep.subr.mxu0 %v1353
      %1517 = vmatpush1.msra.mxu0 %v1352
      %1518 = vmatprep.subr.mxu0 %v1345
      %1519 = vmatpush1.msra.mxu0 %v1344
      %1520 = vmatprep.subr.mxu0 0.0
      %1521 = vmatpush2.msra.mxu0 0.0
      %1522 = vmatprep.subr.mxu0 0.0
      %1523 = vmatpush2.msra.mxu0 0.0
      %1524 = vmatprep.subr.mxu0 0.0
      %1525 = vmatpush2.msra.mxu0 0.0
      %1526 = vmatprep.subr.mxu0 0.0
      %1527 = vmatpush2.msra.mxu0 0.0
      %1528 = vmatprep.subr.mxu0 0.0
      %1529 = vmatpush2.msra.mxu0 0.0
      %1530 = vmatprep.subr.mxu0 0.0
      %1531 = vmatpush2.msra.mxu0 0.0
      %1532 = vmatprep.subr.mxu0 0.0
      %1533 = vmatpush2.msra.mxu0 0.0
      %1534 = vmatprep.subr.mxu0 0.0
      %1535 = vmatpush2.msra.mxu0 0.0
      %1536 = vmatprep.subr.mxu0 0.0
      %1537 = vmatpush2.msra.mxu0 0.0
      %1538 = vmatprep.subr.mxu0 0.0
      %1539 = vmatpush2.msra.mxu0 0.0
      %1540 = vmatprep.subr.mxu0 0.0
      %1541 = vmatpush2.msra.mxu0 0.0
      %1542 = vmatprep.subr.mxu0 0.0
      %1543 = vmatpush2.msra.mxu0 0.0
      %1544 = vmatprep.subr.mxu0 0.0
      %1545 = vmatpush2.msra.mxu0 0.0
      %1546 = vmatprep.subr.mxu0 0.0
      %1547 = vmatpush2.msra.mxu0 0.0
      %1548 = vmatprep.subr.mxu0 0.0
      %1549 = vmatpush2.msra.mxu0 0.0
      %1550 = vmatprep.subr.mxu0 0.0
      %1551 = vmatpush2.msra.mxu0 0.0
      %1552 = vmatprep.mubr.f32.mxu0 0.0
      %1553 = vmatmul.mubr.f32.gmra.mxu0 %v1390
      %v1554 = vpop.f32.mrf.mxu0
      %v1555 = vadd.f32 %v1386, %v1554
      %v1556 = vpop.f32.mrf.mxu0
      %v1557 = vadd.f32 %v1386, %v1556
      %1558 = vdwg.mxu0
      %1559 = vmatprep.subr.mxu0 0.0
      %1560 = vmatpush1.msra.mxu0 0.0
      %1561 = vmatprep.subr.mxu0 0.0
      %1562 = vmatpush1.msra.mxu0 0.0
      %1563 = vmatprep.subr.mxu0 0.0
      %1564 = vmatpush1.msra.mxu0 0.0
      %1565 = vmatprep.subr.mxu0 0.0
      %1566 = vmatpush1.msra.mxu0 0.0
      %1567 = vmatprep.subr.mxu0 0.0
      %1568 = vmatpush1.msra.mxu0 0.0
      %1569 = vmatprep.subr.mxu0 0.0
      %1570 = vmatpush1.msra.mxu0 0.0
      %1571 = vmatprep.subr.mxu0 0.0
      %1572 = vmatpush1.msra.mxu0 0.0
      %1573 = vmatprep.subr.mxu0 0.0
      %1574 = vmatpush1.msra.mxu0 0.0
      %1575 = vmatprep.subr.mxu0 0.0
      %1576 = vmatpush1.msra.mxu0 0.0
      %1577 = vmatprep.subr.mxu0 0.0
      %1578 = vmatpush1.msra.mxu0 0.0
      %1579 = vmatprep.subr.mxu0 0.0
      %1580 = vmatpush1.msra.mxu0 0.0
      %1581 = vmatprep.subr.mxu0 %v1409
      %1582 = vmatpush1.msra.mxu0 %v1406
      %1583 = vmatprep.subr.mxu0 %v1371
      %1584 = vmatpush1.msra.mxu0 %v1370
      %1585 = vmatprep.subr.mxu0 %v1363
      %1586 = vmatpush1.msra.mxu0 %v1362
      %1587 = vmatprep.subr.mxu0 %v1355
      %1588 = vmatpush1.msra.mxu0 %v1354
      %1589 = vmatprep.subr.mxu0 %v1347
      %1590 = vmatpush1.msra.mxu0 %v1346
      %1591 = vmatprep.subr.mxu0 0.0
      %1592 = vmatpush2.msra.mxu0 0.0
      %1593 = vmatprep.subr.mxu0 0.0
      %1594 = vmatpush2.msra.mxu0 0.0
      %1595 = vmatprep.subr.mxu0 0.0
      %1596 = vmatpush2.msra.mxu0 0.0
      %1597 = vmatprep.subr.mxu0 0.0
      %1598 = vmatpush2.msra.mxu0 0.0
      %1599 = vmatprep.subr.mxu0 0.0
      %1600 = vmatpush2.msra.mxu0 0.0
      %1601 = vmatprep.subr.mxu0 0.0
      %1602 = vmatpush2.msra.mxu0 0.0
      %1603 = vmatprep.subr.mxu0 0.0
      %1604 = vmatpush2.msra.mxu0 0.0
      %1605 = vmatprep.subr.mxu0 0.0
      %1606 = vmatpush2.msra.mxu0 0.0
      %1607 = vmatprep.subr.mxu0 0.0
      %1608 = vmatpush2.msra.mxu0 0.0
      %1609 = vmatprep.subr.mxu0 0.0
      %1610 = vmatpush2.msra.mxu0 0.0
      %1611 = vmatprep.subr.mxu0 0.0
      %1612 = vmatpush2.msra.mxu0 0.0
      %1613 = vmatprep.subr.mxu0 0.0
      %1614 = vmatpush2.msra.mxu0 0.0
      %1615 = vmatprep.subr.mxu0 0.0
      %1616 = vmatpush2.msra.mxu0 0.0
      %1617 = vmatprep.subr.mxu0 0.0
      %1618 = vmatpush2.msra.mxu0 0.0
      %1619 = vmatprep.subr.mxu0 0.0
      %1620 = vmatpush2.msra.mxu0 0.0
      %1621 = vmatprep.subr.mxu0 0.0
      %1622 = vmatpush2.msra.mxu0 0.0
      %1623 = vmatprep.mubr.f32.mxu0 0.0
      %1624 = vmatmul.mubr.f32.gmra.mxu0 %v1390
      %v1625 = vpop.f32.mrf.mxu0
      %v1626 = vadd.f32 %v1386, %v1625
      %v1627 = vpop.f32.mrf.mxu0
      %v1628 = vadd.f32 %v1386, %v1627
      %1629 = vdwg.mxu0
      %1630 = vmatprep.subr.mxu0 0.0
      %1631 = vmatpush1.msra.mxu0 0.0
      %1632 = vmatprep.subr.mxu0 0.0
      %1633 = vmatpush1.msra.mxu0 0.0
      %1634 = vmatprep.subr.mxu0 0.0
      %1635 = vmatpush1.msra.mxu0 0.0
      %1636 = vmatprep.subr.mxu0 0.0
      %1637 = vmatpush1.msra.mxu0 0.0
      %1638 = vmatprep.subr.mxu0 0.0
      %1639 = vmatpush1.msra.mxu0 0.0
      %1640 = vmatprep.subr.mxu0 0.0
      %1641 = vmatpush1.msra.mxu0 0.0
      %1642 = vmatprep.subr.mxu0 0.0
      %1643 = vmatpush1.msra.mxu0 0.0
      %1644 = vmatprep.subr.mxu0 0.0
      %1645 = vmatpush1.msra.mxu0 0.0
      %1646 = vmatprep.subr.mxu0 0.0
      %1647 = vmatpush1.msra.mxu0 0.0
      %1648 = vmatprep.subr.mxu0 0.0
      %1649 = vmatpush1.msra.mxu0 0.0
      %1650 = vmatprep.subr.mxu0 0.0
      %1651 = vmatpush1.msra.mxu0 0.0
      %1652 = vmatprep.subr.mxu0 %v1415
      %1653 = vmatpush1.msra.mxu0 %v1412
      %1654 = vmatprep.subr.mxu0 %v1373
      %1655 = vmatpush1.msra.mxu0 %v1372
      %1656 = vmatprep.subr.mxu0 %v1365
      %1657 = vmatpush1.msra.mxu0 %v1364
      %1658 = vmatprep.subr.mxu0 %v1357
      %1659 = vmatpush1.msra.mxu0 %v1356
      %1660 = vmatprep.subr.mxu0 %v1349
      %1661 = vmatpush1.msra.mxu0 %v1348
      %1662 = vmatprep.subr.mxu0 0.0
      %1663 = vmatpush2.msra.mxu0 0.0
      %1664 = vmatprep.subr.mxu0 0.0
      %1665 = vmatpush2.msra.mxu0 0.0
      %1666 = vmatprep.subr.mxu0 0.0
      %1667 = vmatpush2.msra.mxu0 0.0
      %1668 = vmatprep.subr.mxu0 0.0
      %1669 = vmatpush2.msra.mxu0 0.0
      %1670 = vmatprep.subr.mxu0 0.0
      %1671 = vmatpush2.msra.mxu0 0.0
      %1672 = vmatprep.subr.mxu0 0.0
      %1673 = vmatpush2.msra.mxu0 0.0
      %1674 = vmatprep.subr.mxu0 0.0
      %1675 = vmatpush2.msra.mxu0 0.0
      %1676 = vmatprep.subr.mxu0 0.0
      %1677 = vmatpush2.msra.mxu0 0.0
      %1678 = vmatprep.subr.mxu0 0.0
      %1679 = vmatpush2.msra.mxu0 0.0
      %1680 = vmatprep.subr.mxu0 0.0
      %1681 = vmatpush2.msra.mxu0 0.0
      %1682 = vmatprep.subr.mxu0 0.0
      %1683 = vmatpush2.msra.mxu0 0.0
      %1684 = vmatprep.subr.mxu0 0.0
      %1685 = vmatpush2.msra.mxu0 0.0
      %1686 = vmatprep.subr.mxu0 0.0
      %1687 = vmatpush2.msra.mxu0 0.0
      %1688 = vmatprep.subr.mxu0 0.0
      %1689 = vmatpush2.msra.mxu0 0.0
      %1690 = vmatprep.subr.mxu0 0.0
      %1691 = vmatpush2.msra.mxu0 0.0
      %1692 = vmatprep.subr.mxu0 0.0
      %1693 = vmatpush2.msra.mxu0 0.0
      %1694 = vmatprep.mubr.f32.mxu0 0.0
      %1695 = vmatmul.mubr.f32.gmra.mxu0 %v1390
      %v1696 = vpop.f32.mrf.mxu0
      %v1697 = vadd.f32 %v1386, %v1696
      %v1698 = vpop.f32.mrf.mxu0
      %v1699 = vadd.f32 %v1386, %v1698
      %1700 = vdwg.mxu0
      %v1701 = vmax.f32 %v1484, 0.0
      %v1702 = vmax.f32 %v1486, 0.0
      %v1703 = vmax.f32 %v1555, 0.0
      %v1704 = vmax.f32 %v1557, 0.0
      %v1705 = vmax.f32 %v1626, 0.0
      %v1706 = vmax.f32 %v1628, 0.0
      %v1707 = vmax.f32 %v1697, 0.0
      %v1708 = vmax.f32 %v1699, 0.0
      %1709 = vst [vmem:[#allocation2 + $0x8] sm:$0xf] %v1701
      %1710 = vst [vmem:[#allocation2 + $0x10] sm:$0xf] %v1702
      %1711 = vst [vmem:[#allocation2 + $0x18] sm:$0xf] %v1703
      %1712 = vst [vmem:[#allocation2 + $0x20] sm:$0xf] %v1704
      %1713 = vst [vmem:[#allocation2 + $0x28] sm:$0xf] %v1705
      %1714 = vst [vmem:[#allocation2 + $0x30] sm:$0xf] %v1706
      %1715 = vst [vmem:[#allocation2 + $0x38] sm:$0xf] %v1707
      %1716 = vst [vmem:[#allocation2 + $0x40] sm:$0xf] %v1708
      %v1717 = vld [vmem:[#allocation2] sm:$0xf]
      %v1718 = vld [vmem:[#allocation2 + $0x8] sm:$0xf]
      %v1719 = vld [vmem:[#allocation2 + $0x10] sm:$0xf]
      %v1720 = vld [vmem:[#allocation2 + $0x18] sm:$0xf]
      %v1721 = vld [vmem:[#allocation2 + $0x20] sm:$0xf]
      %v1722 = vld [vmem:[#allocation2 + $0x28] sm:$0xf]
      %v1723 = vld [vmem:[#allocation2 + $0x30] sm:$0xf]
      %v1724 = vld [vmem:[#allocation2 + $0x38] sm:$0xf]
      %v1725 = vld [vmem:[#allocation2 + $0x40] sm:$0xf]
      %v1726 = vld [vmem:[%s2] sm:$0xff]
      %v1728 = vlaneseq
      %v1729 = vshrl.u32 %v1728, 7
      %v1730 = vsub.s32 0, %v1729
      %v1731 = vrot.slane %v1726, %v1730
      %v1732 = vlaneseq
      %v1733 = vshrl.u32 %v1732, 7
      %v1734 = vsub.s32 1, %v1733
      %v1735 = vrot.slane %v1726, %v1734
      %v1736 = vlaneseq
      %v1737 = vshrl.u32 %v1736, 7
      %v1738 = vsub.s32 2, %v1737
      %v1739 = vrot.slane %v1726, %v1738
      %v1740 = vlaneseq
      %v1741 = vshrl.u32 %v1740, 7
      %v1742 = vsub.s32 3, %v1741
      %v1743 = vrot.slane %v1726, %v1742
      %v1744 = vlaneseq
      %v1745 = vshrl.u32 %v1744, 7
      %v1746 = vsub.s32 4, %v1745
      %v1747 = vrot.slane %v1726, %v1746
      %v1748 = vlaneseq
      %v1749 = vshrl.u32 %v1748, 7
      %v1750 = vsub.s32 5, %v1749
      %v1751 = vrot.slane %v1726, %v1750
      %v1752 = vlaneseq
      %v1753 = vshrl.u32 %v1752, 7
      %v1754 = vsub.s32 6, %v1753
      %v1755 = vrot.slane %v1726, %v1754
      %v1756 = vlaneseq
      %v1757 = vshrl.u32 %v1756, 7
      %v1758 = vsub.s32 7, %v1757
      %v1759 = vrot.slane %v1726, %v1758
      %1760 = vrot.lane.b32.xlu0 %v1731, 95
      %v1761 = vpop.permute.xlu0 %1760
      %1762 = vrot.lane.b32.xlu0 %v1735, 95
      %v1763 = vpop.permute.xlu0 %1762
      %1764 = vrot.lane.b32.xlu0 %v1739, 95
      %v1765 = vpop.permute.xlu0 %1764
      %1766 = vrot.lane.b32.xlu0 %v1743, 95
      %v1767 = vpop.permute.xlu0 %1766
      %1768 = vrot.lane.b32.xlu0 %v1747, 95
      %v1769 = vpop.permute.xlu0 %1768
      %1770 = vrot.lane.b32.xlu0 %v1751, 95
      %v1771 = vpop.permute.xlu0 %1770
      %1772 = vrot.lane.b32.xlu0 %v1755, 95
      %v1773 = vpop.permute.xlu0 %1772
      %1774 = vrot.lane.b32.xlu0 %v1759, 95
      %v1775 = vpop.permute.xlu0 %1774
      %v1776 = vsel %vm409, %v1761, %v1763
      %v1777 = vsel %vm409, %v1763, %v1765
      %v1778 = vsel %vm409, %v1765, %v1767
      %v1779 = vsel %vm409, %v1767, %v1769
      %v1780 = vsel %vm409, %v1769, %v1771
      %v1781 = vsel %vm409, %v1771, %v1773
      %v1782 = vsel %vm409, %v1773, %v1775
      %v1792 = vmul.f32 %v1717, %v1761
      %v1793 = vmul.f32 %v1718, %v1776
      %v1794 = vmul.f32 %v1719, %v1777
      %v1795 = vmul.f32 %v1720, %v1778
      %v1796 = vmul.f32 %v1721, %v1779
      %v1797 = vmul.f32 %v1722, %v1780
      %v1798 = vmul.f32 %v1723, %v1781
      %v1799 = vmul.f32 %v1724, %v1782
      %v1800 = vmul.f32 %v1725, %v1775
      %1810 = vrot.lane.b32.xlu0 %v1792, 33
      %v1811 = vpop.permute.xlu0 %1810
      %1812 = vrot.lane.b32.xlu0 %v1793, 33
      %v1813 = vpop.permute.xlu0 %1812
      %1814 = vrot.lane.b32.xlu0 %v1794, 33
      %v1815 = vpop.permute.xlu0 %1814
      %1816 = vrot.lane.b32.xlu0 %v1795, 33
      %v1817 = vpop.permute.xlu0 %1816
      %1818 = vrot.lane.b32.xlu0 %v1796, 33
      %v1819 = vpop.permute.xlu0 %1818
      %1820 = vrot.lane.b32.xlu0 %v1797, 33
      %v1821 = vpop.permute.xlu0 %1820
      %1822 = vrot.lane.b32.xlu0 %v1798, 33
      %v1823 = vpop.permute.xlu0 %1822
      %1824 = vrot.lane.b32.xlu0 %v1799, 33
      %v1825 = vpop.permute.xlu0 %1824
      %1826 = vrot.lane.b32.xlu0 %v1800, 33
      %v1827 = vpop.permute.xlu0 %1826
      %v1828 = vsel %vm462, %v1811, %v1813
      %v1829 = vsel %vm462, %v1813, %v1815
      %v1830 = vsel %vm462, %v1815, %v1817
      %v1831 = vsel %vm462, %v1817, %v1819
      %v1832 = vsel %vm462, %v1819, %v1821
      %v1833 = vsel %vm462, %v1821, %v1823
      %v1834 = vsel %vm462, %v1823, %v1825
      %v1835 = vsel %vm462, %v1825, %v1827
      %1844 = vst [vmem:[#allocation3] sm:$0xf] %v1828
      %1845 = vst [vmem:[#allocation3 + $0x8] sm:$0xf] %v1829
      %1846 = vst [vmem:[#allocation3 + $0x10] sm:$0xf] %v1830
      %1847 = vst [vmem:[#allocation3 + $0x18] sm:$0xf] %v1831
      %1848 = vst [vmem:[#allocation3 + $0x20] sm:$0xf] %v1832
      %1849 = vst [vmem:[#allocation3 + $0x28] sm:$0xf] %v1833
      %1850 = vst [vmem:[#allocation3 + $0x30] sm:$0xf] %v1834
      %1851 = vst [vmem:[#allocation3 + $0x38] sm:$0xf] %v1835
      %v1852 = vld [vmem:[#allocation2] sm:$0xf]
      %v1853 = vld [vmem:[#allocation2 + $0x8] sm:$0xf]
      %v1854 = vld [vmem:[#allocation2 + $0x10] sm:$0xf]
      %v1855 = vld [vmem:[#allocation2 + $0x18] sm:$0xf]
      %v1856 = vld [vmem:[#allocation2 + $0x20] sm:$0xf]
      %v1857 = vld [vmem:[#allocation2 + $0x28] sm:$0xf]
      %v1858 = vld [vmem:[#allocation2 + $0x30] sm:$0xf]
      %v1859 = vld [vmem:[#allocation2 + $0x38] sm:$0xf]
      %v1860 = vld [vmem:[#allocation2 + $0x40] sm:$0xf]
      %v1870 = vrot.slane %v1852, 4
      %v1871 = vrot.slane %v1853, 4
      %v1872 = vrot.slane %v1854, 4
      %v1873 = vrot.slane %v1855, 4
      %v1874 = vrot.slane %v1856, 4
      %v1875 = vrot.slane %v1857, 4
      %v1876 = vrot.slane %v1858, 4
      %v1877 = vrot.slane %v1859, 4
      %v1878 = vrot.slane %v1860, 4
      %1879 = vrot.lane.b32.xlu0 %v1870, 32
      %v1880 = vpop.permute.xlu0 %1879
      %1881 = vrot.lane.b32.xlu0 %v1871, 32
      %v1882 = vpop.permute.xlu0 %1881
      %1883 = vrot.lane.b32.xlu0 %v1872, 32
      %v1884 = vpop.permute.xlu0 %1883
      %1885 = vrot.lane.b32.xlu0 %v1873, 32
      %v1886 = vpop.permute.xlu0 %1885
      %1887 = vrot.lane.b32.xlu0 %v1874, 32
      %v1888 = vpop.permute.xlu0 %1887
      %1889 = vrot.lane.b32.xlu0 %v1875, 32
      %v1890 = vpop.permute.xlu0 %1889
      %1891 = vrot.lane.b32.xlu0 %v1876, 32
      %v1892 = vpop.permute.xlu0 %1891
      %1893 = vrot.lane.b32.xlu0 %v1877, 32
      %v1894 = vpop.permute.xlu0 %1893
      %1895 = vrot.lane.b32.xlu0 %v1878, 32
      %v1896 = vpop.permute.xlu0 %1895
      %v1897 = vsel %vm532, %v1880, %v1882
      %v1898 = vsel %vm532, %v1882, %v1884
      %v1899 = vsel %vm532, %v1884, %v1886
      %v1900 = vsel %vm532, %v1886, %v1888
      %v1901 = vsel %vm532, %v1888, %v1890
      %v1902 = vsel %vm532, %v1890, %v1892
      %v1903 = vsel %vm532, %v1892, %v1894
      %v1904 = vsel %vm532, %v1894, %v1896
      %1913 = vst [vmem:[#allocation3] sm:$0xf0] %v1897
      %1914 = vst [vmem:[#allocation3 + $0x8] sm:$0xf0] %v1898
      %1915 = vst [vmem:[#allocation3 + $0x10] sm:$0xf0] %v1899
      %1916 = vst [vmem:[#allocation3 + $0x18] sm:$0xf0] %v1900
      %1917 = vst [vmem:[#allocation3 + $0x20] sm:$0xf0] %v1901
      %1918 = vst [vmem:[#allocation3 + $0x28] sm:$0xf0] %v1902
      %1919 = vst [vmem:[#allocation3 + $0x30] sm:$0xf0] %v1903
      %1920 = vst [vmem:[#allocation3 + $0x38] sm:$0xf0] %v1904
      %v1921 = vld [vmem:[#allocation2] sm:$0xf]
      %v1922 = vld [vmem:[#allocation2 + $0x8] sm:$0xf]
      %v1923 = vld [vmem:[#allocation2 + $0x10] sm:$0xf]
      %v1924 = vld [vmem:[#allocation2 + $0x18] sm:$0xf]
      %v1925 = vld [vmem:[#allocation2 + $0x20] sm:$0xf]
      %v1926 = vld [vmem:[#allocation2 + $0x28] sm:$0xf]
      %v1927 = vld [vmem:[#allocation2 + $0x30] sm:$0xf]
      %v1928 = vld [vmem:[#allocation2 + $0x38] sm:$0xf]
      %v1929 = vld [vmem:[#allocation2 + $0x40] sm:$0xf]
      %v1930 = vld [vmem:[%s566] sm:$0xff]
      %v1932 = vlaneseq
      %v1933 = vshrl.u32 %v1932, 7
      %v1934 = vsub.s32 0, %v1933
      %v1935 = vrot.slane %v1930, %v1934
      %v1936 = vlaneseq
      %v1937 = vshrl.u32 %v1936, 7
      %v1938 = vsub.s32 1, %v1937
      %v1939 = vrot.slane %v1930, %v1938
      %v1940 = vlaneseq
      %v1941 = vshrl.u32 %v1940, 7
      %v1942 = vsub.s32 2, %v1941
      %v1943 = vrot.slane %v1930, %v1942
      %v1944 = vlaneseq
      %v1945 = vshrl.u32 %v1944, 7
      %v1946 = vsub.s32 3, %v1945
      %v1947 = vrot.slane %v1930, %v1946
      %v1948 = vlaneseq
      %v1949 = vshrl.u32 %v1948, 7
      %v1950 = vsub.s32 4, %v1949
      %v1951 = vrot.slane %v1930, %v1950
      %v1952 = vlaneseq
      %v1953 = vshrl.u32 %v1952, 7
      %v1954 = vsub.s32 5, %v1953
      %v1955 = vrot.slane %v1930, %v1954
      %v1956 = vlaneseq
      %v1957 = vshrl.u32 %v1956, 7
      %v1958 = vsub.s32 6, %v1957
      %v1959 = vrot.slane %v1930, %v1958
      %v1960 = vlaneseq
      %v1961 = vshrl.u32 %v1960, 7
      %v1962 = vsub.s32 7, %v1961
      %v1963 = vrot.slane %v1930, %v1962
      %1964 = vrot.lane.b32.xlu0 %v1935, 97
      %v1965 = vpop.permute.xlu0 %1964
      %1966 = vrot.lane.b32.xlu0 %v1939, 97
      %v1967 = vpop.permute.xlu0 %1966
      %1968 = vrot.lane.b32.xlu0 %v1943, 97
      %v1969 = vpop.permute.xlu0 %1968
      %1970 = vrot.lane.b32.xlu0 %v1947, 97
      %v1971 = vpop.permute.xlu0 %1970
      %1972 = vrot.lane.b32.xlu0 %v1951, 97
      %v1973 = vpop.permute.xlu0 %1972
      %1974 = vrot.lane.b32.xlu0 %v1955, 97
      %v1975 = vpop.permute.xlu0 %1974
      %1976 = vrot.lane.b32.xlu0 %v1959, 97
      %v1977 = vpop.permute.xlu0 %1976
      %1978 = vrot.lane.b32.xlu0 %v1963, 97
      %v1979 = vpop.permute.xlu0 %1978
      %v1980 = vsel %vm617, %v1965, %v1967
      %v1981 = vsel %vm617, %v1967, %v1969
      %v1982 = vsel %vm617, %v1969, %v1971
      %v1983 = vsel %vm617, %v1971, %v1973
      %v1984 = vsel %vm617, %v1973, %v1975
      %v1985 = vsel %vm617, %v1975, %v1977
      %v1986 = vsel %vm617, %v1977, %v1979
      %v1996 = vmul.f32 %v1921, %v1965
      %v1997 = vmul.f32 %v1922, %v1980
      %v1998 = vmul.f32 %v1923, %v1981
      %v1999 = vmul.f32 %v1924, %v1982
      %v2000 = vmul.f32 %v1925, %v1983
      %v2001 = vmul.f32 %v1926, %v1984
      %v2002 = vmul.f32 %v1927, %v1985
      %v2003 = vmul.f32 %v1928, %v1986
      %v2004 = vmul.f32 %v1929, %v1979
      %2014 = vrot.lane.b32.xlu0 %v1996, 31
      %v2015 = vpop.permute.xlu0 %2014
      %2016 = vrot.lane.b32.xlu0 %v1997, 31
      %v2017 = vpop.permute.xlu0 %2016
      %2018 = vrot.lane.b32.xlu0 %v1998, 31
      %v2019 = vpop.permute.xlu0 %2018
      %2020 = vrot.lane.b32.xlu0 %v1999, 31
      %v2021 = vpop.permute.xlu0 %2020
      %2022 = vrot.lane.b32.xlu0 %v2000, 31
      %v2023 = vpop.permute.xlu0 %2022
      %2024 = vrot.lane.b32.xlu0 %v2001, 31
      %v2025 = vpop.permute.xlu0 %2024
      %2026 = vrot.lane.b32.xlu0 %v2002, 31
      %v2027 = vpop.permute.xlu0 %2026
      %2028 = vrot.lane.b32.xlu0 %v2003, 31
      %v2029 = vpop.permute.xlu0 %2028
      %2030 = vrot.lane.b32.xlu0 %v2004, 31
      %v2031 = vpop.permute.xlu0 %2030
      %v2032 = vsel %vm670, %v2015, %v2017
      %v2033 = vsel %vm670, %v2017, %v2019
      %v2034 = vsel %vm670, %v2019, %v2021
      %v2035 = vsel %vm670, %v2021, %v2023
      %v2036 = vsel %vm670, %v2023, %v2025
      %v2037 = vsel %vm670, %v2025, %v2027
      %v2038 = vsel %vm670, %v2027, %v2029
      %v2039 = vsel %vm670, %v2029, %v2031
      %2048 = vst [vmem:[#allocation3 + $0x40] sm:$0xf] %v2032
      %2049 = vst [vmem:[#allocation3 + $0x48] sm:$0xf] %v2033
      %2050 = vst [vmem:[#allocation3 + $0x50] sm:$0xf] %v2034
      %2051 = vst [vmem:[#allocation3 + $0x58] sm:$0xf] %v2035
      %2052 = vst [vmem:[#allocation3 + $0x60] sm:$0xf] %v2036
      %2053 = vst [vmem:[#allocation3 + $0x68] sm:$0xf] %v2037
      %2054 = vst [vmem:[#allocation3 + $0x70] sm:$0xf] %v2038
      %2055 = vst [vmem:[#allocation3 + $0x78] sm:$0xf] %v2039
      %v2056 = vld [vmem:[#allocation2] sm:$0xf]
      %v2057 = vld [vmem:[#allocation2 + $0x8] sm:$0xf]
      %v2058 = vld [vmem:[#allocation2 + $0x10] sm:$0xf]
      %v2059 = vld [vmem:[#allocation2 + $0x18] sm:$0xf]
      %v2060 = vld [vmem:[#allocation2 + $0x20] sm:$0xf]
      %v2061 = vld [vmem:[#allocation2 + $0x28] sm:$0xf]
      %v2062 = vld [vmem:[#allocation2 + $0x30] sm:$0xf]
      %v2063 = vld [vmem:[#allocation2 + $0x38] sm:$0xf]
      %v2064 = vld [vmem:[#allocation2 + $0x40] sm:$0xf]
      %v2065 = vld [vmem:[%s2] sm:$0xff]
      %v2067 = vlaneseq
      %v2068 = vshrl.u32 %v2067, 7
      %v2069 = vsub.s32 0, %v2068
      %v2070 = vrot.slane %v2065, %v2069
      %v2071 = vlaneseq
      %v2072 = vshrl.u32 %v2071, 7
      %v2073 = vsub.s32 1, %v2072
      %v2074 = vrot.slane %v2065, %v2073
      %v2075 = vlaneseq
      %v2076 = vshrl.u32 %v2075, 7
      %v2077 = vsub.s32 2, %v2076
      %v2078 = vrot.slane %v2065, %v2077
      %v2079 = vlaneseq
      %v2080 = vshrl.u32 %v2079, 7
      %v2081 = vsub.s32 3, %v2080
      %v2082 = vrot.slane %v2065, %v2081
      %v2083 = vlaneseq
      %v2084 = vshrl.u32 %v2083, 7
      %v2085 = vsub.s32 4, %v2084
      %v2086 = vrot.slane %v2065, %v2085
      %v2087 = vlaneseq
      %v2088 = vshrl.u32 %v2087, 7
      %v2089 = vsub.s32 5, %v2088
      %v2090 = vrot.slane %v2065, %v2089
      %v2091 = vlaneseq
      %v2092 = vshrl.u32 %v2091, 7
      %v2093 = vsub.s32 6, %v2092
      %v2094 = vrot.slane %v2065, %v2093
      %v2095 = vlaneseq
      %v2096 = vshrl.u32 %v2095, 7
      %v2097 = vsub.s32 7, %v2096
      %v2098 = vrot.slane %v2065, %v2097
      %2099 = vrot.lane.b32.xlu0 %v2070, 127
      %v2100 = vpop.permute.xlu0 %2099
      %2101 = vrot.lane.b32.xlu0 %v2074, 127
      %v2102 = vpop.permute.xlu0 %2101
      %2103 = vrot.lane.b32.xlu0 %v2078, 127
      %v2104 = vpop.permute.xlu0 %2103
      %2105 = vrot.lane.b32.xlu0 %v2082, 127
      %v2106 = vpop.permute.xlu0 %2105
      %2107 = vrot.lane.b32.xlu0 %v2086, 127
      %v2108 = vpop.permute.xlu0 %2107
      %2109 = vrot.lane.b32.xlu0 %v2090, 127
      %v2110 = vpop.permute.xlu0 %2109
      %2111 = vrot.lane.b32.xlu0 %v2094, 127
      %v2112 = vpop.permute.xlu0 %2111
      %2113 = vrot.lane.b32.xlu0 %v2098, 127
      %v2114 = vpop.permute.xlu0 %2113
      %v2115 = vsel %vm754, %v2100, %v2102
      %v2116 = vsel %vm754, %v2102, %v2104
      %v2117 = vsel %vm754, %v2104, %v2106
      %v2118 = vsel %vm754, %v2106, %v2108
      %v2119 = vsel %vm754, %v2108, %v2110
      %v2120 = vsel %vm754, %v2110, %v2112
      %v2121 = vsel %vm754, %v2112, %v2114
      %v2131 = vmul.f32 %v2056, %v2100
      %v2132 = vmul.f32 %v2057, %v2115
      %v2133 = vmul.f32 %v2058, %v2116
      %v2134 = vmul.f32 %v2059, %v2117
      %v2135 = vmul.f32 %v2060, %v2118
      %v2136 = vmul.f32 %v2061, %v2119
      %v2137 = vmul.f32 %v2062, %v2120
      %v2138 = vmul.f32 %v2063, %v2121
      %v2139 = vmul.f32 %v2064, %v2114
      %v2149 = vrot.slane %v2131, 4
      %v2150 = vrot.slane %v2132, 4
      %v2151 = vrot.slane %v2133, 4
      %v2152 = vrot.slane %v2134, 4
      %v2153 = vrot.slane %v2135, 4
      %v2154 = vrot.slane %v2136, 4
      %v2155 = vrot.slane %v2137, 4
      %v2156 = vrot.slane %v2138, 4
      %v2157 = vrot.slane %v2139, 4
      %2158 = vrot.lane.b32.xlu0 %v2149, 1
      %v2159 = vpop.permute.xlu0 %2158
      %2160 = vrot.lane.b32.xlu0 %v2150, 1
      %v2161 = vpop.permute.xlu0 %2160
      %2162 = vrot.lane.b32.xlu0 %v2151, 1
      %v2163 = vpop.permute.xlu0 %2162
      %2164 = vrot.lane.b32.xlu0 %v2152, 1
      %v2165 = vpop.permute.xlu0 %2164
      %2166 = vrot.lane.b32.xlu0 %v2153, 1
      %v2167 = vpop.permute.xlu0 %2166
      %2168 = vrot.lane.b32.xlu0 %v2154, 1
      %v2169 = vpop.permute.xlu0 %2168
      %2170 = vrot.lane.b32.xlu0 %v2155, 1
      %v2171 = vpop.permute.xlu0 %2170
      %2172 = vrot.lane.b32.xlu0 %v2156, 1
      %v2173 = vpop.permute.xlu0 %2172
      %2174 = vrot.lane.b32.xlu0 %v2157, 1
      %v2175 = vpop.permute.xlu0 %2174
      %v2176 = vsel %vm816, %v2159, %v2161
      %v2177 = vsel %vm816, %v2161, %v2163
      %v2178 = vsel %vm816, %v2163, %v2165
      %v2179 = vsel %vm816, %v2165, %v2167
      %v2180 = vsel %vm816, %v2167, %v2169
      %v2181 = vsel %vm816, %v2169, %v2171
      %v2182 = vsel %vm816, %v2171, %v2173
      %v2183 = vsel %vm816, %v2173, %v2175
      %2192 = vst [vmem:[#allocation3 + $0x40] sm:$0xf0] %v2176
      %2193 = vst [vmem:[#allocation3 + $0x48] sm:$0xf0] %v2177
      %2194 = vst [vmem:[#allocation3 + $0x50] sm:$0xf0] %v2178
      %2195 = vst [vmem:[#allocation3 + $0x58] sm:$0xf0] %v2179
      %2196 = vst [vmem:[#allocation3 + $0x60] sm:$0xf0] %v2180
      %2197 = vst [vmem:[#allocation3 + $0x68] sm:$0xf0] %v2181
      %2198 = vst [vmem:[#allocation3 + $0x70] sm:$0xf0] %v2182
      %2199 = vst [vmem:[#allocation3 + $0x78] sm:$0xf0] %v2183
      %v2200 = vld [vmem:[#allocation2 + $0x8] sm:$0xf]
      %v2201 = vld [vmem:[#allocation2 + $0x10] sm:$0xf]
      %v2202 = vld [vmem:[#allocation2 + $0x18] sm:$0xf]
      %v2203 = vld [vmem:[#allocation2 + $0x20] sm:$0xf]
      %v2204 = vld [vmem:[#allocation2 + $0x28] sm:$0xf]
      %v2205 = vld [vmem:[#allocation2 + $0x30] sm:$0xf]
      %v2206 = vld [vmem:[#allocation2 + $0x38] sm:$0xf]
      %v2207 = vld [vmem:[#allocation2 + $0x40] sm:$0xf]
      %2208 = vst [vmem:[#allocation3 + $0x80] sm:$0xf] %v2200
      %2209 = vst [vmem:[#allocation3 + $0x88] sm:$0xf] %v2201
      %2210 = vst [vmem:[#allocation3 + $0x90] sm:$0xf] %v2202
      %2211 = vst [vmem:[#allocation3 + $0x98] sm:$0xf] %v2203
      %2212 = vst [vmem:[#allocation3 + $0xa0] sm:$0xf] %v2204
      %2213 = vst [vmem:[#allocation3 + $0xa8] sm:$0xf] %v2205
      %2214 = vst [vmem:[#allocation3 + $0xb0] sm:$0xf] %v2206
      %2215 = vst [vmem:[#allocation3 + $0xb8] sm:$0xf] %v2207
      %v2216 = vld [vmem:[#allocation2 + $0x8] sm:$0xf]
      %v2217 = vld [vmem:[#allocation2 + $0x10] sm:$0xf]
      %v2218 = vld [vmem:[#allocation2 + $0x18] sm:$0xf]
      %v2219 = vld [vmem:[#allocation2 + $0x20] sm:$0xf]
      %v2220 = vld [vmem:[#allocation2 + $0x28] sm:$0xf]
      %v2221 = vld [vmem:[#allocation2 + $0x30] sm:$0xf]
      %v2222 = vld [vmem:[#allocation2 + $0x38] sm:$0xf]
      %v2223 = vld [vmem:[#allocation2 + $0x40] sm:$0xf]
      %v2224 = vld [vmem:[#allocation2 + $0x48] sm:$0xf]
      %v2225 = vld [vmem:[%s566] sm:$0xff]
      %v2227 = vlaneseq
      %v2228 = vshrl.u32 %v2227, 7
      %v2229 = vsub.s32 0, %v2228
      %v2230 = vrot.slane %v2225, %v2229
      %v2231 = vlaneseq
      %v2232 = vshrl.u32 %v2231, 7
      %v2233 = vsub.s32 1, %v2232
      %v2234 = vrot.slane %v2225, %v2233
      %v2235 = vlaneseq
      %v2236 = vshrl.u32 %v2235, 7
      %v2237 = vsub.s32 2, %v2236
      %v2238 = vrot.slane %v2225, %v2237
      %v2239 = vlaneseq
      %v2240 = vshrl.u32 %v2239, 7
      %v2241 = vsub.s32 3, %v2240
      %v2242 = vrot.slane %v2225, %v2241
      %v2243 = vlaneseq
      %v2244 = vshrl.u32 %v2243, 7
      %v2245 = vsub.s32 4, %v2244
      %v2246 = vrot.slane %v2225, %v2245
      %v2247 = vlaneseq
      %v2248 = vshrl.u32 %v2247, 7
      %v2249 = vsub.s32 5, %v2248
      %v2250 = vrot.slane %v2225, %v2249
      %v2251 = vlaneseq
      %v2252 = vshrl.u32 %v2251, 7
      %v2253 = vsub.s32 6, %v2252
      %v2254 = vrot.slane %v2225, %v2253
      %v2255 = vlaneseq
      %v2256 = vshrl.u32 %v2255, 7
      %v2257 = vsub.s32 7, %v2256
      %v2258 = vrot.slane %v2225, %v2257
      %2259 = vrot.lane.b32.xlu0 %v2230, 1
      %v2260 = vpop.permute.xlu0 %2259
      %2261 = vrot.lane.b32.xlu0 %v2234, 1
      %v2262 = vpop.permute.xlu0 %2261
      %2263 = vrot.lane.b32.xlu0 %v2238, 1
      %v2264 = vpop.permute.xlu0 %2263
      %2265 = vrot.lane.b32.xlu0 %v2242, 1
      %v2266 = vpop.permute.xlu0 %2265
      %2267 = vrot.lane.b32.xlu0 %v2246, 1
      %v2268 = vpop.permute.xlu0 %2267
      %2269 = vrot.lane.b32.xlu0 %v2250, 1
      %v2270 = vpop.permute.xlu0 %2269
      %2271 = vrot.lane.b32.xlu0 %v2254, 1
      %v2272 = vpop.permute.xlu0 %2271
      %2273 = vrot.lane.b32.xlu0 %v2258, 1
      %v2274 = vpop.permute.xlu0 %2273
      %v2275 = vsel %vm816, %v2260, %v2262
      %v2276 = vsel %vm816, %v2262, %v2264
      %v2277 = vsel %vm816, %v2264, %v2266
      %v2278 = vsel %vm816, %v2266, %v2268
      %v2279 = vsel %vm816, %v2268, %v2270
      %v2280 = vsel %vm816, %v2270, %v2272
      %v2281 = vsel %vm816, %v2272, %v2274
      %v2291 = vmul.f32 %v2216, %v2260
      %v2292 = vmul.f32 %v2217, %v2275
      %v2293 = vmul.f32 %v2218, %v2276
      %v2294 = vmul.f32 %v2219, %v2277
      %v2295 = vmul.f32 %v2220, %v2278
      %v2296 = vmul.f32 %v2221, %v2279
      %v2297 = vmul.f32 %v2222, %v2280
      %v2298 = vmul.f32 %v2223, %v2281
      %v2299 = vmul.f32 %v2224, %v2274
      %v2309 = vrot.slane %v2291, 4
      %v2310 = vrot.slane %v2292, 4
      %v2311 = vrot.slane %v2293, 4
      %v2312 = vrot.slane %v2294, 4
      %v2313 = vrot.slane %v2295, 4
      %v2314 = vrot.slane %v2296, 4
      %v2315 = vrot.slane %v2297, 4
      %v2316 = vrot.slane %v2298, 4
      %v2317 = vrot.slane %v2299, 4
      %2318 = vrot.lane.b32.xlu0 %v2309, 127
      %v2319 = vpop.permute.xlu0 %2318
      %2320 = vrot.lane.b32.xlu0 %v2310, 127
      %v2321 = vpop.permute.xlu0 %2320
      %2322 = vrot.lane.b32.xlu0 %v2311, 127
      %v2323 = vpop.permute.xlu0 %2322
      %2324 = vrot.lane.b32.xlu0 %v2312, 127
      %v2325 = vpop.permute.xlu0 %2324
      %2326 = vrot.lane.b32.xlu0 %v2313, 127
      %v2327 = vpop.permute.xlu0 %2326
      %2328 = vrot.lane.b32.xlu0 %v2314, 127
      %v2329 = vpop.permute.xlu0 %2328
      %2330 = vrot.lane.b32.xlu0 %v2315, 127
      %v2331 = vpop.permute.xlu0 %2330
      %2332 = vrot.lane.b32.xlu0 %v2316, 127
      %v2333 = vpop.permute.xlu0 %2332
      %2334 = vrot.lane.b32.xlu0 %v2317, 127
      %v2335 = vpop.permute.xlu0 %2334
      %v2336 = vsel %vm754, %v2319, %v2321
      %v2337 = vsel %vm754, %v2321, %v2323
      %v2338 = vsel %vm754, %v2323, %v2325
      %v2339 = vsel %vm754, %v2325, %v2327
      %v2340 = vsel %vm754, %v2327, %v2329
      %v2341 = vsel %vm754, %v2329, %v2331
      %v2342 = vsel %vm754, %v2331, %v2333
      %v2343 = vsel %vm754, %v2333, %v2335
      %2352 = vst [vmem:[#allocation3 + $0x80] sm:$0xf0] %v2336
      %2353 = vst [vmem:[#allocation3 + $0x88] sm:$0xf0] %v2337
      %2354 = vst [vmem:[#allocation3 + $0x90] sm:$0xf0] %v2338
      %2355 = vst [vmem:[#allocation3 + $0x98] sm:$0xf0] %v2339
      %2356 = vst [vmem:[#allocation3 + $0xa0] sm:$0xf0] %v2340
      %2357 = vst [vmem:[#allocation3 + $0xa8] sm:$0xf0] %v2341
      %2358 = vst [vmem:[#allocation3 + $0xb0] sm:$0xf0] %v2342
      %2359 = vst [vmem:[#allocation3 + $0xb8] sm:$0xf0] %v2343
      %v2360 = vld [vmem:[#allocation2 + $0x8] sm:$0xf]
      %v2361 = vld [vmem:[#allocation2 + $0x10] sm:$0xf]
      %v2362 = vld [vmem:[#allocation2 + $0x18] sm:$0xf]
      %v2363 = vld [vmem:[#allocation2 + $0x20] sm:$0xf]
      %v2364 = vld [vmem:[#allocation2 + $0x28] sm:$0xf]
      %v2365 = vld [vmem:[#allocation2 + $0x30] sm:$0xf]
      %v2366 = vld [vmem:[#allocation2 + $0x38] sm:$0xf]
      %v2367 = vld [vmem:[#allocation2 + $0x40] sm:$0xf]
      %v2368 = vld [vmem:[#allocation2 + $0x48] sm:$0xf]
      %v2369 = vld [vmem:[%s2] sm:$0xff]
      %v2371 = vlaneseq
      %v2372 = vshrl.u32 %v2371, 7
      %v2373 = vsub.s32 0, %v2372
      %v2374 = vrot.slane %v2369, %v2373
      %v2375 = vlaneseq
      %v2376 = vshrl.u32 %v2375, 7
      %v2377 = vsub.s32 1, %v2376
      %v2378 = vrot.slane %v2369, %v2377
      %v2379 = vlaneseq
      %v2380 = vshrl.u32 %v2379, 7
      %v2381 = vsub.s32 2, %v2380
      %v2382 = vrot.slane %v2369, %v2381
      %v2383 = vlaneseq
      %v2384 = vshrl.u32 %v2383, 7
      %v2385 = vsub.s32 3, %v2384
      %v2386 = vrot.slane %v2369, %v2385
      %v2387 = vlaneseq
      %v2388 = vshrl.u32 %v2387, 7
      %v2389 = vsub.s32 4, %v2388
      %v2390 = vrot.slane %v2369, %v2389
      %v2391 = vlaneseq
      %v2392 = vshrl.u32 %v2391, 7
      %v2393 = vsub.s32 5, %v2392
      %v2394 = vrot.slane %v2369, %v2393
      %v2395 = vlaneseq
      %v2396 = vshrl.u32 %v2395, 7
      %v2397 = vsub.s32 6, %v2396
      %v2398 = vrot.slane %v2369, %v2397
      %v2399 = vlaneseq
      %v2400 = vshrl.u32 %v2399, 7
      %v2401 = vsub.s32 7, %v2400
      %v2402 = vrot.slane %v2369, %v2401
      %2403 = vrot.lane.b32.xlu0 %v2374, 31
      %v2404 = vpop.permute.xlu0 %2403
      %2405 = vrot.lane.b32.xlu0 %v2378, 31
      %v2406 = vpop.permute.xlu0 %2405
      %2407 = vrot.lane.b32.xlu0 %v2382, 31
      %v2408 = vpop.permute.xlu0 %2407
      %2409 = vrot.lane.b32.xlu0 %v2386, 31
      %v2410 = vpop.permute.xlu0 %2409
      %2411 = vrot.lane.b32.xlu0 %v2390, 31
      %v2412 = vpop.permute.xlu0 %2411
      %2413 = vrot.lane.b32.xlu0 %v2394, 31
      %v2414 = vpop.permute.xlu0 %2413
      %2415 = vrot.lane.b32.xlu0 %v2398, 31
      %v2416 = vpop.permute.xlu0 %2415
      %2417 = vrot.lane.b32.xlu0 %v2402, 31
      %v2418 = vpop.permute.xlu0 %2417
      %v2419 = vsel %vm670, %v2404, %v2406
      %v2420 = vsel %vm670, %v2406, %v2408
      %v2421 = vsel %vm670, %v2408, %v2410
      %v2422 = vsel %vm670, %v2410, %v2412
      %v2423 = vsel %vm670, %v2412, %v2414
      %v2424 = vsel %vm670, %v2414, %v2416
      %v2425 = vsel %vm670, %v2416, %v2418
      %v2435 = vmul.f32 %v2360, %v2404
      %v2436 = vmul.f32 %v2361, %v2419
      %v2437 = vmul.f32 %v2362, %v2420
      %v2438 = vmul.f32 %v2363, %v2421
      %v2439 = vmul.f32 %v2364, %v2422
      %v2440 = vmul.f32 %v2365, %v2423
      %v2441 = vmul.f32 %v2366, %v2424
      %v2442 = vmul.f32 %v2367, %v2425
      %v2443 = vmul.f32 %v2368, %v2418
      %2453 = vrot.lane.b32.xlu0 %v2435, 97
      %v2454 = vpop.permute.xlu0 %2453
      %2455 = vrot.lane.b32.xlu0 %v2436, 97
      %v2456 = vpop.permute.xlu0 %2455
      %2457 = vrot.lane.b32.xlu0 %v2437, 97
      %v2458 = vpop.permute.xlu0 %2457
      %2459 = vrot.lane.b32.xlu0 %v2438, 97
      %v2460 = vpop.permute.xlu0 %2459
      %2461 = vrot.lane.b32.xlu0 %v2439, 97
      %v2462 = vpop.permute.xlu0 %2461
      %2463 = vrot.lane.b32.xlu0 %v2440, 97
      %v2464 = vpop.permute.xlu0 %2463
      %2465 = vrot.lane.b32.xlu0 %v2441, 97
      %v2466 = vpop.permute.xlu0 %2465
      %2467 = vrot.lane.b32.xlu0 %v2442, 97
      %v2468 = vpop.permute.xlu0 %2467
      %2469 = vrot.lane.b32.xlu0 %v2443, 97
      %v2470 = vpop.permute.xlu0 %2469
      %v2471 = vsel %vm617, %v2454, %v2456
      %v2472 = vsel %vm617, %v2456, %v2458
      %v2473 = vsel %vm617, %v2458, %v2460
      %v2474 = vsel %vm617, %v2460, %v2462
      %v2475 = vsel %vm617, %v2462, %v2464
      %v2476 = vsel %vm617, %v2464, %v2466
      %v2477 = vsel %vm617, %v2466, %v2468
      %v2478 = vsel %vm617, %v2468, %v2470
      %2487 = vst [vmem:[#allocation3 + $0xc0] sm:$0xf] %v2471
      %2488 = vst [vmem:[#allocation3 + $0xc8] sm:$0xf] %v2472
      %2489 = vst [vmem:[#allocation3 + $0xd0] sm:$0xf] %v2473
      %2490 = vst [vmem:[#allocation3 + $0xd8] sm:$0xf] %v2474
      %2491 = vst [vmem:[#allocation3 + $0xe0] sm:$0xf] %v2475
      %2492 = vst [vmem:[#allocation3 + $0xe8] sm:$0xf] %v2476
      %2493 = vst [vmem:[#allocation3 + $0xf0] sm:$0xf] %v2477
      %2494 = vst [vmem:[#allocation3 + $0xf8] sm:$0xf] %v2478
      %v2495 = vld [vmem:[#allocation2 + $0x8] sm:$0xf]
      %v2496 = vld [vmem:[#allocation2 + $0x10] sm:$0xf]
      %v2497 = vld [vmem:[#allocation2 + $0x18] sm:$0xf]
      %v2498 = vld [vmem:[#allocation2 + $0x20] sm:$0xf]
      %v2499 = vld [vmem:[#allocation2 + $0x28] sm:$0xf]
      %v2500 = vld [vmem:[#allocation2 + $0x30] sm:$0xf]
      %v2501 = vld [vmem:[#allocation2 + $0x38] sm:$0xf]
      %v2502 = vld [vmem:[#allocation2 + $0x40] sm:$0xf]
      %v2503 = vld [vmem:[#allocation2 + $0x48] sm:$0xf]
      %v2513 = vrot.slane %v2495, 4
      %v2514 = vrot.slane %v2496, 4
      %v2515 = vrot.slane %v2497, 4
      %v2516 = vrot.slane %v2498, 4
      %v2517 = vrot.slane %v2499, 4
      %v2518 = vrot.slane %v2500, 4
      %v2519 = vrot.slane %v2501, 4
      %v2520 = vrot.slane %v2502, 4
      %v2521 = vrot.slane %v2503, 4
      %2522 = vrot.lane.b32.xlu0 %v2513, 96
      %v2523 = vpop.permute.xlu0 %2522
      %2524 = vrot.lane.b32.xlu0 %v2514, 96
      %v2525 = vpop.permute.xlu0 %2524
      %2526 = vrot.lane.b32.xlu0 %v2515, 96
      %v2527 = vpop.permute.xlu0 %2526
      %2528 = vrot.lane.b32.xlu0 %v2516, 96
      %v2529 = vpop.permute.xlu0 %2528
      %2530 = vrot.lane.b32.xlu0 %v2517, 96
      %v2531 = vpop.permute.xlu0 %2530
      %2532 = vrot.lane.b32.xlu0 %v2518, 96
      %v2533 = vpop.permute.xlu0 %2532
      %2534 = vrot.lane.b32.xlu0 %v2519, 96
      %v2535 = vpop.permute.xlu0 %2534
      %2536 = vrot.lane.b32.xlu0 %v2520, 96
      %v2537 = vpop.permute.xlu0 %2536
      %2538 = vrot.lane.b32.xlu0 %v2521, 96
      %v2539 = vpop.permute.xlu0 %2538
      %v2540 = vsel %vm1181, %v2523, %v2525
      %v2541 = vsel %vm1181, %v2525, %v2527
      %v2542 = vsel %vm1181, %v2527, %v2529
      %v2543 = vsel %vm1181, %v2529, %v2531
      %v2544 = vsel %vm1181, %v2531, %v2533
      %v2545 = vsel %vm1181, %v2533, %v2535
      %v2546 = vsel %vm1181, %v2535, %v2537
      %v2547 = vsel %vm1181, %v2537, %v2539
      %2556 = vst [vmem:[#allocation3 + $0xc0] sm:$0xf0] %v2540
      %2557 = vst [vmem:[#allocation3 + $0xc8] sm:$0xf0] %v2541
      %2558 = vst [vmem:[#allocation3 + $0xd0] sm:$0xf0] %v2542
      %2559 = vst [vmem:[#allocation3 + $0xd8] sm:$0xf0] %v2543
      %2560 = vst [vmem:[#allocation3 + $0xe0] sm:$0xf0] %v2544
      %2561 = vst [vmem:[#allocation3 + $0xe8] sm:$0xf0] %v2545
      %2562 = vst [vmem:[#allocation3 + $0xf0] sm:$0xf0] %v2546
      %2563 = vst [vmem:[#allocation3 + $0xf8] sm:$0xf0] %v2547
      %v2564 = vld [vmem:[#allocation2 + $0x8] sm:$0xf]
      %v2565 = vld [vmem:[#allocation2 + $0x10] sm:$0xf]
      %v2566 = vld [vmem:[#allocation2 + $0x18] sm:$0xf]
      %v2567 = vld [vmem:[#allocation2 + $0x20] sm:$0xf]
      %v2568 = vld [vmem:[#allocation2 + $0x28] sm:$0xf]
      %v2569 = vld [vmem:[#allocation2 + $0x30] sm:$0xf]
      %v2570 = vld [vmem:[#allocation2 + $0x38] sm:$0xf]
      %v2571 = vld [vmem:[#allocation2 + $0x40] sm:$0xf]
      %v2572 = vld [vmem:[#allocation2 + $0x48] sm:$0xf]
      %v2573 = vld [vmem:[%s566] sm:$0xff]
      %v2575 = vlaneseq
      %v2576 = vshrl.u32 %v2575, 7
      %v2577 = vsub.s32 0, %v2576
      %v2578 = vrot.slane %v2573, %v2577
      %v2579 = vlaneseq
      %v2580 = vshrl.u32 %v2579, 7
      %v2581 = vsub.s32 1, %v2580
      %v2582 = vrot.slane %v2573, %v2581
      %v2583 = vlaneseq
      %v2584 = vshrl.u32 %v2583, 7
      %v2585 = vsub.s32 2, %v2584
      %v2586 = vrot.slane %v2573, %v2585
      %v2587 = vlaneseq
      %v2588 = vshrl.u32 %v2587, 7
      %v2589 = vsub.s32 3, %v2588
      %v2590 = vrot.slane %v2573, %v2589
      %v2591 = vlaneseq
      %v2592 = vshrl.u32 %v2591, 7
      %v2593 = vsub.s32 4, %v2592
      %v2594 = vrot.slane %v2573, %v2593
      %v2595 = vlaneseq
      %v2596 = vshrl.u32 %v2595, 7
      %v2597 = vsub.s32 5, %v2596
      %v2598 = vrot.slane %v2573, %v2597
      %v2599 = vlaneseq
      %v2600 = vshrl.u32 %v2599, 7
      %v2601 = vsub.s32 6, %v2600
      %v2602 = vrot.slane %v2573, %v2601
      %v2603 = vlaneseq
      %v2604 = vshrl.u32 %v2603, 7
      %v2605 = vsub.s32 7, %v2604
      %v2606 = vrot.slane %v2573, %v2605
      %2607 = vrot.lane.b32.xlu0 %v2578, 33
      %v2608 = vpop.permute.xlu0 %2607
      %2609 = vrot.lane.b32.xlu0 %v2582, 33
      %v2610 = vpop.permute.xlu0 %2609
      %2611 = vrot.lane.b32.xlu0 %v2586, 33
      %v2612 = vpop.permute.xlu0 %2611
      %2613 = vrot.lane.b32.xlu0 %v2590, 33
      %v2614 = vpop.permute.xlu0 %2613
      %2615 = vrot.lane.b32.xlu0 %v2594, 33
      %v2616 = vpop.permute.xlu0 %2615
      %2617 = vrot.lane.b32.xlu0 %v2598, 33
      %v2618 = vpop.permute.xlu0 %2617
      %2619 = vrot.lane.b32.xlu0 %v2602, 33
      %v2620 = vpop.permute.xlu0 %2619
      %2621 = vrot.lane.b32.xlu0 %v2606, 33
      %v2622 = vpop.permute.xlu0 %2621
      %v2623 = vsel %vm462, %v2608, %v2610
      %v2624 = vsel %vm462, %v2610, %v2612
      %v2625 = vsel %vm462, %v2612, %v2614
      %v2626 = vsel %vm462, %v2614, %v2616
      %v2627 = vsel %vm462, %v2616, %v2618
      %v2628 = vsel %vm462, %v2618, %v2620
      %v2629 = vsel %vm462, %v2620, %v2622
      %v2639 = vmul.f32 %v2564, %v2608
      %v2640 = vmul.f32 %v2565, %v2623
      %v2641 = vmul.f32 %v2566, %v2624
      %v2642 = vmul.f32 %v2567, %v2625
      %v2643 = vmul.f32 %v2568, %v2626
      %v2644 = vmul.f32 %v2569, %v2627
      %v2645 = vmul.f32 %v2570, %v2628
      %v2646 = vmul.f32 %v2571, %v2629
      %v2647 = vmul.f32 %v2572, %v2622
      %2657 = vrot.lane.b32.xlu0 %v2639, 95
      %v2658 = vpop.permute.xlu0 %2657
      %2659 = vrot.lane.b32.xlu0 %v2640, 95
      %v2660 = vpop.permute.xlu0 %2659
      %2661 = vrot.lane.b32.xlu0 %v2641, 95
      %v2662 = vpop.permute.xlu0 %2661
      %2663 = vrot.lane.b32.xlu0 %v2642, 95
      %v2664 = vpop.permute.xlu0 %2663
      %2665 = vrot.lane.b32.xlu0 %v2643, 95
      %v2666 = vpop.permute.xlu0 %2665
      %2667 = vrot.lane.b32.xlu0 %v2644, 95
      %v2668 = vpop.permute.xlu0 %2667
      %2669 = vrot.lane.b32.xlu0 %v2645, 95
      %v2670 = vpop.permute.xlu0 %2669
      %2671 = vrot.lane.b32.xlu0 %v2646, 95
      %v2672 = vpop.permute.xlu0 %2671
      %2673 = vrot.lane.b32.xlu0 %v2647, 95
      %v2674 = vpop.permute.xlu0 %2673
      %v2675 = vsel %vm409, %v2658, %v2660
      %v2676 = vsel %vm409, %v2660, %v2662
      %v2677 = vsel %vm409, %v2662, %v2664
      %v2678 = vsel %vm409, %v2664, %v2666
      %v2679 = vsel %vm409, %v2666, %v2668
      %v2680 = vsel %vm409, %v2668, %v2670
      %v2681 = vsel %vm409, %v2670, %v2672
      %v2682 = vsel %vm409, %v2672, %v2674
      %2691 = vst [vmem:[#allocation3 + $0x100] sm:$0xf] %v2675
      %2692 = vst [vmem:[#allocation3 + $0x108] sm:$0xf] %v2676
      %2693 = vst [vmem:[#allocation3 + $0x110] sm:$0xf] %v2677
      %2694 = vst [vmem:[#allocation3 + $0x118] sm:$0xf] %v2678
      %2695 = vst [vmem:[#allocation3 + $0x120] sm:$0xf] %v2679
      %2696 = vst [vmem:[#allocation3 + $0x128] sm:$0xf] %v2680
      %2697 = vst [vmem:[#allocation3 + $0x130] sm:$0xf] %v2681
      %2698 = vst [vmem:[#allocation3 + $0x138] sm:$0xf] %v2682
      %v2699 = vld [vmem:[%s5] sm:$0xff]
      %v2700 = vld [vmem:[#allocation3] sm:$0xff]
      %v2701 = vld [vmem:[#allocation3 + $0x8] sm:$0xff]
      %v2702 = vld [vmem:[#allocation3 + $0x10] sm:$0xff]
      %v2703 = vld [vmem:[#allocation3 + $0x18] sm:$0xff]
      %v2704 = vld [vmem:[#allocation3 + $0x20] sm:$0xff]
      %v2705 = vld [vmem:[#allocation3 + $0x28] sm:$0xff]
      %v2706 = vld [vmem:[#allocation3 + $0x30] sm:$0xff]
      %v2707 = vld [vmem:[#allocation3 + $0x38] sm:$0xff]
      %v2708 = vld [vmem:[#allocation3 + $0x40] sm:$0xff]
      %v2709 = vld [vmem:[#allocation3 + $0x48] sm:$0xff]
      %v2710 = vld [vmem:[#allocation3 + $0x50] sm:$0xff]
      %v2711 = vld [vmem:[#allocation3 + $0x58] sm:$0xff]
      %v2712 = vld [vmem:[#allocation3 + $0x60] sm:$0xff]
      %v2713 = vld [vmem:[#allocation3 + $0x68] sm:$0xff]
      %v2714 = vld [vmem:[#allocation3 + $0x70] sm:$0xff]
      %v2715 = vld [vmem:[#allocation3 + $0x78] sm:$0xff]
      %v2716 = vld [vmem:[#allocation3 + $0x80] sm:$0xff]
      %v2717 = vld [vmem:[#allocation3 + $0x88] sm:$0xff]
      %v2718 = vld [vmem:[#allocation3 + $0x90] sm:$0xff]
      %v2719 = vld [vmem:[#allocation3 + $0x98] sm:$0xff]
      %v2720 = vld [vmem:[#allocation3 + $0xa0] sm:$0xff]
      %v2721 = vld [vmem:[#allocation3 + $0xa8] sm:$0xff]
      %v2722 = vld [vmem:[#allocation3 + $0xb0] sm:$0xff]
      %v2723 = vld [vmem:[#allocation3 + $0xb8] sm:$0xff]
      %v2724 = vld [vmem:[#allocation3 + $0xc0] sm:$0xff]
      %v2725 = vld [vmem:[#allocation3 + $0xc8] sm:$0xff]
      %v2726 = vld [vmem:[#allocation3 + $0xd0] sm:$0xff]
      %v2727 = vld [vmem:[#allocation3 + $0xd8] sm:$0xff]
      %v2728 = vld [vmem:[#allocation3 + $0xe0] sm:$0xff]
      %v2729 = vld [vmem:[#allocation3 + $0xe8] sm:$0xff]
      %v2730 = vld [vmem:[#allocation3 + $0xf0] sm:$0xff]
      %v2731 = vld [vmem:[#allocation3 + $0xf8] sm:$0xff]
      %v2732 = vld [vmem:[#allocation3 + $0x100] sm:$0xf]
      %v2733 = vld [vmem:[#allocation3 + $0x108] sm:$0xf]
      %v2734 = vld [vmem:[#allocation3 + $0x110] sm:$0xf]
      %v2735 = vld [vmem:[#allocation3 + $0x118] sm:$0xf]
      %v2736 = vld [vmem:[#allocation3 + $0x120] sm:$0xf]
      %v2737 = vld [vmem:[#allocation3 + $0x128] sm:$0xf]
      %v2738 = vld [vmem:[#allocation3 + $0x130] sm:$0xf]
      %v2739 = vld [vmem:[#allocation3 + $0x138] sm:$0xf]
      %v2740 = vld [vmem:[%s6] sm:$0xff]
      %2742 = vset.pattern.permute.xlu0 0
      %2743 = vperm.xlu0 %2742, %v2740
      %v2744 = vpop.permute.xlu0 %2743
      %v2747 = vsel %vm1388, %v2699, 0
      %v2750 = vsel %vm1392, %v2732, 0
      %v2753 = vsel %vm1392, %v2733, 0
      %v2756 = vsel %vm1392, %v2734, 0
      %v2759 = vsel %vm1392, %v2735, 0
      %v2762 = vsel %vm1392, %v2736, 0
      %v2765 = vsel %vm1392, %v2737, 0
      %v2768 = vsel %vm1392, %v2738, 0
      %v2771 = vsel %vm1392, %v2739, 0
      %2773 = vmatprep.subr.mxu0 0.0
      %2774 = vmatpush1.msra.mxu0 0.0
      %2775 = vmatprep.subr.mxu0 0.0
      %2776 = vmatpush1.msra.mxu0 0.0
      %2777 = vmatprep.subr.mxu0 0.0
      %2778 = vmatpush1.msra.mxu0 0.0
      %2779 = vmatprep.subr.mxu0 0.0
      %2780 = vmatpush1.msra.mxu0 0.0
      %2781 = vmatprep.subr.mxu0 0.0
      %2782 = vmatpush1.msra.mxu0 0.0
      %2783 = vmatprep.subr.mxu0 0.0
      %2784 = vmatpush1.msra.mxu0 0.0
      %2785 = vmatprep.subr.mxu0 0.0
      %2786 = vmatpush1.msra.mxu0 0.0
      %2787 = vmatprep.subr.mxu0 0.0
      %2788 = vmatpush1.msra.mxu0 0.0
      %2789 = vmatprep.subr.mxu0 0.0
      %2790 = vmatpush1.msra.mxu0 0.0
      %2791 = vmatprep.subr.mxu0 0.0
      %2792 = vmatpush1.msra.mxu0 0.0
      %2793 = vmatprep.subr.mxu0 0.0
      %2794 = vmatpush1.msra.mxu0 0.0
      %2795 = vmatprep.subr.mxu0 %v2753
      %2796 = vmatpush1.msra.mxu0 %v2750
      %2797 = vmatprep.subr.mxu0 %v2725
      %2798 = vmatpush1.msra.mxu0 %v2724
      %2799 = vmatprep.subr.mxu0 %v2717
      %2800 = vmatpush1.msra.mxu0 %v2716
      %2801 = vmatprep.subr.mxu0 %v2709
      %2802 = vmatpush1.msra.mxu0 %v2708
      %2803 = vmatprep.subr.mxu0 %v2701
      %2804 = vmatpush1.msra.mxu0 %v2700
      %2805 = vmatprep.subr.mxu0 0.0
      %2806 = vmatpush2.msra.mxu0 0.0
      %2807 = vmatprep.subr.mxu0 0.0
      %2808 = vmatpush2.msra.mxu0 0.0
      %2809 = vmatprep.subr.mxu0 0.0
      %2810 = vmatpush2.msra.mxu0 0.0
      %2811 = vmatprep.subr.mxu0 0.0
      %2812 = vmatpush2.msra.mxu0 0.0
      %2813 = vmatprep.subr.mxu0 0.0
      %2814 = vmatpush2.msra.mxu0 0.0
      %2815 = vmatprep.subr.mxu0 0.0
      %2816 = vmatpush2.msra.mxu0 0.0
      %2817 = vmatprep.subr.mxu0 0.0
      %2818 = vmatpush2.msra.mxu0 0.0
      %2819 = vmatprep.subr.mxu0 0.0
      %2820 = vmatpush2.msra.mxu0 0.0
      %2821 = vmatprep.subr.mxu0 0.0
      %2822 = vmatpush2.msra.mxu0 0.0
      %2823 = vmatprep.subr.mxu0 0.0
      %2824 = vmatpush2.msra.mxu0 0.0
      %2825 = vmatprep.subr.mxu0 0.0
      %2826 = vmatpush2.msra.mxu0 0.0
      %2827 = vmatprep.subr.mxu0 0.0
      %2828 = vmatpush2.msra.mxu0 0.0
      %2829 = vmatprep.subr.mxu0 0.0
      %2830 = vmatpush2.msra.mxu0 0.0
      %2831 = vmatprep.subr.mxu0 0.0
      %2832 = vmatpush2.msra.mxu0 0.0
      %2833 = vmatprep.subr.mxu0 0.0
      %2834 = vmatpush2.msra.mxu0 0.0
      %2835 = vmatprep.subr.mxu0 0.0
      %2836 = vmatpush2.msra.mxu0 0.0
      %2837 = vmatprep.mubr.f32.mxu0 0.0
      %2838 = vmatmul.mubr.f32.gmra.mxu0 %v2747
      %v2839 = vpop.f32.mrf.mxu0
      %v2840 = vadd.f32 %v2744, %v2839
      %v2841 = vpop.f32.mrf.mxu0
      %v2842 = vadd.f32 %v2744, %v2841
      %2843 = vdwg.mxu0
      %2844 = vmatprep.subr.mxu0 0.0
      %2845 = vmatpush1.msra.mxu0 0.0
      %2846 = vmatprep.subr.mxu0 0.0
      %2847 = vmatpush1.msra.mxu0 0.0
      %2848 = vmatprep.subr.mxu0 0.0
      %2849 = vmatpush1.msra.mxu0 0.0
      %2850 = vmatprep.subr.mxu0 0.0
      %2851 = vmatpush1.msra.mxu0 0.0
      %2852 = vmatprep.subr.mxu0 0.0
      %2853 = vmatpush1.msra.mxu0 0.0
      %2854 = vmatprep.subr.mxu0 0.0
      %2855 = vmatpush1.msra.mxu0 0.0
      %2856 = vmatprep.subr.mxu0 0.0
      %2857 = vmatpush1.msra.mxu0 0.0
      %2858 = vmatprep.subr.mxu0 0.0
      %2859 = vmatpush1.msra.mxu0 0.0
      %2860 = vmatprep.subr.mxu0 0.0
      %2861 = vmatpush1.msra.mxu0 0.0
      %2862 = vmatprep.subr.mxu0 0.0
      %2863 = vmatpush1.msra.mxu0 0.0
      %2864 = vmatprep.subr.mxu0 0.0
      %2865 = vmatpush1.msra.mxu0 0.0
      %2866 = vmatprep.subr.mxu0 %v2759
      %2867 = vmatpush1.msra.mxu0 %v2756
      %2868 = vmatprep.subr.mxu0 %v2727
      %2869 = vmatpush1.msra.mxu0 %v2726
      %2870 = vmatprep.subr.mxu0 %v2719
      %2871 = vmatpush1.msra.mxu0 %v2718
      %2872 = vmatprep.subr.mxu0 %v2711
      %2873 = vmatpush1.msra.mxu0 %v2710
      %2874 = vmatprep.subr.mxu0 %v2703
      %2875 = vmatpush1.msra.mxu0 %v2702
      %2876 = vmatprep.subr.mxu0 0.0
      %2877 = vmatpush2.msra.mxu0 0.0
      %2878 = vmatprep.subr.mxu0 0.0
      %2879 = vmatpush2.msra.mxu0 0.0
      %2880 = vmatprep.subr.mxu0 0.0
      %2881 = vmatpush2.msra.mxu0 0.0
      %2882 = vmatprep.subr.mxu0 0.0
      %2883 = vmatpush2.msra.mxu0 0.0
      %2884 = vmatprep.subr.mxu0 0.0
      %2885 = vmatpush2.msra.mxu0 0.0
      %2886 = vmatprep.subr.mxu0 0.0
      %2887 = vmatpush2.msra.mxu0 0.0
      %2888 = vmatprep.subr.mxu0 0.0
      %2889 = vmatpush2.msra.mxu0 0.0
      %2890 = vmatprep.subr.mxu0 0.0
      %2891 = vmatpush2.msra.mxu0 0.0
      %2892 = vmatprep.subr.mxu0 0.0
      %2893 = vmatpush2.msra.mxu0 0.0
      %2894 = vmatprep.subr.mxu0 0.0
      %2895 = vmatpush2.msra.mxu0 0.0
      %2896 = vmatprep.subr.mxu0 0.0
      %2897 = vmatpush2.msra.mxu0 0.0
      %2898 = vmatprep.subr.mxu0 0.0
      %2899 = vmatpush2.msra.mxu0 0.0
      %2900 = vmatprep.subr.mxu0 0.0
      %2901 = vmatpush2.msra.mxu0 0.0
      %2902 = vmatprep.subr.mxu0 0.0
      %2903 = vmatpush2.msra.mxu0 0.0
      %2904 = vmatprep.subr.mxu0 0.0
      %2905 = vmatpush2.msra.mxu0 0.0
      %2906 = vmatprep.subr.mxu0 0.0
      %2907 = vmatpush2.msra.mxu0 0.0
      %2908 = vmatprep.mubr.f32.mxu0 0.0
      %2909 = vmatmul.mubr.f32.gmra.mxu0 %v2747
      %v2910 = vpop.f32.mrf.mxu0
      %v2911 = vadd.f32 %v2744, %v2910
      %v2912 = vpop.f32.mrf.mxu0
      %v2913 = vadd.f32 %v2744, %v2912
      %2914 = vdwg.mxu0
      %2915 = vmatprep.subr.mxu0 0.0
      %2916 = vmatpush1.msra.mxu0 0.0
      %2917 = vmatprep.subr.mxu0 0.0
      %2918 = vmatpush1.msra.mxu0 0.0
      %2919 = vmatprep.subr.mxu0 0.0
      %2920 = vmatpush1.msra.mxu0 0.0
      %2921 = vmatprep.subr.mxu0 0.0
      %2922 = vmatpush1.msra.mxu0 0.0
      %2923 = vmatprep.subr.mxu0 0.0
      %2924 = vmatpush1.msra.mxu0 0.0
      %2925 = vmatprep.subr.mxu0 0.0
      %2926 = vmatpush1.msra.mxu0 0.0
      %2927 = vmatprep.subr.mxu0 0.0
      %2928 = vmatpush1.msra.mxu0 0.0
      %2929 = vmatprep.subr.mxu0 0.0
      %2930 = vmatpush1.msra.mxu0 0.0
      %2931 = vmatprep.subr.mxu0 0.0
      %2932 = vmatpush1.msra.mxu0 0.0
      %2933 = vmatprep.subr.mxu0 0.0
      %2934 = vmatpush1.msra.mxu0 0.0
      %2935 = vmatprep.subr.mxu0 0.0
      %2936 = vmatpush1.msra.mxu0 0.0
      %2937 = vmatprep.subr.mxu0 %v2765
      %2938 = vmatpush1.msra.mxu0 %v2762
      %2939 = vmatprep.subr.mxu0 %v2729
      %2940 = vmatpush1.msra.mxu0 %v2728
      %2941 = vmatprep.subr.mxu0 %v2721
      %2942 = vmatpush1.msra.mxu0 %v2720
      %2943 = vmatprep.subr.mxu0 %v2713
      %2944 = vmatpush1.msra.mxu0 %v2712
      %2945 = vmatprep.subr.mxu0 %v2705
      %2946 = vmatpush1.msra.mxu0 %v2704
      %2947 = vmatprep.subr.mxu0 0.0
      %2948 = vmatpush2.msra.mxu0 0.0
      %2949 = vmatprep.subr.mxu0 0.0
      %2950 = vmatpush2.msra.mxu0 0.0
      %2951 = vmatprep.subr.mxu0 0.0
      %2952 = vmatpush2.msra.mxu0 0.0
      %2953 = vmatprep.subr.mxu0 0.0
      %2954 = vmatpush2.msra.mxu0 0.0
      %2955 = vmatprep.subr.mxu0 0.0
      %2956 = vmatpush2.msra.mxu0 0.0
      %2957 = vmatprep.subr.mxu0 0.0
      %2958 = vmatpush2.msra.mxu0 0.0
      %2959 = vmatprep.subr.mxu0 0.0
      %2960 = vmatpush2.msra.mxu0 0.0
      %2961 = vmatprep.subr.mxu0 0.0
      %2962 = vmatpush2.msra.mxu0 0.0
      %2963 = vmatprep.subr.mxu0 0.0
      %2964 = vmatpush2.msra.mxu0 0.0
      %2965 = vmatprep.subr.mxu0 0.0
      %2966 = vmatpush2.msra.mxu0 0.0
      %2967 = vmatprep.subr.mxu0 0.0
      %2968 = vmatpush2.msra.mxu0 0.0
      %2969 = vmatprep.subr.mxu0 0.0
      %2970 = vmatpush2.msra.mxu0 0.0
      %2971 = vmatprep.subr.mxu0 0.0
      %2972 = vmatpush2.msra.mxu0 0.0
      %2973 = vmatprep.subr.mxu0 0.0
      %2974 = vmatpush2.msra.mxu0 0.0
      %2975 = vmatprep.subr.mxu0 0.0
      %2976 = vmatpush2.msra.mxu0 0.0
      %2977 = vmatprep.subr.mxu0 0.0
      %2978 = vmatpush2.msra.mxu0 0.0
      %2979 = vmatprep.mubr.f32.mxu0 0.0
      %2980 = vmatmul.mubr.f32.gmra.mxu0 %v2747
      %v2981 = vpop.f32.mrf.mxu0
      %v2982 = vadd.f32 %v2744, %v2981
      %v2983 = vpop.f32.mrf.mxu0
      %v2984 = vadd.f32 %v2744, %v2983
      %2985 = vdwg.mxu0
      %2986 = vmatprep.subr.mxu0 0.0
      %2987 = vmatpush1.msra.mxu0 0.0
      %2988 = vmatprep.subr.mxu0 0.0
      %2989 = vmatpush1.msra.mxu0 0.0
      %2990 = vmatprep.subr.mxu0 0.0
      %2991 = vmatpush1.msra.mxu0 0.0
      %2992 = vmatprep.subr.mxu0 0.0
      %2993 = vmatpush1.msra.mxu0 0.0
      %2994 = vmatprep.subr.mxu0 0.0
      %2995 = vmatpush1.msra.mxu0 0.0
      %2996 = vmatprep.subr.mxu0 0.0
      %2997 = vmatpush1.msra.mxu0 0.0
      %2998 = vmatprep.subr.mxu0 0.0
      %2999 = vmatpush1.msra.mxu0 0.0
      %3000 = vmatprep.subr.mxu0 0.0
      %3001 = vmatpush1.msra.mxu0 0.0
      %3002 = vmatprep.subr.mxu0 0.0
      %3003 = vmatpush1.msra.mxu0 0.0
      %3004 = vmatprep.subr.mxu0 0.0
      %3005 = vmatpush1.msra.mxu0 0.0
      %3006 = vmatprep.subr.mxu0 0.0
      %3007 = vmatpush1.msra.mxu0 0.0
      %3008 = vmatprep.subr.mxu0 %v2771
      %3009 = vmatpush1.msra.mxu0 %v2768
      %3010 = vmatprep.subr.mxu0 %v2731
      %3011 = vmatpush1.msra.mxu0 %v2730
      %3012 = vmatprep.subr.mxu0 %v2723
      %3013 = vmatpush1.msra.mxu0 %v2722
      %3014 = vmatprep.subr.mxu0 %v2715
      %3015 = vmatpush1.msra.mxu0 %v2714
      %3016 = vmatprep.subr.mxu0 %v2707
      %3017 = vmatpush1.msra.mxu0 %v2706
      %3018 = vmatprep.subr.mxu0 0.0
      %3019 = vmatpush2.msra.mxu0 0.0
      %3020 = vmatprep.subr.mxu0 0.0
      %3021 = vmatpush2.msra.mxu0 0.0
      %3022 = vmatprep.subr.mxu0 0.0
      %3023 = vmatpush2.msra.mxu0 0.0
      %3024 = vmatprep.subr.mxu0 0.0
      %3025 = vmatpush2.msra.mxu0 0.0
      %3026 = vmatprep.subr.mxu0 0.0
      %3027 = vmatpush2.msra.mxu0 0.0
      %3028 = vmatprep.subr.mxu0 0.0
      %3029 = vmatpush2.msra.mxu0 0.0
      %3030 = vmatprep.subr.mxu0 0.0
      %3031 = vmatpush2.msra.mxu0 0.0
      %3032 = vmatprep.subr.mxu0 0.0
      %3033 = vmatpush2.msra.mxu0 0.0
      %3034 = vmatprep.subr.mxu0 0.0
      %3035 = vmatpush2.msra.mxu0 0.0
      %3036 = vmatprep.subr.mxu0 0.0
      %3037 = vmatpush2.msra.mxu0 0.0
      %3038 = vmatprep.subr.mxu0 0.0
      %3039 = vmatpush2.msra.mxu0 0.0
      %3040 = vmatprep.subr.mxu0 0.0
      %3041 = vmatpush2.msra.mxu0 0.0
      %3042 = vmatprep.subr.mxu0 0.0
      %3043 = vmatpush2.msra.mxu0 0.0
      %3044 = vmatprep.subr.mxu0 0.0
      %3045 = vmatpush2.msra.mxu0 0.0
      %3046 = vmatprep.subr.mxu0 0.0
      %3047 = vmatpush2.msra.mxu0 0.0
      %3048 = vmatprep.subr.mxu0 0.0
      %3049 = vmatpush2.msra.mxu0 0.0
      %3050 = vmatprep.mubr.f32.mxu0 0.0
      %3051 = vmatmul.mubr.f32.gmra.mxu0 %v2747
      %v3052 = vpop.f32.mrf.mxu0
      %v3053 = vadd.f32 %v2744, %v3052
      %v3054 = vpop.f32.mrf.mxu0
      %v3055 = vadd.f32 %v2744, %v3054
      %3056 = vdwg.mxu0
      %v3057 = vmax.f32 %v2840, 0.0
      %v3058 = vmax.f32 %v2842, 0.0
      %v3059 = vmax.f32 %v2911, 0.0
      %v3060 = vmax.f32 %v2913, 0.0
      %v3061 = vmax.f32 %v2982, 0.0
      %v3062 = vmax.f32 %v2984, 0.0
      %v3063 = vmax.f32 %v3053, 0.0
      %v3064 = vmax.f32 %v3055, 0.0
      %3065 = vst [vmem:[%s298] sm:$0xff] %v3057
      %3066 = vst [vmem:[%s298 + $0x8] sm:$0xff] %v3058
      %3067 = vst [vmem:[%s298 + $0x10] sm:$0xff] %v3059
      %3068 = vst [vmem:[%s298 + $0x18] sm:$0xff] %v3060
      %3069 = vst [vmem:[%s298 + $0x20] sm:$0xff] %v3061
      %3070 = vst [vmem:[%s298 + $0x28] sm:$0xff] %v3062
      %3071 = vst [vmem:[%s298 + $0x30] sm:$0xff] %v3063
      %3072 = vst [vmem:[%s298 + $0x38] sm:$0xff] %v3064
      %p3073 = scmp.lt.s32.totalorder %s18, 1
      %s3074 = scalar_select %p3073, %s18, 1
      %s3075 = smul.addr %s3074, 8
      %s3076 = smul.addr %s3075, 8
      %s3077 = scalar_lea.vmem %s7, %s3076
      // Predicated region
      $region49: #{decoder_block_forward.1} parent=47 // pred_check
        %p3078 = pneg %p193
      $region50: #{decoder_block_forward.1} parent=47 // pred_check_branch
        %3080 = sbr.rel (%p3078) target = $region52
      $region51: #{decoder_block_forward.1} parent=47 // pred_region
        _
      $region52: #{decoder_block_forward.1} parent=47 // pred_fallthru
        _
    $region48: #{decoder_block_forward.1} parent=5 // pred_fallthru
      _
    %p3081 = scmp.le.s32.totalorder 2, %s13
    // Predicated region
    $region53: #{decoder_block_forward.1} parent=5 // pred_check
      %p3082 = pneg %p3081
    $region54: #{decoder_block_forward.1} parent=5 // pred_check_branch
      %3084 = sbr.rel (%p3082) target = $region56
    $region55: #{decoder_block_forward.1} parent=5 // pred_region
      %s3085 = ssub.s32 %s13, 2
      // Predicated region
      $region57: #{decoder_block_forward.1} parent=55 // pred_check
        %p3086 = pneg %p199
      $region58: #{decoder_block_forward.1} parent=55 // pred_check_branch
        %3088 = sbr.rel (%p3086) target = $region60
      $region59: #{decoder_block_forward.1} parent=55 // pred_region
        %p3089 = scmp.lt.s32.totalorder %s19, 1
        %s3090 = scalar_select %p3089, %s19, 1
        %s3091 = smul.addr %s3090, 8
        %s3092 = smul.addr %s3091, 8
        %s3093 = scalar_lea.vmem %s7, %s3092
      $region60: #{decoder_block_forward.1} parent=55 // pred_fallthru
        _
    $region56: #{decoder_block_forward.1} parent=5 // pred_fallthru
      _
  $region6: #{decoder_block_forward.1} parent=0 // loop_footer
    %s17 = sadd.s32 1, %s13
  $region7: #{decoder_block_forward.1} parent=0 // loop_footer_branch
    %12 = sbr.rel target = $region3
  $region8: #{decoder_block_forward.1} parent=0 // loop_exit
    _

</llo_original>
